<compile_context>
chip_gen: v6e
topology: v6e:2x2x1
jax: 0.10.0
libtpu: 0.0.40
codegen_flags: <defaults>
</compile_context>

<pallas_src>
import jax
import jax.numpy as jnp
from jax.experimental import pallas as pl
from jax.experimental.pallas import tpu as pltpu


def _round_up(x: int, m: int) -> int:
    return ((x + m - 1) // m) * m


def _pad_to(a, shape):
    pads = [(0, s - d) for d, s in zip(a.shape, shape)]
    return jnp.pad(a, pads)


def _make_kernel(n_layers: int, seq_len: int, b_pad: int, mxu_dtype):
    """Builds the Pallas kernel body for fixed (n_layers, seq_len, padded batch)."""

    def kernel(*refs):
        # inputs : x_flat (T*Bp, INp), h0 (L, Bp, Hp),
        #          [wih_l, whh_l, bias_l] * n_layers, wfc (Hp, Op), bfc (1, Op)
        # outputs: out_flat (T*Bp, Op), hn (L, Bp, Hp)
        # scratch: xp (T*Bp, Hp)  -- layer-0 hoisted input projection
        x_ref, h0_ref = refs[0], refs[1]
        idx = 2
        layer_refs = []
        for _ in range(n_layers):
            layer_refs.append(tuple(refs[idx:idx + 3]))
            idx += 3
        wfc_ref, bfc_ref = refs[idx], refs[idx + 1]
        idx += 2
        out_ref, hn_ref = refs[idx], refs[idx + 1]
        idx += 2
        xp_ref = refs[idx]

        # ---- layer-0 input projection, hoisted (one big lane-dense GEMM) -----
        wih0_ref, _, bias0_ref = layer_refs[0]
        xp_ref[...] = (
            jnp.dot(x_ref[...], wih0_ref[...],
                    preferred_element_type=jnp.float32)
            + bias0_ref[...]
        )

        # ---- hidden states carried in vregs (values), not VMEM scratch -------
        hs = [h0_ref[l] for l in range(n_layers)]          # each (Bp, Hp) f32

        # small per-layer / FC biases read once, hoisted out of the time loop
        biases = [None] + [layer_refs[l][2][...] for l in range(1, n_layers)]
        bfc = bfc_ref[...]

        # ---- wavefront-schedulable recurrence (fully inlined: T, L small) ----
        for t in range(seq_len):
            off = t * b_pad                                  # static, 8-aligned
            inp = xp_ref[pl.ds(off, b_pad), :]               # layer-0 x-proj + bias
            for l in range(n_layers):
                wih_ref, whh_ref, _ = layer_refs[l]
                if l > 0:
                    # per-step input projection from just-produced h_{l-1}(t)
                    inp = (
                        jnp.dot(hs[l - 1].astype(mxu_dtype), wih_ref[...],
                                preferred_element_type=jnp.float32)
                        + biases[l]
                    )
                hs[l] = jnp.tanh(
                    inp
                    + jnp.dot(hs[l].astype(mxu_dtype), whh_ref[...],
                              preferred_element_type=jnp.float32)
                )
            # fused FC head: independent of future timesteps, hides under the
            # recurrence; lane-dense unmasked store to the flat output.
            out_ref[pl.ds(off, b_pad), :] = (
                jnp.dot(hs[-1].astype(mxu_dtype), wfc_ref[...],
                        preferred_element_type=jnp.float32)
                + bfc
            ).astype(out_ref.dtype)

        # ---- final hidden states written once per layer -----------------------
        for l in range(n_layers):
            hn_ref[l] = hs[l].astype(hn_ref.dtype)

    return kernel


def char_rnn_forward(x_btf, h0, params, mxu_dtype=jnp.float32):
    """Pallas forward pass.

    x_btf : (B, T, input_size)  batch-first, like the PyTorch module
    h0    : (n_layers, B, H)
    params: dict with 'layers' = [(w_ih(in,H), w_hh(H,H), b_ih(1,H), b_hh(1,H))...],
            'w_fc' (H,O), 'b_fc' (1,O)
    mxu_dtype: dtype of MXU operands (use jnp.bfloat16 on v6e/v7x for 2x GEMM
               throughput / half the weight+scratch bytes; accumulation stays f32).
    returns (out (B*T, O), hidden (n_layers, B, H))
    """
    B, T, IN = x_btf.shape
    L, _, H = h0.shape
    O = params["w_fc"].shape[1]

    # (8, 128)-dense padding targets; 256-wide contraction once H outgrows one
    # MXU quadrant (v6e/v7x 256x256 tile).
    Bp = _round_up(B, 8)
    lane = 256 if H > 128 else 128
    INp = _round_up(IN, 128)
    Hp = _round_up(H, lane)
    Op = _round_up(O, 128)

    # Time-major, padded, flattened input: (T*Bp, INp).
    x_tbf = jnp.transpose(x_btf.astype(mxu_dtype), (1, 0, 2))
    x_flat = _pad_to(x_tbf, (T, Bp, INp)).reshape(T * Bp, INp)
    h0_pad = _pad_to(h0.astype(jnp.float32), (L, Bp, Hp))

    flat_inputs = [x_flat, h0_pad]
    for l, (wih, whh, bih, bhh) in enumerate(params["layers"]):
        in_p = INp if l == 0 else Hp
        flat_inputs += [
            _pad_to(wih.astype(mxu_dtype), (in_p, Hp)),
            _pad_to(whh.astype(mxu_dtype), (Hp, Hp)),
            _pad_to((bih + bhh).astype(jnp.float32), (1, Hp)),   # pre-summed bias
        ]
    flat_inputs += [
        _pad_to(params["w_fc"].astype(mxu_dtype), (Hp, Op)),
        _pad_to(params["b_fc"].astype(jnp.float32), (1, Op)),
    ]

    vmem_spec = pl.BlockSpec(memory_space=pltpu.MemorySpace.VMEM)

    out_flat, hn_pad = pl.pallas_call(
        _make_kernel(L, T, Bp, mxu_dtype),
        out_shape=(
            jax.ShapeDtypeStruct((T * Bp, Op), jnp.float32),   # flat, lane-dense
            jax.ShapeDtypeStruct((L, Bp, Hp), jnp.float32),
        ),
        in_specs=[vmem_spec] * len(flat_inputs),
        out_specs=(vmem_spec, vmem_spec),
        scratch_shapes=[
            pltpu.VMEM((T * Bp, Hp), jnp.float32),   # layer-0 hoisted projection only
        ],
        compiler_params=pltpu.CompilerParams(
            vmem_limit_bytes=32 * 1024 * 1024,       # v7x-safe; raise on v5e/v6e for big T*B*H
        ),
    )(*flat_inputs)

    # Un-pad + reorder (t, b) -> (b, t) on the wrapper side (fuses in XLA).
    out = jnp.transpose(
        out_flat.reshape(T, Bp, Op)[:, :B, :O], (1, 0, 2)
    ).reshape(B * T, O)
    hidden = hn_pad[:, :B, :H]
    return out, hidden


def ref_forward(x_btf, h0, params):
    """Pure-JAX reference matching nn.RNN(tanh, batch_first) + Linear."""
    B, T, _ = x_btf.shape
    n_layers, _, H = h0.shape
    layer_in = x_btf.astype(jnp.float32)
    hn = []
    for l in range(n_layers):
        wih, whh, bih, bhh = params["layers"][l]
        ht = h0[l]
        outs = []
        for t in range(T):
            ht = jnp.tanh(layer_in[:, t] @ wih + bih + ht @ whh + bhh)
            outs.append(ht)
        layer_in = jnp.stack(outs, axis=1)     # (B, T, H)
        hn.append(ht)
    out = layer_in.reshape(B * T, H) @ params["w_fc"] + params["b_fc"]
    return out, jnp.stack(hn)


def init_params(key, input_size, hidden_size, output_size, n_layers):
    """Deterministic parameter init (uniform, torch-like scale)."""
    params = {"layers": []}
    scale = 1.0 / jnp.sqrt(hidden_size)
    for l in range(n_layers):
        in_dim = input_size if l == 0 else hidden_size
        key, k1, k2, k3, k4 = jax.random.split(key, 5)
        wih = jax.random.uniform(k1, (in_dim, hidden_size), jnp.float32, -scale, scale)
        whh = jax.random.uniform(k2, (hidden_size, hidden_size), jnp.float32, -scale, scale)
        bih = jax.random.uniform(k3, (1, hidden_size), jnp.float32, -scale, scale)
        bhh = jax.random.uniform(k4, (1, hidden_size), jnp.float32, -scale, scale)
        params["layers"].append((wih, whh, bih, bhh))
    key, k5, k6 = jax.random.split(key, 3)
    params["w_fc"] = jax.random.uniform(k5, (hidden_size, output_size), jnp.float32, -scale, scale)
    params["b_fc"] = jax.random.uniform(k6, (1, output_size), jnp.float32, -scale, scale)
    return params


if __name__ == "__main__":
    # Small shapes consistent with CharRNN's forward:
    #   input: (batch=2, seq=8, input_size=16), hidden: (n_layers=2, batch=2, hidden=32)
    input_size, hidden_size, output_size, n_layers = 16, 32, 16, 2
    B, T = 2, 8

    key = jax.random.PRNGKey(0)
    key, kx = jax.random.split(key)
    x = jax.random.normal(kx, (B, T, input_size), jnp.float32)
    h0 = jnp.zeros((n_layers, B, hidden_size), jnp.float32)   # init_hidden()

    params = init_params(key, input_size, hidden_size, output_size, n_layers)

    out, hidden = char_rnn_forward(x, h0, params)   # f32 MXU default (tight check)
    out = jax.block_until_ready(out)
    hidden = jax.block_until_ready(hidden)

    out_ref, hidden_ref = ref_forward(x, h0, params)
    assert out.shape == (B * T, output_size)
    assert hidden.shape == (n_layers, B, hidden_size)
    assert jnp.allclose(out, out_ref, atol=1e-4, rtol=1e-4), "fc output mismatch"
    assert jnp.allclose(hidden, hidden_ref, atol=1e-4, rtol=1e-4), "hidden mismatch"

    print("KERNEL_OK")
</pallas_src>

<mosaic_0001>
module attributes {stable_mosaic.version = 11 : i64} {
  func.func @kernel(%arg0: memref<64x128xf32, #tpu.memory_space<vmem>>, %arg1: memref<2x8x128xf32, #tpu.memory_space<vmem>>, %arg2: memref<128x128xf32, #tpu.memory_space<vmem>>, %arg3: memref<128x128xf32, #tpu.memory_space<vmem>>, %arg4: memref<1x128xf32, #tpu.memory_space<vmem>>, %arg5: memref<128x128xf32, #tpu.memory_space<vmem>>, %arg6: memref<128x128xf32, #tpu.memory_space<vmem>>, %arg7: memref<1x128xf32, #tpu.memory_space<vmem>>, %arg8: memref<128x128xf32, #tpu.memory_space<vmem>>, %arg9: memref<1x128xf32, #tpu.memory_space<vmem>>, %arg10: memref<64x128xf32, #tpu.memory_space<vmem>>, %arg11: memref<2x8x128xf32, #tpu.memory_space<vmem>>, %arg12: memref<64x128xf32, #tpu.memory_space<vmem>>) attributes {dimension_semantics = [], scalar_prefetch = 0 : i64, scratch_operands = 1 : i64, tpu.core_type = #tpu.core_type<tc>} {
    %c0 = arith.constant 0 : index
    %c0_0 = arith.constant 0 : index
    %0 = vector.load %arg0[%c0, %c0_0] : memref<64x128xf32, #tpu.memory_space<vmem>>, vector<64x128xf32>
    %c0_1 = arith.constant 0 : index
    %c0_2 = arith.constant 0 : index
    %1 = vector.load %arg2[%c0_1, %c0_2] : memref<128x128xf32, #tpu.memory_space<vmem>>, vector<128x128xf32>
    %cst = arith.constant dense<0.000000e+00> : vector<64x128xf32>
    %2 = tpu.matmul %0, %1, %cst {dimension_numbers = #tpu.dot_dimension_numbers<[1], [0], [0], [1], [0, 0, 1, 1], [], []>} : vector<64x128xf32>, vector<128x128xf32>, vector<64x128xf32> -> vector<64x128xf32>
    %c0_3 = arith.constant 0 : index
    %c0_4 = arith.constant 0 : index
    %3 = vector.load %arg4[%c0_3, %c0_4] : memref<1x128xf32, #tpu.memory_space<vmem>>, vector<1x128xf32>
    %4 = vector.broadcast %3 : vector<1x128xf32> to vector<64x128xf32>
    %5 = arith.addf %2, %4 : vector<64x128xf32>
    %c0_5 = arith.constant 0 : index
    %c0_6 = arith.constant 0 : index
    %6 = vector.load %arg12[%c0_5, %c0_6] : memref<64x128xf32, #tpu.memory_space<vmem>>, vector<64x128xf32>
    tpu.vector_store %arg12[%c0_5, %c0_6], %5 {strides = array<i32>} : memref<64x128xf32, #tpu.memory_space<vmem>>, vector<64x128xf32>,
    %c0_7 = arith.constant 0 : index
    %c0_8 = arith.constant 0 : index
    %c0_9 = arith.constant 0 : index
    %7 = vector.load %arg1[%c0_7, %c0_8, %c0_9] : memref<2x8x128xf32, #tpu.memory_space<vmem>>, vector<1x8x128xf32>
    %8 = vector.shape_cast %7 : vector<1x8x128xf32> to vector<8x128xf32>
    %c1 = arith.constant 1 : index
    %c0_10 = arith.constant 0 : index
    %c0_11 = arith.constant 0 : index
    %9 = vector.load %arg1[%c1, %c0_10, %c0_11] : memref<2x8x128xf32, #tpu.memory_space<vmem>>, vector<1x8x128xf32>
    %10 = vector.shape_cast %9 : vector<1x8x128xf32> to vector<8x128xf32>
    %c0_12 = arith.constant 0 : index
    %c0_13 = arith.constant 0 : index
    %11 = vector.load %arg7[%c0_12, %c0_13] : memref<1x128xf32, #tpu.memory_space<vmem>>, vector<1x128xf32>
    %c0_14 = arith.constant 0 : index
    %c0_15 = arith.constant 0 : index
    %12 = vector.load %arg9[%c0_14, %c0_15] : memref<1x128xf32, #tpu.memory_space<vmem>>, vector<1x128xf32>
    %c0_16 = arith.constant 0 : index
    %c0_17 = arith.constant 0 : index
    %13 = vector.load %arg12[%c0_16, %c0_17] : memref<64x128xf32, #tpu.memory_space<vmem>>, vector<8x128xf32>
    %c0_18 = arith.constant 0 : index
    %c0_19 = arith.constant 0 : index
    %14 = vector.load %arg3[%c0_18, %c0_19] : memref<128x128xf32, #tpu.memory_space<vmem>>, vector<128x128xf32>
    %cst_20 = arith.constant dense<0.000000e+00> : vector<8x128xf32>
    %15 = tpu.matmul %8, %14, %cst_20 {dimension_numbers = #tpu.dot_dimension_numbers<[1], [0], [0], [1], [0, 0, 1, 1], [], []>} : vector<8x128xf32>, vector<128x128xf32>, vector<8x128xf32> -> vector<8x128xf32>
    %16 = arith.addf %13, %15 : vector<8x128xf32>
    %17 = math.tanh %16 : vector<8x128xf32>
    %c0_21 = arith.constant 0 : index
    %c0_22 = arith.constant 0 : index
    %18 = vector.load %arg5[%c0_21, %c0_22] : memref<128x128xf32, #tpu.memory_space<vmem>>, vector<128x128xf32>
    %cst_23 = arith.constant dense<0.000000e+00> : vector<8x128xf32>
    %19 = tpu.matmul %17, %18, %cst_23 {dimension_numbers = #tpu.dot_dimension_numbers<[1], [0], [0], [1], [0, 0, 1, 1], [], []>} : vector<8x128xf32>, vector<128x128xf32>, vector<8x128xf32> -> vector<8x128xf32>
    %20 = vector.broadcast %11 : vector<1x128xf32> to vector<8x128xf32>
    %21 = arith.addf %19, %20 : vector<8x128xf32>
    %c0_24 = arith.constant 0 : index
    %c0_25 = arith.constant 0 : index
    %22 = vector.load %arg6[%c0_24, %c0_25] : memref<128x128xf32, #tpu.memory_space<vmem>>, vector<128x128xf32>
    %cst_26 = arith.constant dense<0.000000e+00> : vector<8x128xf32>
    %23 = tpu.matmul %10, %22, %cst_26 {dimension_numbers = #tpu.dot_dimension_numbers<[1], [0], [0], [1], [0, 0, 1, 1], [], []>} : vector<8x128xf32>, vector<128x128xf32>, vector<8x128xf32> -> vector<8x128xf32>
    %24 = arith.addf %21, %23 : vector<8x128xf32>
    %25 = math.tanh %24 : vector<8x128xf32>
    %c0_27 = arith.constant 0 : index
    %c0_28 = arith.constant 0 : index
    %26 = vector.load %arg8[%c0_27, %c0_28] : memref<128x128xf32, #tpu.memory_space<vmem>>, vector<128x128xf32>
    %cst_29 = arith.constant dense<0.000000e+00> : vector<8x128xf32>
    %27 = tpu.matmul %25, %26, %cst_29 {dimension_numbers = #tpu.dot_dimension_numbers<[1], [0], [0], [1], [0, 0, 1, 1], [], []>} : vector<8x128xf32>, vector<128x128xf32>, vector<8x128xf32> -> vector<8x128xf32>
    %28 = vector.broadcast %12 : vector<1x128xf32> to vector<8x128xf32>
    %29 = arith.addf %27, %28 : vector<8x128xf32>
    %c0_30 = arith.constant 0 : index
    %c0_31 = arith.constant 0 : index
    %30 = vector.load %arg10[%c0_30, %c0_31] : memref<64x128xf32, #tpu.memory_space<vmem>>, vector<8x128xf32>
    tpu.vector_store %arg10[%c0_30, %c0_31], %29 {strides = array<i32>} : memref<64x128xf32, #tpu.memory_space<vmem>>, vector<8x128xf32>,
    %c8 = arith.constant 8 : index
    %c0_32 = arith.constant 0 : index
    %31 = vector.load %arg12[%c8, %c0_32] : memref<64x128xf32, #tpu.memory_space<vmem>>, vector<8x128xf32>
    %c0_33 = arith.constant 0 : index
    %c0_34 = arith.constant 0 : index
    %32 = vector.load %arg3[%c0_33, %c0_34] : memref<128x128xf32, #tpu.memory_space<vmem>>, vector<128x128xf32>
    %cst_35 = arith.constant dense<0.000000e+00> : vector<8x128xf32>
    %33 = tpu.matmul %17, %32, %cst_35 {dimension_numbers = #tpu.dot_dimension_numbers<[1], [0], [0], [1], [0, 0, 1, 1], [], []>} : vector<8x128xf32>, vector<128x128xf32>, vector<8x128xf32> -> vector<8x128xf32>
    %34 = arith.addf %31, %33 : vector<8x128xf32>
    %35 = math.tanh %34 : vector<8x128xf32>
    %c0_36 = arith.constant 0 : index
    %c0_37 = arith.constant 0 : index
    %36 = vector.load %arg5[%c0_36, %c0_37] : memref<128x128xf32, #tpu.memory_space<vmem>>, vector<128x128xf32>
    %cst_38 = arith.constant dense<0.000000e+00> : vector<8x128xf32>
    %37 = tpu.matmul %35, %36, %cst_38 {dimension_numbers = #tpu.dot_dimension_numbers<[1], [0], [0], [1], [0, 0, 1, 1], [], []>} : vector<8x128xf32>, vector<128x128xf32>, vector<8x128xf32> -> vector<8x128xf32>
    %38 = vector.broadcast %11 : vector<1x128xf32> to vector<8x128xf32>
    %39 = arith.addf %37, %38 : vector<8x128xf32>
    %c0_39 = arith.constant 0 : index
    %c0_40 = arith.constant 0 : index
    %40 = vector.load %arg6[%c0_39, %c0_40] : memref<128x128xf32, #tpu.memory_space<vmem>>, vector<128x128xf32>
    %cst_41 = arith.constant dense<0.000000e+00> : vector<8x128xf32>
    %41 = tpu.matmul %25, %40, %cst_41 {dimension_numbers = #tpu.dot_dimension_numbers<[1], [0], [0], [1], [0, 0, 1, 1], [], []>} : vector<8x128xf32>, vector<128x128xf32>, vector<8x128xf32> -> vector<8x128xf32>
    %42 = arith.addf %39, %41 : vector<8x128xf32>
    %43 = math.tanh %42 : vector<8x128xf32>
    %c0_42 = arith.constant 0 : index
    %c0_43 = arith.constant 0 : index
    %44 = vector.load %arg8[%c0_42, %c0_43] : memref<128x128xf32, #tpu.memory_space<vmem>>, vector<128x128xf32>
    %cst_44 = arith.constant dense<0.000000e+00> : vector<8x128xf32>
    %45 = tpu.matmul %43, %44, %cst_44 {dimension_numbers = #tpu.dot_dimension_numbers<[1], [0], [0], [1], [0, 0, 1, 1], [], []>} : vector<8x128xf32>, vector<128x128xf32>, vector<8x128xf32> -> vector<8x128xf32>
    %46 = vector.broadcast %12 : vector<1x128xf32> to vector<8x128xf32>
    %47 = arith.addf %45, %46 : vector<8x128xf32>
    %c8_45 = arith.constant 8 : index
    %c0_46 = arith.constant 0 : index
    %48 = vector.load %arg10[%c8_45, %c0_46] : memref<64x128xf32, #tpu.memory_space<vmem>>, vector<8x128xf32>
    tpu.vector_store %arg10[%c8_45, %c0_46], %47 {strides = array<i32>} : memref<64x128xf32, #tpu.memory_space<vmem>>, vector<8x128xf32>,
    %c16 = arith.constant 16 : index
    %c0_47 = arith.constant 0 : index
    %49 = vector.load %arg12[%c16, %c0_47] : memref<64x128xf32, #tpu.memory_space<vmem>>, vector<8x128xf32>
    %c0_48 = arith.constant 0 : index
    %c0_49 = arith.constant 0 : index
    %50 = vector.load %arg3[%c0_48, %c0_49] : memref<128x128xf32, #tpu.memory_space<vmem>>, vector<128x128xf32>
    %cst_50 = arith.constant dense<0.000000e+00> : vector<8x128xf32>
    %51 = tpu.matmul %35, %50, %cst_50 {dimension_numbers = #tpu.dot_dimension_numbers<[1], [0], [0], [1], [0, 0, 1, 1], [], []>} : vector<8x128xf32>, vector<128x128xf32>, vector<8x128xf32> -> vector<8x128xf32>
    %52 = arith.addf %49, %51 : vector<8x128xf32>
    %53 = math.tanh %52 : vector<8x128xf32>
    %c0_51 = arith.constant 0 : index
    %c0_52 = arith.constant 0 : index
    %54 = vector.load %arg5[%c0_51, %c0_52] : memref<128x128xf32, #tpu.memory_space<vmem>>, vector<128x128xf32>
    %cst_53 = arith.constant dense<0.000000e+00> : vector<8x128xf32>
    %55 = tpu.matmul %53, %54, %cst_53 {dimension_numbers = #tpu.dot_dimension_numbers<[1], [0], [0], [1], [0, 0, 1, 1], [], []>} : vector<8x128xf32>, vector<128x128xf32>, vector<8x128xf32> -> vector<8x128xf32>
    %56 = vector.broadcast %11 : vector<1x128xf32> to vector<8x128xf32>
    %57 = arith.addf %55, %56 : vector<8x128xf32>
    %c0_54 = arith.constant 0 : index
    %c0_55 = arith.constant 0 : index
    %58 = vector.load %arg6[%c0_54, %c0_55] : memref<128x128xf32, #tpu.memory_space<vmem>>, vector<128x128xf32>
    %cst_56 = arith.constant dense<0.000000e+00> : vector<8x128xf32>
    %59 = tpu.matmul %43, %58, %cst_56 {dimension_numbers = #tpu.dot_dimension_numbers<[1], [0], [0], [1], [0, 0, 1, 1], [], []>} : vector<8x128xf32>, vector<128x128xf32>, vector<8x128xf32> -> vector<8x128xf32>
    %60 = arith.addf %57, %59 : vector<8x128xf32>
    %61 = math.tanh %60 : vector<8x128xf32>
    %c0_57 = arith.constant 0 : index
    %c0_58 = arith.constant 0 : index
    %62 = vector.load %arg8[%c0_57, %c0_58] : memref<128x128xf32, #tpu.memory_space<vmem>>, vector<128x128xf32>
    %cst_59 = arith.constant dense<0.000000e+00> : vector<8x128xf32>
    %63 = tpu.matmul %61, %62, %cst_59 {dimension_numbers = #tpu.dot_dimension_numbers<[1], [0], [0], [1], [0, 0, 1, 1], [], []>} : vector<8x128xf32>, vector<128x128xf32>, vector<8x128xf32> -> vector<8x128xf32>
    %64 = vector.broadcast %12 : vector<1x128xf32> to vector<8x128xf32>
    %65 = arith.addf %63, %64 : vector<8x128xf32>
    %c16_60 = arith.constant 16 : index
    %c0_61 = arith.constant 0 : index
    %66 = vector.load %arg10[%c16_60, %c0_61] : memref<64x128xf32, #tpu.memory_space<vmem>>, vector<8x128xf32>
    tpu.vector_store %arg10[%c16_60, %c0_61], %65 {strides = array<i32>} : memref<64x128xf32, #tpu.memory_space<vmem>>, vector<8x128xf32>,
    %c24 = arith.constant 24 : index
    %c0_62 = arith.constant 0 : index
    %67 = vector.load %arg12[%c24, %c0_62] : memref<64x128xf32, #tpu.memory_space<vmem>>, vector<8x128xf32>
    %c0_63 = arith.constant 0 : index
    %c0_64 = arith.constant 0 : index
    %68 = vector.load %arg3[%c0_63, %c0_64] : memref<128x128xf32, #tpu.memory_space<vmem>>, vector<128x128xf32>
    %cst_65 = arith.constant dense<0.000000e+00> : vector<8x128xf32>
    %69 = tpu.matmul %53, %68, %cst_65 {dimension_numbers = #tpu.dot_dimension_numbers<[1], [0], [0], [1], [0, 0, 1, 1], [], []>} : vector<8x128xf32>, vector<128x128xf32>, vector<8x128xf32> -> vector<8x128xf32>
    %70 = arith.addf %67, %69 : vector<8x128xf32>
    %71 = math.tanh %70 : vector<8x128xf32>
    %c0_66 = arith.constant 0 : index
    %c0_67 = arith.constant 0 : index
    %72 = vector.load %arg5[%c0_66, %c0_67] : memref<128x128xf32, #tpu.memory_space<vmem>>, vector<128x128xf32>
    %cst_68 = arith.constant dense<0.000000e+00> : vector<8x128xf32>
    %73 = tpu.matmul %71, %72, %cst_68 {dimension_numbers = #tpu.dot_dimension_numbers<[1], [0], [0], [1], [0, 0, 1, 1], [], []>} : vector<8x128xf32>, vector<128x128xf32>, vector<8x128xf32> -> vector<8x128xf32>
    %74 = vector.broadcast %11 : vector<1x128xf32> to vector<8x128xf32>
    %75 = arith.addf %73, %74 : vector<8x128xf32>
    %c0_69 = arith.constant 0 : index
    %c0_70 = arith.constant 0 : index
    %76 = vector.load %arg6[%c0_69, %c0_70] : memref<128x128xf32, #tpu.memory_space<vmem>>, vector<128x128xf32>
    %cst_71 = arith.constant dense<0.000000e+00> : vector<8x128xf32>
    %77 = tpu.matmul %61, %76, %cst_71 {dimension_numbers = #tpu.dot_dimension_numbers<[1], [0], [0], [1], [0, 0, 1, 1], [], []>} : vector<8x128xf32>, vector<128x128xf32>, vector<8x128xf32> -> vector<8x128xf32>
    %78 = arith.addf %75, %77 : vector<8x128xf32>
    %79 = math.tanh %78 : vector<8x128xf32>
    %c0_72 = arith.constant 0 : index
    %c0_73 = arith.constant 0 : index
    %80 = vector.load %arg8[%c0_72, %c0_73] : memref<128x128xf32, #tpu.memory_space<vmem>>, vector<128x128xf32>
    %cst_74 = arith.constant dense<0.000000e+00> : vector<8x128xf32>
    %81 = tpu.matmul %79, %80, %cst_74 {dimension_numbers = #tpu.dot_dimension_numbers<[1], [0], [0], [1], [0, 0, 1, 1], [], []>} : vector<8x128xf32>, vector<128x128xf32>, vector<8x128xf32> -> vector<8x128xf32>
    %82 = vector.broadcast %12 : vector<1x128xf32> to vector<8x128xf32>
    %83 = arith.addf %81, %82 : vector<8x128xf32>
    %c24_75 = arith.constant 24 : index
    %c0_76 = arith.constant 0 : index
    %84 = vector.load %arg10[%c24_75, %c0_76] : memref<64x128xf32, #tpu.memory_space<vmem>>, vector<8x128xf32>
    tpu.vector_store %arg10[%c24_75, %c0_76], %83 {strides = array<i32>} : memref<64x128xf32, #tpu.memory_space<vmem>>, vector<8x128xf32>,
    %c32 = arith.constant 32 : index
    %c0_77 = arith.constant 0 : index
    %85 = vector.load %arg12[%c32, %c0_77] : memref<64x128xf32, #tpu.memory_space<vmem>>, vector<8x128xf32>
    %c0_78 = arith.constant 0 : index
    %c0_79 = arith.constant 0 : index
    %86 = vector.load %arg3[%c0_78, %c0_79] : memref<128x128xf32, #tpu.memory_space<vmem>>, vector<128x128xf32>
    %cst_80 = arith.constant dense<0.000000e+00> : vector<8x128xf32>
    %87 = tpu.matmul %71, %86, %cst_80 {dimension_numbers = #tpu.dot_dimension_numbers<[1], [0], [0], [1], [0, 0, 1, 1], [], []>} : vector<8x128xf32>, vector<128x128xf32>, vector<8x128xf32> -> vector<8x128xf32>
    %88 = arith.addf %85, %87 : vector<8x128xf32>
    %89 = math.tanh %88 : vector<8x128xf32>
    %c0_81 = arith.constant 0 : index
    %c0_82 = arith.constant 0 : index
    %90 = vector.load %arg5[%c0_81, %c0_82] : memref<128x128xf32, #tpu.memory_space<vmem>>, vector<128x128xf32>
    %cst_83 = arith.constant dense<0.000000e+00> : vector<8x128xf32>
    %91 = tpu.matmul %89, %90, %cst_83 {dimension_numbers = #tpu.dot_dimension_numbers<[1], [0], [0], [1], [0, 0, 1, 1], [], []>} : vector<8x128xf32>, vector<128x128xf32>, vector<8x128xf32> -> vector<8x128xf32>
    %92 = vector.broadcast %11 : vector<1x128xf32> to vector<8x128xf32>
    %93 = arith.addf %91, %92 : vector<8x128xf32>
    %c0_84 = arith.constant 0 : index
    %c0_85 = arith.constant 0 : index
    %94 = vector.load %arg6[%c0_84, %c0_85] : memref<128x128xf32, #tpu.memory_space<vmem>>, vector<128x128xf32>
    %cst_86 = arith.constant dense<0.000000e+00> : vector<8x128xf32>
    %95 = tpu.matmul %79, %94, %cst_86 {dimension_numbers = #tpu.dot_dimension_numbers<[1], [0], [0], [1], [0, 0, 1, 1], [], []>} : vector<8x128xf32>, vector<128x128xf32>, vector<8x128xf32> -> vector<8x128xf32>
    %96 = arith.addf %93, %95 : vector<8x128xf32>
    %97 = math.tanh %96 : vector<8x128xf32>
    %c0_87 = arith.constant 0 : index
    %c0_88 = arith.constant 0 : index
    %98 = vector.load %arg8[%c0_87, %c0_88] : memref<128x128xf32, #tpu.memory_space<vmem>>, vector<128x128xf32>
    %cst_89 = arith.constant dense<0.000000e+00> : vector<8x128xf32>
    %99 = tpu.matmul %97, %98, %cst_89 {dimension_numbers = #tpu.dot_dimension_numbers<[1], [0], [0], [1], [0, 0, 1, 1], [], []>} : vector<8x128xf32>, vector<128x128xf32>, vector<8x128xf32> -> vector<8x128xf32>
    %100 = vector.broadcast %12 : vector<1x128xf32> to vector<8x128xf32>
    %101 = arith.addf %99, %100 : vector<8x128xf32>
    %c32_90 = arith.constant 32 : index
    %c0_91 = arith.constant 0 : index
    %102 = vector.load %arg10[%c32_90, %c0_91] : memref<64x128xf32, #tpu.memory_space<vmem>>, vector<8x128xf32>
    tpu.vector_store %arg10[%c32_90, %c0_91], %101 {strides = array<i32>} : memref<64x128xf32, #tpu.memory_space<vmem>>, vector<8x128xf32>,
    %c40 = arith.constant 40 : index
    %c0_92 = arith.constant 0 : index
    %103 = vector.load %arg12[%c40, %c0_92] : memref<64x128xf32, #tpu.memory_space<vmem>>, vector<8x128xf32>
    %c0_93 = arith.constant 0 : index
    %c0_94 = arith.constant 0 : index
    %104 = vector.load %arg3[%c0_93, %c0_94] : memref<128x128xf32, #tpu.memory_space<vmem>>, vector<128x128xf32>
    %cst_95 = arith.constant dense<0.000000e+00> : vector<8x128xf32>
    %105 = tpu.matmul %89, %104, %cst_95 {dimension_numbers = #tpu.dot_dimension_numbers<[1], [0], [0], [1], [0, 0, 1, 1], [], []>} : vector<8x128xf32>, vector<128x128xf32>, vector<8x128xf32> -> vector<8x128xf32>
    %106 = arith.addf %103, %105 : vector<8x128xf32>
    %107 = math.tanh %106 : vector<8x128xf32>
    %c0_96 = arith.constant 0 : index
    %c0_97 = arith.constant 0 : index
    %108 = vector.load %arg5[%c0_96, %c0_97] : memref<128x128xf32, #tpu.memory_space<vmem>>, vector<128x128xf32>
    %cst_98 = arith.constant dense<0.000000e+00> : vector<8x128xf32>
    %109 = tpu.matmul %107, %108, %cst_98 {dimension_numbers = #tpu.dot_dimension_numbers<[1], [0], [0], [1], [0, 0, 1, 1], [], []>} : vector<8x128xf32>, vector<128x128xf32>, vector<8x128xf32> -> vector<8x128xf32>
    %110 = vector.broadcast %11 : vector<1x128xf32> to vector<8x128xf32>
    %111 = arith.addf %109, %110 : vector<8x128xf32>
    %c0_99 = arith.constant 0 : index
    %c0_100 = arith.constant 0 : index
    %112 = vector.load %arg6[%c0_99, %c0_100] : memref<128x128xf32, #tpu.memory_space<vmem>>, vector<128x128xf32>
    %cst_101 = arith.constant dense<0.000000e+00> : vector<8x128xf32>
    %113 = tpu.matmul %97, %112, %cst_101 {dimension_numbers = #tpu.dot_dimension_numbers<[1], [0], [0], [1], [0, 0, 1, 1], [], []>} : vector<8x128xf32>, vector<128x128xf32>, vector<8x128xf32> -> vector<8x128xf32>
    %114 = arith.addf %111, %113 : vector<8x128xf32>
    %115 = math.tanh %114 : vector<8x128xf32>
    %c0_102 = arith.constant 0 : index
    %c0_103 = arith.constant 0 : index
    %116 = vector.load %arg8[%c0_102, %c0_103] : memref<128x128xf32, #tpu.memory_space<vmem>>, vector<128x128xf32>
    %cst_104 = arith.constant dense<0.000000e+00> : vector<8x128xf32>
    %117 = tpu.matmul %115, %116, %cst_104 {dimension_numbers = #tpu.dot_dimension_numbers<[1], [0], [0], [1], [0, 0, 1, 1], [], []>} : vector<8x128xf32>, vector<128x128xf32>, vector<8x128xf32> -> vector<8x128xf32>
    %118 = vector.broadcast %12 : vector<1x128xf32> to vector<8x128xf32>
    %119 = arith.addf %117, %118 : vector<8x128xf32>
    %c40_105 = arith.constant 40 : index
    %c0_106 = arith.constant 0 : index
    %120 = vector.load %arg10[%c40_105, %c0_106] : memref<64x128xf32, #tpu.memory_space<vmem>>, vector<8x128xf32>
    tpu.vector_store %arg10[%c40_105, %c0_106], %119 {strides = array<i32>} : memref<64x128xf32, #tpu.memory_space<vmem>>, vector<8x128xf32>,
    %c48 = arith.constant 48 : index
    %c0_107 = arith.constant 0 : index
    %121 = vector.load %arg12[%c48, %c0_107] : memref<64x128xf32, #tpu.memory_space<vmem>>, vector<8x128xf32>
    %c0_108 = arith.constant 0 : index
    %c0_109 = arith.constant 0 : index
    %122 = vector.load %arg3[%c0_108, %c0_109] : memref<128x128xf32, #tpu.memory_space<vmem>>, vector<128x128xf32>
    %cst_110 = arith.constant dense<0.000000e+00> : vector<8x128xf32>
    %123 = tpu.matmul %107, %122, %cst_110 {dimension_numbers = #tpu.dot_dimension_numbers<[1], [0], [0], [1], [0, 0, 1, 1], [], []>} : vector<8x128xf32>, vector<128x128xf32>, vector<8x128xf32> -> vector<8x128xf32>
    %124 = arith.addf %121, %123 : vector<8x128xf32>
    %125 = math.tanh %124 : vector<8x128xf32>
    %c0_111 = arith.constant 0 : index
    %c0_112 = arith.constant 0 : index
    %126 = vector.load %arg5[%c0_111, %c0_112] : memref<128x128xf32, #tpu.memory_space<vmem>>, vector<128x128xf32>
    %cst_113 = arith.constant dense<0.000000e+00> : vector<8x128xf32>
    %127 = tpu.matmul %125, %126, %cst_113 {dimension_numbers = #tpu.dot_dimension_numbers<[1], [0], [0], [1], [0, 0, 1, 1], [], []>} : vector<8x128xf32>, vector<128x128xf32>, vector<8x128xf32> -> vector<8x128xf32>
    %128 = vector.broadcast %11 : vector<1x128xf32> to vector<8x128xf32>
    %129 = arith.addf %127, %128 : vector<8x128xf32>
    %c0_114 = arith.constant 0 : index
    %c0_115 = arith.constant 0 : index
    %130 = vector.load %arg6[%c0_114, %c0_115] : memref<128x128xf32, #tpu.memory_space<vmem>>, vector<128x128xf32>
    %cst_116 = arith.constant dense<0.000000e+00> : vector<8x128xf32>
    %131 = tpu.matmul %115, %130, %cst_116 {dimension_numbers = #tpu.dot_dimension_numbers<[1], [0], [0], [1], [0, 0, 1, 1], [], []>} : vector<8x128xf32>, vector<128x128xf32>, vector<8x128xf32> -> vector<8x128xf32>
    %132 = arith.addf %129, %131 : vector<8x128xf32>
    %133 = math.tanh %132 : vector<8x128xf32>
    %c0_117 = arith.constant 0 : index
    %c0_118 = arith.constant 0 : index
    %134 = vector.load %arg8[%c0_117, %c0_118] : memref<128x128xf32, #tpu.memory_space<vmem>>, vector<128x128xf32>
    %cst_119 = arith.constant dense<0.000000e+00> : vector<8x128xf32>
    %135 = tpu.matmul %133, %134, %cst_119 {dimension_numbers = #tpu.dot_dimension_numbers<[1], [0], [0], [1], [0, 0, 1, 1], [], []>} : vector<8x128xf32>, vector<128x128xf32>, vector<8x128xf32> -> vector<8x128xf32>
    %136 = vector.broadcast %12 : vector<1x128xf32> to vector<8x128xf32>
    %137 = arith.addf %135, %136 : vector<8x128xf32>
    %c48_120 = arith.constant 48 : index
    %c0_121 = arith.constant 0 : index
    %138 = vector.load %arg10[%c48_120, %c0_121] : memref<64x128xf32, #tpu.memory_space<vmem>>, vector<8x128xf32>
    tpu.vector_store %arg10[%c48_120, %c0_121], %137 {strides = array<i32>} : memref<64x128xf32, #tpu.memory_space<vmem>>, vector<8x128xf32>,
    %c56 = arith.constant 56 : index
    %c0_122 = arith.constant 0 : index
    %139 = vector.load %arg12[%c56, %c0_122] : memref<64x128xf32, #tpu.memory_space<vmem>>, vector<8x128xf32>
    %c0_123 = arith.constant 0 : index
    %c0_124 = arith.constant 0 : index
    %140 = vector.load %arg3[%c0_123, %c0_124] : memref<128x128xf32, #tpu.memory_space<vmem>>, vector<128x128xf32>
    %cst_125 = arith.constant dense<0.000000e+00> : vector<8x128xf32>
    %141 = tpu.matmul %125, %140, %cst_125 {dimension_numbers = #tpu.dot_dimension_numbers<[1], [0], [0], [1], [0, 0, 1, 1], [], []>} : vector<8x128xf32>, vector<128x128xf32>, vector<8x128xf32> -> vector<8x128xf32>
    %142 = arith.addf %139, %141 : vector<8x128xf32>
    %143 = math.tanh %142 : vector<8x128xf32>
    %c0_126 = arith.constant 0 : index
    %c0_127 = arith.constant 0 : index
    %144 = vector.load %arg5[%c0_126, %c0_127] : memref<128x128xf32, #tpu.memory_space<vmem>>, vector<128x128xf32>
    %cst_128 = arith.constant dense<0.000000e+00> : vector<8x128xf32>
    %145 = tpu.matmul %143, %144, %cst_128 {dimension_numbers = #tpu.dot_dimension_numbers<[1], [0], [0], [1], [0, 0, 1, 1], [], []>} : vector<8x128xf32>, vector<128x128xf32>, vector<8x128xf32> -> vector<8x128xf32>
    %146 = vector.broadcast %11 : vector<1x128xf32> to vector<8x128xf32>
    %147 = arith.addf %145, %146 : vector<8x128xf32>
    %c0_129 = arith.constant 0 : index
    %c0_130 = arith.constant 0 : index
    %148 = vector.load %arg6[%c0_129, %c0_130] : memref<128x128xf32, #tpu.memory_space<vmem>>, vector<128x128xf32>
    %cst_131 = arith.constant dense<0.000000e+00> : vector<8x128xf32>
    %149 = tpu.matmul %133, %148, %cst_131 {dimension_numbers = #tpu.dot_dimension_numbers<[1], [0], [0], [1], [0, 0, 1, 1], [], []>} : vector<8x128xf32>, vector<128x128xf32>, vector<8x128xf32> -> vector<8x128xf32>
    %150 = arith.addf %147, %149 : vector<8x128xf32>
    %151 = math.tanh %150 : vector<8x128xf32>
    %c0_132 = arith.constant 0 : index
    %c0_133 = arith.constant 0 : index
    %152 = vector.load %arg8[%c0_132, %c0_133] : memref<128x128xf32, #tpu.memory_space<vmem>>, vector<128x128xf32>
    %cst_134 = arith.constant dense<0.000000e+00> : vector<8x128xf32>
    %153 = tpu.matmul %151, %152, %cst_134 {dimension_numbers = #tpu.dot_dimension_numbers<[1], [0], [0], [1], [0, 0, 1, 1], [], []>} : vector<8x128xf32>, vector<128x128xf32>, vector<8x128xf32> -> vector<8x128xf32>
    %154 = vector.broadcast %12 : vector<1x128xf32> to vector<8x128xf32>
    %155 = arith.addf %153, %154 : vector<8x128xf32>
    %c56_135 = arith.constant 56 : index
    %c0_136 = arith.constant 0 : index
    %156 = vector.load %arg10[%c56_135, %c0_136] : memref<64x128xf32, #tpu.memory_space<vmem>>, vector<8x128xf32>
    tpu.vector_store %arg10[%c56_135, %c0_136], %155 {strides = array<i32>} : memref<64x128xf32, #tpu.memory_space<vmem>>, vector<8x128xf32>,
    %c0_137 = arith.constant 0 : index
    %c0_138 = arith.constant 0 : index
    %c0_139 = arith.constant 0 : index
    %157 = vector.load %arg11[%c0_137, %c0_138, %c0_139] : memref<2x8x128xf32, #tpu.memory_space<vmem>>, vector<1x8x128xf32>
    %158 = vector.shape_cast %157 : vector<1x8x128xf32> to vector<8x128xf32>
    %159 = vector.shape_cast %143 : vector<8x128xf32> to vector<1x8x128xf32>
    tpu.vector_store %arg11[%c0_137, %c0_138, %c0_139], %159 {strides = array<i32>} : memref<2x8x128xf32, #tpu.memory_space<vmem>>, vector<1x8x128xf32>,
    %c1_140 = arith.constant 1 : index
    %c0_141 = arith.constant 0 : index
    %c0_142 = arith.constant 0 : index
    %160 = vector.load %arg11[%c1_140, %c0_141, %c0_142] : memref<2x8x128xf32, #tpu.memory_space<vmem>>, vector<1x8x128xf32>
    %161 = vector.shape_cast %160 : vector<1x8x128xf32> to vector<8x128xf32>
    %162 = vector.shape_cast %151 : vector<8x128xf32> to vector<1x8x128xf32>
    tpu.vector_store %arg11[%c1_140, %c0_141, %c0_142], %162 {strides = array<i32>} : memref<2x8x128xf32, #tpu.memory_space<vmem>>, vector<1x8x128xf32>,
    return
  }
}

</mosaic_0001>

<llo_original>
// kernel: tpu_custom_call.1
$region0: #{tpu_custom_call.1}
  #allocation0 [shape = 'u32[]', space=smem, size = 0x4, offset = 0x4, fixed_abs, tag = 'smem constant byte address 0x4 - core index']
  #allocation1 [shape = 'u32[144,128]{1,0:T(1,128)}', space=vmem, size = 0x12000, scoped, tag = 'internal scratch']
  #allocation2 [shape = 'f32[64,128]{1,0:T(8,128)}', space=vmem, size = 0x8000, scoped, tag = 'scratch operand']
  %s0 = inlined_call_operand.hbm [shape: f32[64,128], index: 0, kind: input, shape index: {}]
  %s1 = inlined_call_operand.hbm [shape: f32[2,8,128], index: 1, kind: input, shape index: {}]
  %s2 = inlined_call_operand.hbm [shape: f32[128,128], index: 2, kind: input, shape index: {}]
  %s3 = inlined_call_operand.hbm [shape: f32[128,128], index: 3, kind: input, shape index: {}]
  %s4 = inlined_call_operand.vmem [shape: f32[1,128], index: 4, kind: input, shape index: {}]
  %s5 = inlined_call_operand.hbm [shape: f32[128,128], index: 5, kind: input, shape index: {}]
  %s6 = inlined_call_operand.hbm [shape: f32[128,128], index: 6, kind: input, shape index: {}]
  %s7 = inlined_call_operand.vmem [shape: f32[1,128], index: 7, kind: input, shape index: {}]
  %s8 = inlined_call_operand.hbm [shape: f32[128,128], index: 8, kind: input, shape index: {}]
  %s9 = inlined_call_operand.vmem [shape: f32[1,128], index: 9, kind: input, shape index: {}]
  %s10 = inlined_call_operand.hbm [shape: f32[64,128], index: 10, kind: output, shape index: {0}]
  %s11 = inlined_call_operand.hbm [shape: f32[2,8,128], index: 11, kind: output, shape index: {1}]
  %12 = xla_tuple %s10, %s11
  %s13 = sld [smem:[#allocation0]]
  $region86: #{tpu_custom_call.1} parent=0
    _
  %s15 = ssub.s32 1, %s13
  %s16 = scalar_select 0, %s15, %s13
  $region1: #{tpu_custom_call.1} parent=0
    #allocation3 [shape = 'u8[32768]{0}', space=vmem, size = 0x8000, scoped, tag = 'input window, operand 0, single buffered']
    #allocation4 [shape = 's32[1]{0}', space=sflag, size = 0x4, scoped, tag = 'scoped memory for tpu_custom_call.1']
    #allocation5 [shape = 's32[1]{0}', space=sflag, size = 0x4, scoped, tag = 'scoped memory for tpu_custom_call.1']
    #allocation6 [shape = 'u8[8192]{0}', space=vmem, size = 0x2000, scoped, tag = 'input window, operand 1, single buffered']
    #allocation7 [shape = 's32[1]{0}', space=sflag, size = 0x4, scoped, tag = 'scoped memory for tpu_custom_call.1']
    #allocation8 [shape = 'u8[65536]{0}', space=vmem, size = 0x10000, scoped, tag = 'input window, operand 2, single buffered']
    #allocation9 [shape = 'u8[65536]{0}', space=vmem, size = 0x10000, scoped, tag = 'input window, operand 3, single buffered']
    #allocation10 [shape = 's32[1]{0}', space=sflag, size = 0x4, scoped, tag = 'scoped memory for tpu_custom_call.1']
    #allocation11 [shape = 'u8[65536]{0}', space=vmem, size = 0x10000, scoped, tag = 'input window, operand 5, single buffered']
    #allocation12 [shape = 'u8[65536]{0}', space=vmem, size = 0x10000, scoped, tag = 'input window, operand 6, single buffered']
    #allocation13 [shape = 's32[1]{0}', space=sflag, size = 0x4, scoped, tag = 'scoped memory for tpu_custom_call.1']
    #allocation14 [shape = 'u8[65536]{0}', space=vmem, size = 0x10000, scoped, tag = 'input window, operand 8, single buffered']
    #allocation15 [shape = 'u8[32768]{0}', space=vmem, size = 0x8000, scoped, tag = 'output window, operand 0, single buffered']
    #allocation16 [shape = 'u8[8192]{0}', space=vmem, size = 0x2000, scoped, tag = 'output window, operand 1, single buffered']
    #allocation17 [shape = 's32[1]{0}', space=sflag, size = 0x4, scoped, tag = 'scoped memory for tpu_custom_call.1']
    %17 = vsyncpa [#allocation4], 0
    %18 = vsyncpa [#allocation7], 0
    %19 = vsyncpa [#allocation10], 0
    %20 = vsyncpa [#allocation13], 0
    %21 = vsyncpa [#allocation5], 0
    %22 = vsyncpa [#allocation17], 0
    // Predicated region
    $region2: #{tpu_custom_call.1} parent=1 // pred_check
      _
    $region3: #{tpu_custom_call.1} parent=1 // pred_check_branch
      %24 = sbr.rel (0) target = $region5
    $region4: #{tpu_custom_call.1} parent=1 // pred_region
      %s26 = ssub.s32 1024, 1024
      %27 = vsyncadd [#allocation4], %s26
      %s28 = sshll.u32 [#allocation3], 4
      %s29 = int_to_ptr.vmem [resolvable:$true] %s28
      %34 = dma.hbm_to_vmem [thread:$0]  %s0, 1024, %s29, [#allocation4], 128, 128, 8
    $region5: #{tpu_custom_call.1} parent=1 // pred_fallthru
      _
    // Predicated region
    $region6: #{tpu_custom_call.1} parent=1 // pred_check
      _
    $region7: #{tpu_custom_call.1} parent=1 // pred_check_branch
      %36 = sbr.rel (0) target = $region9
    $region8: #{tpu_custom_call.1} parent=1 // pred_region
      %s38 = ssub.s32 256, 256
      %39 = vsyncadd [#allocation7], %s38
      %s40 = sshll.u32 [#allocation6], 4
      %s41 = int_to_ptr.vmem [resolvable:$true] %s40
      %46 = dma.hbm_to_vmem [thread:$0]  %s1, 256, %s41, [#allocation7], 128, 128, 8
    $region9: #{tpu_custom_call.1} parent=1 // pred_fallthru
      _
    // Predicated region
    $region10: #{tpu_custom_call.1} parent=1 // pred_check
      _
    $region11: #{tpu_custom_call.1} parent=1 // pred_check_branch
      %48 = sbr.rel (0) target = $region13
    $region12: #{tpu_custom_call.1} parent=1 // pred_region
      %s50 = ssub.s32 2048, 2048
      %51 = vsyncadd [#allocation7], %s50
      %s52 = sshll.u32 [#allocation8], 4
      %s53 = int_to_ptr.vmem [resolvable:$true] %s52
      %58 = dma.hbm_to_vmem [thread:$0]  %s2, 2048, %s53, [#allocation7], 128, 128, 8
    $region13: #{tpu_custom_call.1} parent=1 // pred_fallthru
      _
    // Predicated region
    $region14: #{tpu_custom_call.1} parent=1 // pred_check
      _
    $region15: #{tpu_custom_call.1} parent=1 // pred_check_branch
      %60 = sbr.rel (0) target = $region17
    $region16: #{tpu_custom_call.1} parent=1 // pred_region
      %s62 = ssub.s32 2048, 2048
      %63 = vsyncadd [#allocation10], %s62
      %s64 = sshll.u32 [#allocation9], 4
      %s65 = int_to_ptr.vmem [resolvable:$true] %s64
      %70 = dma.hbm_to_vmem [thread:$0]  %s3, 2048, %s65, [#allocation10], 128, 128, 8
    $region17: #{tpu_custom_call.1} parent=1 // pred_fallthru
      _
    // Predicated region
    $region18: #{tpu_custom_call.1} parent=1 // pred_check
      _
    $region19: #{tpu_custom_call.1} parent=1 // pred_check_branch
      %72 = sbr.rel (0) target = $region21
    $region20: #{tpu_custom_call.1} parent=1 // pred_region
      _
    $region21: #{tpu_custom_call.1} parent=1 // pred_fallthru
      _
    // Predicated region
    $region22: #{tpu_custom_call.1} parent=1 // pred_check
      _
    $region23: #{tpu_custom_call.1} parent=1 // pred_check_branch
      %74 = sbr.rel (0) target = $region25
    $region24: #{tpu_custom_call.1} parent=1 // pred_region
      %s76 = ssub.s32 2048, 2048
      %77 = vsyncadd [#allocation10], %s76
      %s78 = sshll.u32 [#allocation11], 4
      %s79 = int_to_ptr.vmem [resolvable:$true] %s78
      %84 = dma.hbm_to_vmem [thread:$0]  %s5, 2048, %s79, [#allocation10], 128, 128, 8
    $region25: #{tpu_custom_call.1} parent=1 // pred_fallthru
      _
    // Predicated region
    $region26: #{tpu_custom_call.1} parent=1 // pred_check
      _
    $region27: #{tpu_custom_call.1} parent=1 // pred_check_branch
      %86 = sbr.rel (0) target = $region29
    $region28: #{tpu_custom_call.1} parent=1 // pred_region
      %s88 = ssub.s32 2048, 2048
      %89 = vsyncadd [#allocation13], %s88
      %s90 = sshll.u32 [#allocation12], 4
      %s91 = int_to_ptr.vmem [resolvable:$true] %s90
      %96 = dma.hbm_to_vmem [thread:$0]  %s6, 2048, %s91, [#allocation13], 128, 128, 8
    $region29: #{tpu_custom_call.1} parent=1 // pred_fallthru
      _
    // Predicated region
    $region30: #{tpu_custom_call.1} parent=1 // pred_check
      _
    $region31: #{tpu_custom_call.1} parent=1 // pred_check_branch
      %98 = sbr.rel (0) target = $region33
    $region32: #{tpu_custom_call.1} parent=1 // pred_region
      _
    $region33: #{tpu_custom_call.1} parent=1 // pred_fallthru
      _
    // Predicated region
    $region34: #{tpu_custom_call.1} parent=1 // pred_check
      _
    $region35: #{tpu_custom_call.1} parent=1 // pred_check_branch
      %100 = sbr.rel (0) target = $region37
    $region36: #{tpu_custom_call.1} parent=1 // pred_region
      %s102 = ssub.s32 2048, 2048
      %103 = vsyncadd [#allocation13], %s102
      %s104 = sshll.u32 [#allocation14], 4
      %s105 = int_to_ptr.vmem [resolvable:$true] %s104
      %110 = dma.hbm_to_vmem [thread:$0]  %s8, 2048, %s105, [#allocation13], 128, 128, 8
    $region37: #{tpu_custom_call.1} parent=1 // pred_fallthru
      _
    // Predicated region
    $region38: #{tpu_custom_call.1} parent=1 // pred_check
      _
    $region39: #{tpu_custom_call.1} parent=1 // pred_check_branch
      %112 = sbr.rel (0) target = $region41
    $region40: #{tpu_custom_call.1} parent=1 // pred_region
      _
    $region41: #{tpu_custom_call.1} parent=1 // pred_fallthru
      _
    // Predicated region
    $region42: #{tpu_custom_call.1} parent=1 // pred_check
      _
    $region43: #{tpu_custom_call.1} parent=1 // pred_check_branch
      %114 = sbr.rel (0) target = $region45
    $region44: #{tpu_custom_call.1} parent=1 // pred_region
      %115 = dma.done [#allocation4], 1024
    $region45: #{tpu_custom_call.1} parent=1 // pred_fallthru
      _
    // Predicated region
    $region46: #{tpu_custom_call.1} parent=1 // pred_check
      _
    $region47: #{tpu_custom_call.1} parent=1 // pred_check_branch
      %117 = sbr.rel (0) target = $region49
    $region48: #{tpu_custom_call.1} parent=1 // pred_region
      %118 = dma.done [#allocation7], 256
    $region49: #{tpu_custom_call.1} parent=1 // pred_fallthru
      _
    // Predicated region
    $region50: #{tpu_custom_call.1} parent=1 // pred_check
      _
    $region51: #{tpu_custom_call.1} parent=1 // pred_check_branch
      %120 = sbr.rel (0) target = $region53
    $region52: #{tpu_custom_call.1} parent=1 // pred_region
      %121 = dma.done [#allocation7], 2048
    $region53: #{tpu_custom_call.1} parent=1 // pred_fallthru
      _
    // Predicated region
    $region54: #{tpu_custom_call.1} parent=1 // pred_check
      _
    $region55: #{tpu_custom_call.1} parent=1 // pred_check_branch
      %123 = sbr.rel (0) target = $region57
    $region56: #{tpu_custom_call.1} parent=1 // pred_region
      %124 = dma.done [#allocation10], 2048
    $region57: #{tpu_custom_call.1} parent=1 // pred_fallthru
      _
    // Predicated region
    $region58: #{tpu_custom_call.1} parent=1 // pred_check
      _
    $region59: #{tpu_custom_call.1} parent=1 // pred_check_branch
      %126 = sbr.rel (0) target = $region61
    $region60: #{tpu_custom_call.1} parent=1 // pred_region
      %127 = dma.done [#allocation10], 2048
    $region61: #{tpu_custom_call.1} parent=1 // pred_fallthru
      _
    // Predicated region
    $region62: #{tpu_custom_call.1} parent=1 // pred_check
      _
    $region63: #{tpu_custom_call.1} parent=1 // pred_check_branch
      %129 = sbr.rel (0) target = $region65
    $region64: #{tpu_custom_call.1} parent=1 // pred_region
      %130 = dma.done [#allocation13], 2048
    $region65: #{tpu_custom_call.1} parent=1 // pred_fallthru
      _
    // Predicated region
    $region66: #{tpu_custom_call.1} parent=1 // pred_check
      _
    $region67: #{tpu_custom_call.1} parent=1 // pred_check_branch
      %132 = sbr.rel (0) target = $region69
    $region68: #{tpu_custom_call.1} parent=1 // pred_region
      %133 = dma.done [#allocation13], 2048
    $region69: #{tpu_custom_call.1} parent=1 // pred_fallthru
      _
    %v134 = vld [vmem:[#allocation3] sm:$0xff]
    %v135 = vld [vmem:[#allocation3 + $0x8] sm:$0xff]
    %v136 = vld [vmem:[#allocation3 + $0x10] sm:$0xff]
    %v137 = vld [vmem:[#allocation3 + $0x18] sm:$0xff]
    %v138 = vld [vmem:[#allocation3 + $0x20] sm:$0xff]
    %v139 = vld [vmem:[#allocation3 + $0x28] sm:$0xff]
    %v140 = vld [vmem:[#allocation3 + $0x30] sm:$0xff]
    %v141 = vld [vmem:[#allocation3 + $0x38] sm:$0xff]
    %v142 = vld [vmem:[#allocation8] sm:$0xff]
    %v143 = vld [vmem:[#allocation8 + $0x8] sm:$0xff]
    %v144 = vld [vmem:[#allocation8 + $0x10] sm:$0xff]
    %v145 = vld [vmem:[#allocation8 + $0x18] sm:$0xff]
    %v146 = vld [vmem:[#allocation8 + $0x20] sm:$0xff]
    %v147 = vld [vmem:[#allocation8 + $0x28] sm:$0xff]
    %v148 = vld [vmem:[#allocation8 + $0x30] sm:$0xff]
    %v149 = vld [vmem:[#allocation8 + $0x38] sm:$0xff]
    %v150 = vld [vmem:[#allocation8 + $0x40] sm:$0xff]
    %v151 = vld [vmem:[#allocation8 + $0x48] sm:$0xff]
    %v152 = vld [vmem:[#allocation8 + $0x50] sm:$0xff]
    %v153 = vld [vmem:[#allocation8 + $0x58] sm:$0xff]
    %v154 = vld [vmem:[#allocation8 + $0x60] sm:$0xff]
    %v155 = vld [vmem:[#allocation8 + $0x68] sm:$0xff]
    %v156 = vld [vmem:[#allocation8 + $0x70] sm:$0xff]
    %v157 = vld [vmem:[#allocation8 + $0x78] sm:$0xff]
    %v158 = vld [vmem:[%s4] sm:$0x1]
    %v160 = vlaneseq
    %v161 = vshrl.u32 %v160, 7
    %v162 = vsub.s32 0, %v161
    %v163 = vrot.slane %v158, %v162
    %165 = vmatprep.subr.mxu0 0.0
    %166 = vmatpush1.msra.mxu0 %v157
    %167 = vmatprep.subr.mxu0 0.0
    %168 = vmatpush1.msra.mxu0 %v156
    %169 = vmatprep.subr.mxu0 0.0
    %170 = vmatpush1.msra.mxu0 %v155
    %171 = vmatprep.subr.mxu0 0.0
    %172 = vmatpush1.msra.mxu0 %v154
    %173 = vmatprep.subr.mxu0 0.0
    %174 = vmatpush1.msra.mxu0 %v153
    %175 = vmatprep.subr.mxu0 0.0
    %176 = vmatpush1.msra.mxu0 %v152
    %177 = vmatprep.subr.mxu0 0.0
    %178 = vmatpush1.msra.mxu0 %v151
    %179 = vmatprep.subr.mxu0 0.0
    %180 = vmatpush1.msra.mxu0 %v150
    %181 = vmatprep.subr.mxu0 0.0
    %182 = vmatpush1.msra.mxu0 %v149
    %183 = vmatprep.subr.mxu0 0.0
    %184 = vmatpush1.msra.mxu0 %v148
    %185 = vmatprep.subr.mxu0 0.0
    %186 = vmatpush1.msra.mxu0 %v147
    %187 = vmatprep.subr.mxu0 0.0
    %188 = vmatpush1.msra.mxu0 %v146
    %189 = vmatprep.subr.mxu0 0.0
    %190 = vmatpush1.msra.mxu0 %v145
    %191 = vmatprep.subr.mxu0 0.0
    %192 = vmatpush1.msra.mxu0 %v144
    %193 = vmatprep.subr.mxu0 0.0
    %194 = vmatpush1.msra.mxu0 %v143
    %195 = vmatprep.subr.mxu0 0.0
    %196 = vmatpush1.msra.mxu0 %v142
    %197 = vmatprep.subr.mxu0 0.0
    %198 = vmatpush2.msra.mxu0 0.0
    %199 = vmatprep.subr.mxu0 0.0
    %200 = vmatpush2.msra.mxu0 0.0
    %201 = vmatprep.subr.mxu0 0.0
    %202 = vmatpush2.msra.mxu0 0.0
    %203 = vmatprep.subr.mxu0 0.0
    %204 = vmatpush2.msra.mxu0 0.0
    %205 = vmatprep.subr.mxu0 0.0
    %206 = vmatpush2.msra.mxu0 0.0
    %207 = vmatprep.subr.mxu0 0.0
    %208 = vmatpush2.msra.mxu0 0.0
    %209 = vmatprep.subr.mxu0 0.0
    %210 = vmatpush2.msra.mxu0 0.0
    %211 = vmatprep.subr.mxu0 0.0
    %212 = vmatpush2.msra.mxu0 0.0
    %213 = vmatprep.subr.mxu0 0.0
    %214 = vmatpush2.msra.mxu0 0.0
    %215 = vmatprep.subr.mxu0 0.0
    %216 = vmatpush2.msra.mxu0 0.0
    %217 = vmatprep.subr.mxu0 0.0
    %218 = vmatpush2.msra.mxu0 0.0
    %219 = vmatprep.subr.mxu0 0.0
    %220 = vmatpush2.msra.mxu0 0.0
    %221 = vmatprep.subr.mxu0 0.0
    %222 = vmatpush2.msra.mxu0 0.0
    %223 = vmatprep.subr.mxu0 0.0
    %224 = vmatpush2.msra.mxu0 0.0
    %225 = vmatprep.subr.mxu0 0.0
    %226 = vmatpush2.msra.mxu0 0.0
    %227 = vmatprep.subr.mxu0 0.0
    %228 = vmatpush2.msra.mxu0 0.0
    %229 = vmatprep.mubr.f32.mxu0 0.0
    %230 = vmatmul.mubr.f32.gmra.mxu0 %v134
    %v231 = vpop.f32.mrf.mxu0
    %v232 = vadd.f32 %v163, %v231
    %v233 = vpop.f32.mrf.mxu0
    %234 = vmatprep.mubr.f32.mxu0 0.0
    %235 = vmatmul.mubr.f32.gmra.mxu0 %v135
    %v236 = vpop.f32.mrf.mxu0
    %v237 = vadd.f32 %v163, %v236
    %v238 = vpop.f32.mrf.mxu0
    %239 = vmatprep.mubr.f32.mxu0 0.0
    %240 = vmatmul.mubr.f32.gmra.mxu0 %v136
    %v241 = vpop.f32.mrf.mxu0
    %v242 = vadd.f32 %v163, %v241
    %v243 = vpop.f32.mrf.mxu0
    %244 = vmatprep.mubr.f32.mxu0 0.0
    %245 = vmatmul.mubr.f32.gmra.mxu0 %v137
    %v246 = vpop.f32.mrf.mxu0
    %v247 = vadd.f32 %v163, %v246
    %v248 = vpop.f32.mrf.mxu0
    %249 = vmatprep.mubr.f32.mxu0 0.0
    %250 = vmatmul.mubr.f32.gmra.mxu0 %v138
    %v251 = vpop.f32.mrf.mxu0
    %v252 = vadd.f32 %v163, %v251
    %v253 = vpop.f32.mrf.mxu0
    %254 = vmatprep.mubr.f32.mxu0 0.0
    %255 = vmatmul.mubr.f32.gmra.mxu0 %v139
    %v256 = vpop.f32.mrf.mxu0
    %v257 = vadd.f32 %v163, %v256
    %v258 = vpop.f32.mrf.mxu0
    %259 = vmatprep.mubr.f32.mxu0 0.0
    %260 = vmatmul.mubr.f32.gmra.mxu0 %v140
    %v261 = vpop.f32.mrf.mxu0
    %v262 = vadd.f32 %v163, %v261
    %v263 = vpop.f32.mrf.mxu0
    %264 = vmatprep.mubr.f32.mxu0 0.0
    %265 = vmatmul.mubr.f32.gmra.mxu0 %v141
    %v266 = vpop.f32.mrf.mxu0
    %v267 = vadd.f32 %v163, %v266
    %v268 = vpop.f32.mrf.mxu0
    %269 = vdwg.mxu0
    %270 = vst [vmem:[#allocation2] sm:$0xff] %v232
    %271 = vst [vmem:[#allocation2 + $0x8] sm:$0xff] %v237
    %272 = vst [vmem:[#allocation2 + $0x10] sm:$0xff] %v242
    %273 = vst [vmem:[#allocation2 + $0x18] sm:$0xff] %v247
    %274 = vst [vmem:[#allocation2 + $0x20] sm:$0xff] %v252
    %275 = vst [vmem:[#allocation2 + $0x28] sm:$0xff] %v257
    %276 = vst [vmem:[#allocation2 + $0x30] sm:$0xff] %v262
    %277 = vst [vmem:[#allocation2 + $0x38] sm:$0xff] %v267
    %v278 = vld [vmem:[#allocation6] sm:$0xff]
    %s279 = scalar_lea.vmem [#allocation6], 8
    %v280 = vld [vmem:[%s279] sm:$0xff]
    %v281 = vld [vmem:[%s7] sm:$0x1]
    %v282 = vld [vmem:[%s9] sm:$0x1]
    %v283 = vld [vmem:[#allocation2] sm:$0xff]
    %v284 = vld [vmem:[#allocation9] sm:$0xff]
    %v285 = vld [vmem:[#allocation9 + $0x8] sm:$0xff]
    %v286 = vld [vmem:[#allocation9 + $0x10] sm:$0xff]
    %v287 = vld [vmem:[#allocation9 + $0x18] sm:$0xff]
    %v288 = vld [vmem:[#allocation9 + $0x20] sm:$0xff]
    %v289 = vld [vmem:[#allocation9 + $0x28] sm:$0xff]
    %v290 = vld [vmem:[#allocation9 + $0x30] sm:$0xff]
    %v291 = vld [vmem:[#allocation9 + $0x38] sm:$0xff]
    %v292 = vld [vmem:[#allocation9 + $0x40] sm:$0xff]
    %v293 = vld [vmem:[#allocation9 + $0x48] sm:$0xff]
    %v294 = vld [vmem:[#allocation9 + $0x50] sm:$0xff]
    %v295 = vld [vmem:[#allocation9 + $0x58] sm:$0xff]
    %v296 = vld [vmem:[#allocation9 + $0x60] sm:$0xff]
    %v297 = vld [vmem:[#allocation9 + $0x68] sm:$0xff]
    %v298 = vld [vmem:[#allocation9 + $0x70] sm:$0xff]
    %v299 = vld [vmem:[#allocation9 + $0x78] sm:$0xff]
    %300 = vmatprep.subr.mxu0 0.0
    %301 = vmatpush1.msra.mxu0 %v299
    %302 = vmatprep.subr.mxu0 0.0
    %303 = vmatpush1.msra.mxu0 %v298
    %304 = vmatprep.subr.mxu0 0.0
    %305 = vmatpush1.msra.mxu0 %v297
    %306 = vmatprep.subr.mxu0 0.0
    %307 = vmatpush1.msra.mxu0 %v296
    %308 = vmatprep.subr.mxu0 0.0
    %309 = vmatpush1.msra.mxu0 %v295
    %310 = vmatprep.subr.mxu0 0.0
    %311 = vmatpush1.msra.mxu0 %v294
    %312 = vmatprep.subr.mxu0 0.0
    %313 = vmatpush1.msra.mxu0 %v293
    %314 = vmatprep.subr.mxu0 0.0
    %315 = vmatpush1.msra.mxu0 %v292
    %316 = vmatprep.subr.mxu0 0.0
    %317 = vmatpush1.msra.mxu0 %v291
    %318 = vmatprep.subr.mxu0 0.0
    %319 = vmatpush1.msra.mxu0 %v290
    %320 = vmatprep.subr.mxu0 0.0
    %321 = vmatpush1.msra.mxu0 %v289
    %322 = vmatprep.subr.mxu0 0.0
    %323 = vmatpush1.msra.mxu0 %v288
    %324 = vmatprep.subr.mxu0 0.0
    %325 = vmatpush1.msra.mxu0 %v287
    %326 = vmatprep.subr.mxu0 0.0
    %327 = vmatpush1.msra.mxu0 %v286
    %328 = vmatprep.subr.mxu0 0.0
    %329 = vmatpush1.msra.mxu0 %v285
    %330 = vmatprep.subr.mxu0 0.0
    %331 = vmatpush1.msra.mxu0 %v284
    %332 = vmatprep.subr.mxu0 0.0
    %333 = vmatpush2.msra.mxu0 0.0
    %334 = vmatprep.subr.mxu0 0.0
    %335 = vmatpush2.msra.mxu0 0.0
    %336 = vmatprep.subr.mxu0 0.0
    %337 = vmatpush2.msra.mxu0 0.0
    %338 = vmatprep.subr.mxu0 0.0
    %339 = vmatpush2.msra.mxu0 0.0
    %340 = vmatprep.subr.mxu0 0.0
    %341 = vmatpush2.msra.mxu0 0.0
    %342 = vmatprep.subr.mxu0 0.0
    %343 = vmatpush2.msra.mxu0 0.0
    %344 = vmatprep.subr.mxu0 0.0
    %345 = vmatpush2.msra.mxu0 0.0
    %346 = vmatprep.subr.mxu0 0.0
    %347 = vmatpush2.msra.mxu0 0.0
    %348 = vmatprep.subr.mxu0 0.0
    %349 = vmatpush2.msra.mxu0 0.0
    %350 = vmatprep.subr.mxu0 0.0
    %351 = vmatpush2.msra.mxu0 0.0
    %352 = vmatprep.subr.mxu0 0.0
    %353 = vmatpush2.msra.mxu0 0.0
    %354 = vmatprep.subr.mxu0 0.0
    %355 = vmatpush2.msra.mxu0 0.0
    %356 = vmatprep.subr.mxu0 0.0
    %357 = vmatpush2.msra.mxu0 0.0
    %358 = vmatprep.subr.mxu0 0.0
    %359 = vmatpush2.msra.mxu0 0.0
    %360 = vmatprep.subr.mxu0 0.0
    %361 = vmatpush2.msra.mxu0 0.0
    %362 = vmatprep.subr.mxu0 0.0
    %363 = vmatpush2.msra.mxu0 0.0
    %364 = vmatprep.mubr.f32.mxu0 0.0
    %365 = vmatmul.mubr.f32.gmra.mxu0 %v278
    %v366 = vpop.f32.mrf.mxu0
    %v367 = vadd.f32 0.0, %v366
    %v368 = vpop.f32.mrf.mxu0
    %369 = vdwg.mxu0
    %v370 = vadd.f32 %v283, %v367
    %v371 = vtanh.pop %v370
    %v372 = vld [vmem:[#allocation11] sm:$0xff]
    %v373 = vld [vmem:[#allocation11 + $0x8] sm:$0xff]
    %v374 = vld [vmem:[#allocation11 + $0x10] sm:$0xff]
    %v375 = vld [vmem:[#allocation11 + $0x18] sm:$0xff]
    %v376 = vld [vmem:[#allocation11 + $0x20] sm:$0xff]
    %v377 = vld [vmem:[#allocation11 + $0x28] sm:$0xff]
    %v378 = vld [vmem:[#allocation11 + $0x30] sm:$0xff]
    %v379 = vld [vmem:[#allocation11 + $0x38] sm:$0xff]
    %v380 = vld [vmem:[#allocation11 + $0x40] sm:$0xff]
    %v381 = vld [vmem:[#allocation11 + $0x48] sm:$0xff]
    %v382 = vld [vmem:[#allocation11 + $0x50] sm:$0xff]
    %v383 = vld [vmem:[#allocation11 + $0x58] sm:$0xff]
    %v384 = vld [vmem:[#allocation11 + $0x60] sm:$0xff]
    %v385 = vld [vmem:[#allocation11 + $0x68] sm:$0xff]
    %v386 = vld [vmem:[#allocation11 + $0x70] sm:$0xff]
    %v387 = vld [vmem:[#allocation11 + $0x78] sm:$0xff]
    %v389 = vlaneseq
    %v390 = vshrl.u32 %v389, 7
    %v391 = vsub.s32 0, %v390
    %v392 = vrot.slane %v281, %v391
    %394 = vmatprep.subr.mxu0 0.0
    %395 = vmatpush1.msra.mxu0 %v387
    %396 = vmatprep.subr.mxu0 0.0
    %397 = vmatpush1.msra.mxu0 %v386
    %398 = vmatprep.subr.mxu0 0.0
    %399 = vmatpush1.msra.mxu0 %v385
    %400 = vmatprep.subr.mxu0 0.0
    %401 = vmatpush1.msra.mxu0 %v384
    %402 = vmatprep.subr.mxu0 0.0
    %403 = vmatpush1.msra.mxu0 %v383
    %404 = vmatprep.subr.mxu0 0.0
    %405 = vmatpush1.msra.mxu0 %v382
    %406 = vmatprep.subr.mxu0 0.0
    %407 = vmatpush1.msra.mxu0 %v381
    %408 = vmatprep.subr.mxu0 0.0
    %409 = vmatpush1.msra.mxu0 %v380
    %410 = vmatprep.subr.mxu0 0.0
    %411 = vmatpush1.msra.mxu0 %v379
    %412 = vmatprep.subr.mxu0 0.0
    %413 = vmatpush1.msra.mxu0 %v378
    %414 = vmatprep.subr.mxu0 0.0
    %415 = vmatpush1.msra.mxu0 %v377
    %416 = vmatprep.subr.mxu0 0.0
    %417 = vmatpush1.msra.mxu0 %v376
    %418 = vmatprep.subr.mxu0 0.0
    %419 = vmatpush1.msra.mxu0 %v375
    %420 = vmatprep.subr.mxu0 0.0
    %421 = vmatpush1.msra.mxu0 %v374
    %422 = vmatprep.subr.mxu0 0.0
    %423 = vmatpush1.msra.mxu0 %v373
    %424 = vmatprep.subr.mxu0 0.0
    %425 = vmatpush1.msra.mxu0 %v372
    %426 = vmatprep.subr.mxu0 0.0
    %427 = vmatpush2.msra.mxu0 0.0
    %428 = vmatprep.subr.mxu0 0.0
    %429 = vmatpush2.msra.mxu0 0.0
    %430 = vmatprep.subr.mxu0 0.0
    %431 = vmatpush2.msra.mxu0 0.0
    %432 = vmatprep.subr.mxu0 0.0
    %433 = vmatpush2.msra.mxu0 0.0
    %434 = vmatprep.subr.mxu0 0.0
    %435 = vmatpush2.msra.mxu0 0.0
    %436 = vmatprep.subr.mxu0 0.0
    %437 = vmatpush2.msra.mxu0 0.0
    %438 = vmatprep.subr.mxu0 0.0
    %439 = vmatpush2.msra.mxu0 0.0
    %440 = vmatprep.subr.mxu0 0.0
    %441 = vmatpush2.msra.mxu0 0.0
    %442 = vmatprep.subr.mxu0 0.0
    %443 = vmatpush2.msra.mxu0 0.0
    %444 = vmatprep.subr.mxu0 0.0
    %445 = vmatpush2.msra.mxu0 0.0
    %446 = vmatprep.subr.mxu0 0.0
    %447 = vmatpush2.msra.mxu0 0.0
    %448 = vmatprep.subr.mxu0 0.0
    %449 = vmatpush2.msra.mxu0 0.0
    %450 = vmatprep.subr.mxu0 0.0
    %451 = vmatpush2.msra.mxu0 0.0
    %452 = vmatprep.subr.mxu0 0.0
    %453 = vmatpush2.msra.mxu0 0.0
    %454 = vmatprep.subr.mxu0 0.0
    %455 = vmatpush2.msra.mxu0 0.0
    %456 = vmatprep.subr.mxu0 0.0
    %457 = vmatpush2.msra.mxu0 0.0
    %458 = vmatprep.mubr.f32.mxu0 0.0
    %459 = vmatmul.mubr.f32.gmra.mxu0 %v371
    %v460 = vpop.f32.mrf.mxu0
    %v461 = vadd.f32 %v392, %v460
    %v462 = vpop.f32.mrf.mxu0
    %463 = vdwg.mxu0
    %v464 = vld [vmem:[#allocation12] sm:$0xff]
    %v465 = vld [vmem:[#allocation12 + $0x8] sm:$0xff]
    %v466 = vld [vmem:[#allocation12 + $0x10] sm:$0xff]
    %v467 = vld [vmem:[#allocation12 + $0x18] sm:$0xff]
    %v468 = vld [vmem:[#allocation12 + $0x20] sm:$0xff]
    %v469 = vld [vmem:[#allocation12 + $0x28] sm:$0xff]
    %v470 = vld [vmem:[#allocation12 + $0x30] sm:$0xff]
    %v471 = vld [vmem:[#allocation12 + $0x38] sm:$0xff]
    %v472 = vld [vmem:[#allocation12 + $0x40] sm:$0xff]
    %v473 = vld [vmem:[#allocation12 + $0x48] sm:$0xff]
    %v474 = vld [vmem:[#allocation12 + $0x50] sm:$0xff]
    %v475 = vld [vmem:[#allocation12 + $0x58] sm:$0xff]
    %v476 = vld [vmem:[#allocation12 + $0x60] sm:$0xff]
    %v477 = vld [vmem:[#allocation12 + $0x68] sm:$0xff]
    %v478 = vld [vmem:[#allocation12 + $0x70] sm:$0xff]
    %v479 = vld [vmem:[#allocation12 + $0x78] sm:$0xff]
    %480 = vmatprep.subr.mxu0 0.0
    %481 = vmatpush1.msra.mxu0 %v479
    %482 = vmatprep.subr.mxu0 0.0
    %483 = vmatpush1.msra.mxu0 %v478
    %484 = vmatprep.subr.mxu0 0.0
    %485 = vmatpush1.msra.mxu0 %v477
    %486 = vmatprep.subr.mxu0 0.0
    %487 = vmatpush1.msra.mxu0 %v476
    %488 = vmatprep.subr.mxu0 0.0
    %489 = vmatpush1.msra.mxu0 %v475
    %490 = vmatprep.subr.mxu0 0.0
    %491 = vmatpush1.msra.mxu0 %v474
    %492 = vmatprep.subr.mxu0 0.0
    %493 = vmatpush1.msra.mxu0 %v473
    %494 = vmatprep.subr.mxu0 0.0
    %495 = vmatpush1.msra.mxu0 %v472
    %496 = vmatprep.subr.mxu0 0.0
    %497 = vmatpush1.msra.mxu0 %v471
    %498 = vmatprep.subr.mxu0 0.0
    %499 = vmatpush1.msra.mxu0 %v470
    %500 = vmatprep.subr.mxu0 0.0
    %501 = vmatpush1.msra.mxu0 %v469
    %502 = vmatprep.subr.mxu0 0.0
    %503 = vmatpush1.msra.mxu0 %v468
    %504 = vmatprep.subr.mxu0 0.0
    %505 = vmatpush1.msra.mxu0 %v467
    %506 = vmatprep.subr.mxu0 0.0
    %507 = vmatpush1.msra.mxu0 %v466
    %508 = vmatprep.subr.mxu0 0.0
    %509 = vmatpush1.msra.mxu0 %v465
    %510 = vmatprep.subr.mxu0 0.0
    %511 = vmatpush1.msra.mxu0 %v464
    %512 = vmatprep.subr.mxu0 0.0
    %513 = vmatpush2.msra.mxu0 0.0
    %514 = vmatprep.subr.mxu0 0.0
    %515 = vmatpush2.msra.mxu0 0.0
    %516 = vmatprep.subr.mxu0 0.0
    %517 = vmatpush2.msra.mxu0 0.0
    %518 = vmatprep.subr.mxu0 0.0
    %519 = vmatpush2.msra.mxu0 0.0
    %520 = vmatprep.subr.mxu0 0.0
    %521 = vmatpush2.msra.mxu0 0.0
    %522 = vmatprep.subr.mxu0 0.0
    %523 = vmatpush2.msra.mxu0 0.0
    %524 = vmatprep.subr.mxu0 0.0
    %525 = vmatpush2.msra.mxu0 0.0
    %526 = vmatprep.subr.mxu0 0.0
    %527 = vmatpush2.msra.mxu0 0.0
    %528 = vmatprep.subr.mxu0 0.0
    %529 = vmatpush2.msra.mxu0 0.0
    %530 = vmatprep.subr.mxu0 0.0
    %531 = vmatpush2.msra.mxu0 0.0
    %532 = vmatprep.subr.mxu0 0.0
    %533 = vmatpush2.msra.mxu0 0.0
    %534 = vmatprep.subr.mxu0 0.0
    %535 = vmatpush2.msra.mxu0 0.0
    %536 = vmatprep.subr.mxu0 0.0
    %537 = vmatpush2.msra.mxu0 0.0
    %538 = vmatprep.subr.mxu0 0.0
    %539 = vmatpush2.msra.mxu0 0.0
    %540 = vmatprep.subr.mxu0 0.0
    %541 = vmatpush2.msra.mxu0 0.0
    %542 = vmatprep.subr.mxu0 0.0
    %543 = vmatpush2.msra.mxu0 0.0
    %544 = vmatprep.mubr.f32.mxu0 0.0
    %545 = vmatmul.mubr.f32.gmra.mxu0 %v280
    %v546 = vpop.f32.mrf.mxu0
    %v547 = vadd.f32 0.0, %v546
    %v548 = vpop.f32.mrf.mxu0
    %549 = vdwg.mxu0
    %v550 = vadd.f32 %v461, %v547
    %v551 = vtanh.pop %v550
    %v552 = vld [vmem:[#allocation14] sm:$0xff]
    %v553 = vld [vmem:[#allocation14 + $0x8] sm:$0xff]
    %v554 = vld [vmem:[#allocation14 + $0x10] sm:$0xff]
    %v555 = vld [vmem:[#allocation14 + $0x18] sm:$0xff]
    %v556 = vld [vmem:[#allocation14 + $0x20] sm:$0xff]
    %v557 = vld [vmem:[#allocation14 + $0x28] sm:$0xff]
    %v558 = vld [vmem:[#allocation14 + $0x30] sm:$0xff]
    %v559 = vld [vmem:[#allocation14 + $0x38] sm:$0xff]
    %v560 = vld [vmem:[#allocation14 + $0x40] sm:$0xff]
    %v561 = vld [vmem:[#allocation14 + $0x48] sm:$0xff]
    %v562 = vld [vmem:[#allocation14 + $0x50] sm:$0xff]
    %v563 = vld [vmem:[#allocation14 + $0x58] sm:$0xff]
    %v564 = vld [vmem:[#allocation14 + $0x60] sm:$0xff]
    %v565 = vld [vmem:[#allocation14 + $0x68] sm:$0xff]
    %v566 = vld [vmem:[#allocation14 + $0x70] sm:$0xff]
    %v567 = vld [vmem:[#allocation14 + $0x78] sm:$0xff]
    %v569 = vlaneseq
    %v570 = vshrl.u32 %v569, 7
    %v571 = vsub.s32 0, %v570
    %v572 = vrot.slane %v282, %v571
    %574 = vmatprep.subr.mxu0 0.0
    %575 = vmatpush1.msra.mxu0 %v567
    %576 = vmatprep.subr.mxu0 0.0
    %577 = vmatpush1.msra.mxu0 %v566
    %578 = vmatprep.subr.mxu0 0.0
    %579 = vmatpush1.msra.mxu0 %v565
    %580 = vmatprep.subr.mxu0 0.0
    %581 = vmatpush1.msra.mxu0 %v564
    %582 = vmatprep.subr.mxu0 0.0
    %583 = vmatpush1.msra.mxu0 %v563
    %584 = vmatprep.subr.mxu0 0.0
    %585 = vmatpush1.msra.mxu0 %v562
    %586 = vmatprep.subr.mxu0 0.0
    %587 = vmatpush1.msra.mxu0 %v561
    %588 = vmatprep.subr.mxu0 0.0
    %589 = vmatpush1.msra.mxu0 %v560
    %590 = vmatprep.subr.mxu0 0.0
    %591 = vmatpush1.msra.mxu0 %v559
    %592 = vmatprep.subr.mxu0 0.0
    %593 = vmatpush1.msra.mxu0 %v558
    %594 = vmatprep.subr.mxu0 0.0
    %595 = vmatpush1.msra.mxu0 %v557
    %596 = vmatprep.subr.mxu0 0.0
    %597 = vmatpush1.msra.mxu0 %v556
    %598 = vmatprep.subr.mxu0 0.0
    %599 = vmatpush1.msra.mxu0 %v555
    %600 = vmatprep.subr.mxu0 0.0
    %601 = vmatpush1.msra.mxu0 %v554
    %602 = vmatprep.subr.mxu0 0.0
    %603 = vmatpush1.msra.mxu0 %v553
    %604 = vmatprep.subr.mxu0 0.0
    %605 = vmatpush1.msra.mxu0 %v552
    %606 = vmatprep.subr.mxu0 0.0
    %607 = vmatpush2.msra.mxu0 0.0
    %608 = vmatprep.subr.mxu0 0.0
    %609 = vmatpush2.msra.mxu0 0.0
    %610 = vmatprep.subr.mxu0 0.0
    %611 = vmatpush2.msra.mxu0 0.0
    %612 = vmatprep.subr.mxu0 0.0
    %613 = vmatpush2.msra.mxu0 0.0
    %614 = vmatprep.subr.mxu0 0.0
    %615 = vmatpush2.msra.mxu0 0.0
    %616 = vmatprep.subr.mxu0 0.0
    %617 = vmatpush2.msra.mxu0 0.0
    %618 = vmatprep.subr.mxu0 0.0
    %619 = vmatpush2.msra.mxu0 0.0
    %620 = vmatprep.subr.mxu0 0.0
    %621 = vmatpush2.msra.mxu0 0.0
    %622 = vmatprep.subr.mxu0 0.0
    %623 = vmatpush2.msra.mxu0 0.0
    %624 = vmatprep.subr.mxu0 0.0
    %625 = vmatpush2.msra.mxu0 0.0
    %626 = vmatprep.subr.mxu0 0.0
    %627 = vmatpush2.msra.mxu0 0.0
    %628 = vmatprep.subr.mxu0 0.0
    %629 = vmatpush2.msra.mxu0 0.0
    %630 = vmatprep.subr.mxu0 0.0
    %631 = vmatpush2.msra.mxu0 0.0
    %632 = vmatprep.subr.mxu0 0.0
    %633 = vmatpush2.msra.mxu0 0.0
    %634 = vmatprep.subr.mxu0 0.0
    %635 = vmatpush2.msra.mxu0 0.0
    %636 = vmatprep.subr.mxu0 0.0
    %637 = vmatpush2.msra.mxu0 0.0
    %638 = vmatprep.mubr.f32.mxu0 0.0
    %639 = vmatmul.mubr.f32.gmra.mxu0 %v551
    %v640 = vpop.f32.mrf.mxu0
    %v641 = vadd.f32 %v572, %v640
    %v642 = vpop.f32.mrf.mxu0
    %643 = vdwg.mxu0
    %644 = vst [vmem:[#allocation15] sm:$0xff] %v641
    %v645 = vld [vmem:[#allocation2 + $0x8] sm:$0xff]
    %v646 = vld [vmem:[#allocation9] sm:$0xff]
    %v647 = vld [vmem:[#allocation9 + $0x8] sm:$0xff]
    %v648 = vld [vmem:[#allocation9 + $0x10] sm:$0xff]
    %v649 = vld [vmem:[#allocation9 + $0x18] sm:$0xff]
    %v650 = vld [vmem:[#allocation9 + $0x20] sm:$0xff]
    %v651 = vld [vmem:[#allocation9 + $0x28] sm:$0xff]
    %v652 = vld [vmem:[#allocation9 + $0x30] sm:$0xff]
    %v653 = vld [vmem:[#allocation9 + $0x38] sm:$0xff]
    %v654 = vld [vmem:[#allocation9 + $0x40] sm:$0xff]
    %v655 = vld [vmem:[#allocation9 + $0x48] sm:$0xff]
    %v656 = vld [vmem:[#allocation9 + $0x50] sm:$0xff]
    %v657 = vld [vmem:[#allocation9 + $0x58] sm:$0xff]
    %v658 = vld [vmem:[#allocation9 + $0x60] sm:$0xff]
    %v659 = vld [vmem:[#allocation9 + $0x68] sm:$0xff]
    %v660 = vld [vmem:[#allocation9 + $0x70] sm:$0xff]
    %v661 = vld [vmem:[#allocation9 + $0x78] sm:$0xff]
    %662 = vmatprep.subr.mxu0 0.0
    %663 = vmatpush1.msra.mxu0 %v661
    %664 = vmatprep.subr.mxu0 0.0
    %665 = vmatpush1.msra.mxu0 %v660
    %666 = vmatprep.subr.mxu0 0.0
    %667 = vmatpush1.msra.mxu0 %v659
    %668 = vmatprep.subr.mxu0 0.0
    %669 = vmatpush1.msra.mxu0 %v658
    %670 = vmatprep.subr.mxu0 0.0
    %671 = vmatpush1.msra.mxu0 %v657
    %672 = vmatprep.subr.mxu0 0.0
    %673 = vmatpush1.msra.mxu0 %v656
    %674 = vmatprep.subr.mxu0 0.0
    %675 = vmatpush1.msra.mxu0 %v655
    %676 = vmatprep.subr.mxu0 0.0
    %677 = vmatpush1.msra.mxu0 %v654
    %678 = vmatprep.subr.mxu0 0.0
    %679 = vmatpush1.msra.mxu0 %v653
    %680 = vmatprep.subr.mxu0 0.0
    %681 = vmatpush1.msra.mxu0 %v652
    %682 = vmatprep.subr.mxu0 0.0
    %683 = vmatpush1.msra.mxu0 %v651
    %684 = vmatprep.subr.mxu0 0.0
    %685 = vmatpush1.msra.mxu0 %v650
    %686 = vmatprep.subr.mxu0 0.0
    %687 = vmatpush1.msra.mxu0 %v649
    %688 = vmatprep.subr.mxu0 0.0
    %689 = vmatpush1.msra.mxu0 %v648
    %690 = vmatprep.subr.mxu0 0.0
    %691 = vmatpush1.msra.mxu0 %v647
    %692 = vmatprep.subr.mxu0 0.0
    %693 = vmatpush1.msra.mxu0 %v646
    %694 = vmatprep.subr.mxu0 0.0
    %695 = vmatpush2.msra.mxu0 0.0
    %696 = vmatprep.subr.mxu0 0.0
    %697 = vmatpush2.msra.mxu0 0.0
    %698 = vmatprep.subr.mxu0 0.0
    %699 = vmatpush2.msra.mxu0 0.0
    %700 = vmatprep.subr.mxu0 0.0
    %701 = vmatpush2.msra.mxu0 0.0
    %702 = vmatprep.subr.mxu0 0.0
    %703 = vmatpush2.msra.mxu0 0.0
    %704 = vmatprep.subr.mxu0 0.0
    %705 = vmatpush2.msra.mxu0 0.0
    %706 = vmatprep.subr.mxu0 0.0
    %707 = vmatpush2.msra.mxu0 0.0
    %708 = vmatprep.subr.mxu0 0.0
    %709 = vmatpush2.msra.mxu0 0.0
    %710 = vmatprep.subr.mxu0 0.0
    %711 = vmatpush2.msra.mxu0 0.0
    %712 = vmatprep.subr.mxu0 0.0
    %713 = vmatpush2.msra.mxu0 0.0
    %714 = vmatprep.subr.mxu0 0.0
    %715 = vmatpush2.msra.mxu0 0.0
    %716 = vmatprep.subr.mxu0 0.0
    %717 = vmatpush2.msra.mxu0 0.0
    %718 = vmatprep.subr.mxu0 0.0
    %719 = vmatpush2.msra.mxu0 0.0
    %720 = vmatprep.subr.mxu0 0.0
    %721 = vmatpush2.msra.mxu0 0.0
    %722 = vmatprep.subr.mxu0 0.0
    %723 = vmatpush2.msra.mxu0 0.0
    %724 = vmatprep.subr.mxu0 0.0
    %725 = vmatpush2.msra.mxu0 0.0
    %726 = vmatprep.mubr.f32.mxu0 0.0
    %727 = vmatmul.mubr.f32.gmra.mxu0 %v371
    %v728 = vpop.f32.mrf.mxu0
    %v729 = vadd.f32 0.0, %v728
    %v730 = vpop.f32.mrf.mxu0
    %731 = vdwg.mxu0
    %v732 = vadd.f32 %v645, %v729
    %v733 = vtanh.pop %v732
    %v734 = vld [vmem:[#allocation11] sm:$0xff]
    %v735 = vld [vmem:[#allocation11 + $0x8] sm:$0xff]
    %v736 = vld [vmem:[#allocation11 + $0x10] sm:$0xff]
    %v737 = vld [vmem:[#allocation11 + $0x18] sm:$0xff]
    %v738 = vld [vmem:[#allocation11 + $0x20] sm:$0xff]
    %v739 = vld [vmem:[#allocation11 + $0x28] sm:$0xff]
    %v740 = vld [vmem:[#allocation11 + $0x30] sm:$0xff]
    %v741 = vld [vmem:[#allocation11 + $0x38] sm:$0xff]
    %v742 = vld [vmem:[#allocation11 + $0x40] sm:$0xff]
    %v743 = vld [vmem:[#allocation11 + $0x48] sm:$0xff]
    %v744 = vld [vmem:[#allocation11 + $0x50] sm:$0xff]
    %v745 = vld [vmem:[#allocation11 + $0x58] sm:$0xff]
    %v746 = vld [vmem:[#allocation11 + $0x60] sm:$0xff]
    %v747 = vld [vmem:[#allocation11 + $0x68] sm:$0xff]
    %v748 = vld [vmem:[#allocation11 + $0x70] sm:$0xff]
    %v749 = vld [vmem:[#allocation11 + $0x78] sm:$0xff]
    %750 = vmatprep.subr.mxu0 0.0
    %751 = vmatpush1.msra.mxu0 %v749
    %752 = vmatprep.subr.mxu0 0.0
    %753 = vmatpush1.msra.mxu0 %v748
    %754 = vmatprep.subr.mxu0 0.0
    %755 = vmatpush1.msra.mxu0 %v747
    %756 = vmatprep.subr.mxu0 0.0
    %757 = vmatpush1.msra.mxu0 %v746
    %758 = vmatprep.subr.mxu0 0.0
    %759 = vmatpush1.msra.mxu0 %v745
    %760 = vmatprep.subr.mxu0 0.0
    %761 = vmatpush1.msra.mxu0 %v744
    %762 = vmatprep.subr.mxu0 0.0
    %763 = vmatpush1.msra.mxu0 %v743
    %764 = vmatprep.subr.mxu0 0.0
    %765 = vmatpush1.msra.mxu0 %v742
    %766 = vmatprep.subr.mxu0 0.0
    %767 = vmatpush1.msra.mxu0 %v741
    %768 = vmatprep.subr.mxu0 0.0
    %769 = vmatpush1.msra.mxu0 %v740
    %770 = vmatprep.subr.mxu0 0.0
    %771 = vmatpush1.msra.mxu0 %v739
    %772 = vmatprep.subr.mxu0 0.0
    %773 = vmatpush1.msra.mxu0 %v738
    %774 = vmatprep.subr.mxu0 0.0
    %775 = vmatpush1.msra.mxu0 %v737
    %776 = vmatprep.subr.mxu0 0.0
    %777 = vmatpush1.msra.mxu0 %v736
    %778 = vmatprep.subr.mxu0 0.0
    %779 = vmatpush1.msra.mxu0 %v735
    %780 = vmatprep.subr.mxu0 0.0
    %781 = vmatpush1.msra.mxu0 %v734
    %782 = vmatprep.subr.mxu0 0.0
    %783 = vmatpush2.msra.mxu0 0.0
    %784 = vmatprep.subr.mxu0 0.0
    %785 = vmatpush2.msra.mxu0 0.0
    %786 = vmatprep.subr.mxu0 0.0
    %787 = vmatpush2.msra.mxu0 0.0
    %788 = vmatprep.subr.mxu0 0.0
    %789 = vmatpush2.msra.mxu0 0.0
    %790 = vmatprep.subr.mxu0 0.0
    %791 = vmatpush2.msra.mxu0 0.0
    %792 = vmatprep.subr.mxu0 0.0
    %793 = vmatpush2.msra.mxu0 0.0
    %794 = vmatprep.subr.mxu0 0.0
    %795 = vmatpush2.msra.mxu0 0.0
    %796 = vmatprep.subr.mxu0 0.0
    %797 = vmatpush2.msra.mxu0 0.0
    %798 = vmatprep.subr.mxu0 0.0
    %799 = vmatpush2.msra.mxu0 0.0
    %800 = vmatprep.subr.mxu0 0.0
    %801 = vmatpush2.msra.mxu0 0.0
    %802 = vmatprep.subr.mxu0 0.0
    %803 = vmatpush2.msra.mxu0 0.0
    %804 = vmatprep.subr.mxu0 0.0
    %805 = vmatpush2.msra.mxu0 0.0
    %806 = vmatprep.subr.mxu0 0.0
    %807 = vmatpush2.msra.mxu0 0.0
    %808 = vmatprep.subr.mxu0 0.0
    %809 = vmatpush2.msra.mxu0 0.0
    %810 = vmatprep.subr.mxu0 0.0
    %811 = vmatpush2.msra.mxu0 0.0
    %812 = vmatprep.subr.mxu0 0.0
    %813 = vmatpush2.msra.mxu0 0.0
    %814 = vmatprep.mubr.f32.mxu0 0.0
    %815 = vmatmul.mubr.f32.gmra.mxu0 %v733
    %v816 = vpop.f32.mrf.mxu0
    %v817 = vadd.f32 %v392, %v816
    %v818 = vpop.f32.mrf.mxu0
    %819 = vdwg.mxu0
    %v820 = vld [vmem:[#allocation12] sm:$0xff]
    %v821 = vld [vmem:[#allocation12 + $0x8] sm:$0xff]
    %v822 = vld [vmem:[#allocation12 + $0x10] sm:$0xff]
    %v823 = vld [vmem:[#allocation12 + $0x18] sm:$0xff]
    %v824 = vld [vmem:[#allocation12 + $0x20] sm:$0xff]
    %v825 = vld [vmem:[#allocation12 + $0x28] sm:$0xff]
    %v826 = vld [vmem:[#allocation12 + $0x30] sm:$0xff]
    %v827 = vld [vmem:[#allocation12 + $0x38] sm:$0xff]
    %v828 = vld [vmem:[#allocation12 + $0x40] sm:$0xff]
    %v829 = vld [vmem:[#allocation12 + $0x48] sm:$0xff]
    %v830 = vld [vmem:[#allocation12 + $0x50] sm:$0xff]
    %v831 = vld [vmem:[#allocation12 + $0x58] sm:$0xff]
    %v832 = vld [vmem:[#allocation12 + $0x60] sm:$0xff]
    %v833 = vld [vmem:[#allocation12 + $0x68] sm:$0xff]
    %v834 = vld [vmem:[#allocation12 + $0x70] sm:$0xff]
    %v835 = vld [vmem:[#allocation12 + $0x78] sm:$0xff]
    %836 = vmatprep.subr.mxu0 0.0
    %837 = vmatpush1.msra.mxu0 %v835
    %838 = vmatprep.subr.mxu0 0.0
    %839 = vmatpush1.msra.mxu0 %v834
    %840 = vmatprep.subr.mxu0 0.0
    %841 = vmatpush1.msra.mxu0 %v833
    %842 = vmatprep.subr.mxu0 0.0
    %843 = vmatpush1.msra.mxu0 %v832
    %844 = vmatprep.subr.mxu0 0.0
    %845 = vmatpush1.msra.mxu0 %v831
    %846 = vmatprep.subr.mxu0 0.0
    %847 = vmatpush1.msra.mxu0 %v830
    %848 = vmatprep.subr.mxu0 0.0
    %849 = vmatpush1.msra.mxu0 %v829
    %850 = vmatprep.subr.mxu0 0.0
    %851 = vmatpush1.msra.mxu0 %v828
    %852 = vmatprep.subr.mxu0 0.0
    %853 = vmatpush1.msra.mxu0 %v827
    %854 = vmatprep.subr.mxu0 0.0
    %855 = vmatpush1.msra.mxu0 %v826
    %856 = vmatprep.subr.mxu0 0.0
    %857 = vmatpush1.msra.mxu0 %v825
    %858 = vmatprep.subr.mxu0 0.0
    %859 = vmatpush1.msra.mxu0 %v824
    %860 = vmatprep.subr.mxu0 0.0
    %861 = vmatpush1.msra.mxu0 %v823
    %862 = vmatprep.subr.mxu0 0.0
    %863 = vmatpush1.msra.mxu0 %v822
    %864 = vmatprep.subr.mxu0 0.0
    %865 = vmatpush1.msra.mxu0 %v821
    %866 = vmatprep.subr.mxu0 0.0
    %867 = vmatpush1.msra.mxu0 %v820
    %868 = vmatprep.subr.mxu0 0.0
    %869 = vmatpush2.msra.mxu0 0.0
    %870 = vmatprep.subr.mxu0 0.0
    %871 = vmatpush2.msra.mxu0 0.0
    %872 = vmatprep.subr.mxu0 0.0
    %873 = vmatpush2.msra.mxu0 0.0
    %874 = vmatprep.subr.mxu0 0.0
    %875 = vmatpush2.msra.mxu0 0.0
    %876 = vmatprep.subr.mxu0 0.0
    %877 = vmatpush2.msra.mxu0 0.0
    %878 = vmatprep.subr.mxu0 0.0
    %879 = vmatpush2.msra.mxu0 0.0
    %880 = vmatprep.subr.mxu0 0.0
    %881 = vmatpush2.msra.mxu0 0.0
    %882 = vmatprep.subr.mxu0 0.0
    %883 = vmatpush2.msra.mxu0 0.0
    %884 = vmatprep.subr.mxu0 0.0
    %885 = vmatpush2.msra.mxu0 0.0
    %886 = vmatprep.subr.mxu0 0.0
    %887 = vmatpush2.msra.mxu0 0.0
    %888 = vmatprep.subr.mxu0 0.0
    %889 = vmatpush2.msra.mxu0 0.0
    %890 = vmatprep.subr.mxu0 0.0
    %891 = vmatpush2.msra.mxu0 0.0
    %892 = vmatprep.subr.mxu0 0.0
    %893 = vmatpush2.msra.mxu0 0.0
    %894 = vmatprep.subr.mxu0 0.0
    %895 = vmatpush2.msra.mxu0 0.0
    %896 = vmatprep.subr.mxu0 0.0
    %897 = vmatpush2.msra.mxu0 0.0
    %898 = vmatprep.subr.mxu0 0.0
    %899 = vmatpush2.msra.mxu0 0.0
    %900 = vmatprep.mubr.f32.mxu0 0.0
    %901 = vmatmul.mubr.f32.gmra.mxu0 %v551
    %v902 = vpop.f32.mrf.mxu0
    %v903 = vadd.f32 0.0, %v902
    %v904 = vpop.f32.mrf.mxu0
    %905 = vdwg.mxu0
    %v906 = vadd.f32 %v817, %v903
    %v907 = vtanh.pop %v906
    %v908 = vld [vmem:[#allocation14] sm:$0xff]
    %v909 = vld [vmem:[#allocation14 + $0x8] sm:$0xff]
    %v910 = vld [vmem:[#allocation14 + $0x10] sm:$0xff]
    %v911 = vld [vmem:[#allocation14 + $0x18] sm:$0xff]
    %v912 = vld [vmem:[#allocation14 + $0x20] sm:$0xff]
    %v913 = vld [vmem:[#allocation14 + $0x28] sm:$0xff]
    %v914 = vld [vmem:[#allocation14 + $0x30] sm:$0xff]
    %v915 = vld [vmem:[#allocation14 + $0x38] sm:$0xff]
    %v916 = vld [vmem:[#allocation14 + $0x40] sm:$0xff]
    %v917 = vld [vmem:[#allocation14 + $0x48] sm:$0xff]
    %v918 = vld [vmem:[#allocation14 + $0x50] sm:$0xff]
    %v919 = vld [vmem:[#allocation14 + $0x58] sm:$0xff]
    %v920 = vld [vmem:[#allocation14 + $0x60] sm:$0xff]
    %v921 = vld [vmem:[#allocation14 + $0x68] sm:$0xff]
    %v922 = vld [vmem:[#allocation14 + $0x70] sm:$0xff]
    %v923 = vld [vmem:[#allocation14 + $0x78] sm:$0xff]
    %924 = vmatprep.subr.mxu0 0.0
    %925 = vmatpush1.msra.mxu0 %v923
    %926 = vmatprep.subr.mxu0 0.0
    %927 = vmatpush1.msra.mxu0 %v922
    %928 = vmatprep.subr.mxu0 0.0
    %929 = vmatpush1.msra.mxu0 %v921
    %930 = vmatprep.subr.mxu0 0.0
    %931 = vmatpush1.msra.mxu0 %v920
    %932 = vmatprep.subr.mxu0 0.0
    %933 = vmatpush1.msra.mxu0 %v919
    %934 = vmatprep.subr.mxu0 0.0
    %935 = vmatpush1.msra.mxu0 %v918
    %936 = vmatprep.subr.mxu0 0.0
    %937 = vmatpush1.msra.mxu0 %v917
    %938 = vmatprep.subr.mxu0 0.0
    %939 = vmatpush1.msra.mxu0 %v916
    %940 = vmatprep.subr.mxu0 0.0
    %941 = vmatpush1.msra.mxu0 %v915
    %942 = vmatprep.subr.mxu0 0.0
    %943 = vmatpush1.msra.mxu0 %v914
    %944 = vmatprep.subr.mxu0 0.0
    %945 = vmatpush1.msra.mxu0 %v913
    %946 = vmatprep.subr.mxu0 0.0
    %947 = vmatpush1.msra.mxu0 %v912
    %948 = vmatprep.subr.mxu0 0.0
    %949 = vmatpush1.msra.mxu0 %v911
    %950 = vmatprep.subr.mxu0 0.0
    %951 = vmatpush1.msra.mxu0 %v910
    %952 = vmatprep.subr.mxu0 0.0
    %953 = vmatpush1.msra.mxu0 %v909
    %954 = vmatprep.subr.mxu0 0.0
    %955 = vmatpush1.msra.mxu0 %v908
    %956 = vmatprep.subr.mxu0 0.0
    %957 = vmatpush2.msra.mxu0 0.0
    %958 = vmatprep.subr.mxu0 0.0
    %959 = vmatpush2.msra.mxu0 0.0
    %960 = vmatprep.subr.mxu0 0.0
    %961 = vmatpush2.msra.mxu0 0.0
    %962 = vmatprep.subr.mxu0 0.0
    %963 = vmatpush2.msra.mxu0 0.0
    %964 = vmatprep.subr.mxu0 0.0
    %965 = vmatpush2.msra.mxu0 0.0
    %966 = vmatprep.subr.mxu0 0.0
    %967 = vmatpush2.msra.mxu0 0.0
    %968 = vmatprep.subr.mxu0 0.0
    %969 = vmatpush2.msra.mxu0 0.0
    %970 = vmatprep.subr.mxu0 0.0
    %971 = vmatpush2.msra.mxu0 0.0
    %972 = vmatprep.subr.mxu0 0.0
    %973 = vmatpush2.msra.mxu0 0.0
    %974 = vmatprep.subr.mxu0 0.0
    %975 = vmatpush2.msra.mxu0 0.0
    %976 = vmatprep.subr.mxu0 0.0
    %977 = vmatpush2.msra.mxu0 0.0
    %978 = vmatprep.subr.mxu0 0.0
    %979 = vmatpush2.msra.mxu0 0.0
    %980 = vmatprep.subr.mxu0 0.0
    %981 = vmatpush2.msra.mxu0 0.0
    %982 = vmatprep.subr.mxu0 0.0
    %983 = vmatpush2.msra.mxu0 0.0
    %984 = vmatprep.subr.mxu0 0.0
    %985 = vmatpush2.msra.mxu0 0.0
    %986 = vmatprep.subr.mxu0 0.0
    %987 = vmatpush2.msra.mxu0 0.0
    %988 = vmatprep.mubr.f32.mxu0 0.0
    %989 = vmatmul.mubr.f32.gmra.mxu0 %v907
    %v990 = vpop.f32.mrf.mxu0
    %v991 = vadd.f32 %v572, %v990
    %v992 = vpop.f32.mrf.mxu0
    %993 = vdwg.mxu0
    %994 = vst [vmem:[#allocation15 + $0x8] sm:$0xff] %v991
    %v995 = vld [vmem:[#allocation2 + $0x10] sm:$0xff]
    %v996 = vld [vmem:[#allocation9] sm:$0xff]
    %v997 = vld [vmem:[#allocation9 + $0x8] sm:$0xff]
    %v998 = vld [vmem:[#allocation9 + $0x10] sm:$0xff]
    %v999 = vld [vmem:[#allocation9 + $0x18] sm:$0xff]
    %v1000 = vld [vmem:[#allocation9 + $0x20] sm:$0xff]
    %v1001 = vld [vmem:[#allocation9 + $0x28] sm:$0xff]
    %v1002 = vld [vmem:[#allocation9 + $0x30] sm:$0xff]
    %v1003 = vld [vmem:[#allocation9 + $0x38] sm:$0xff]
    %v1004 = vld [vmem:[#allocation9 + $0x40] sm:$0xff]
    %v1005 = vld [vmem:[#allocation9 + $0x48] sm:$0xff]
    %v1006 = vld [vmem:[#allocation9 + $0x50] sm:$0xff]
    %v1007 = vld [vmem:[#allocation9 + $0x58] sm:$0xff]
    %v1008 = vld [vmem:[#allocation9 + $0x60] sm:$0xff]
    %v1009 = vld [vmem:[#allocation9 + $0x68] sm:$0xff]
    %v1010 = vld [vmem:[#allocation9 + $0x70] sm:$0xff]
    %v1011 = vld [vmem:[#allocation9 + $0x78] sm:$0xff]
    %1012 = vmatprep.subr.mxu0 0.0
    %1013 = vmatpush1.msra.mxu0 %v1011
    %1014 = vmatprep.subr.mxu0 0.0
    %1015 = vmatpush1.msra.mxu0 %v1010
    %1016 = vmatprep.subr.mxu0 0.0
    %1017 = vmatpush1.msra.mxu0 %v1009
    %1018 = vmatprep.subr.mxu0 0.0
    %1019 = vmatpush1.msra.mxu0 %v1008
    %1020 = vmatprep.subr.mxu0 0.0
    %1021 = vmatpush1.msra.mxu0 %v1007
    %1022 = vmatprep.subr.mxu0 0.0
    %1023 = vmatpush1.msra.mxu0 %v1006
    %1024 = vmatprep.subr.mxu0 0.0
    %1025 = vmatpush1.msra.mxu0 %v1005
    %1026 = vmatprep.subr.mxu0 0.0
    %1027 = vmatpush1.msra.mxu0 %v1004
    %1028 = vmatprep.subr.mxu0 0.0
    %1029 = vmatpush1.msra.mxu0 %v1003
    %1030 = vmatprep.subr.mxu0 0.0
    %1031 = vmatpush1.msra.mxu0 %v1002
    %1032 = vmatprep.subr.mxu0 0.0
    %1033 = vmatpush1.msra.mxu0 %v1001
    %1034 = vmatprep.subr.mxu0 0.0
    %1035 = vmatpush1.msra.mxu0 %v1000
    %1036 = vmatprep.subr.mxu0 0.0
    %1037 = vmatpush1.msra.mxu0 %v999
    %1038 = vmatprep.subr.mxu0 0.0
    %1039 = vmatpush1.msra.mxu0 %v998
    %1040 = vmatprep.subr.mxu0 0.0
    %1041 = vmatpush1.msra.mxu0 %v997
    %1042 = vmatprep.subr.mxu0 0.0
    %1043 = vmatpush1.msra.mxu0 %v996
    %1044 = vmatprep.subr.mxu0 0.0
    %1045 = vmatpush2.msra.mxu0 0.0
    %1046 = vmatprep.subr.mxu0 0.0
    %1047 = vmatpush2.msra.mxu0 0.0
    %1048 = vmatprep.subr.mxu0 0.0
    %1049 = vmatpush2.msra.mxu0 0.0
    %1050 = vmatprep.subr.mxu0 0.0
    %1051 = vmatpush2.msra.mxu0 0.0
    %1052 = vmatprep.subr.mxu0 0.0
    %1053 = vmatpush2.msra.mxu0 0.0
    %1054 = vmatprep.subr.mxu0 0.0
    %1055 = vmatpush2.msra.mxu0 0.0
    %1056 = vmatprep.subr.mxu0 0.0
    %1057 = vmatpush2.msra.mxu0 0.0
    %1058 = vmatprep.subr.mxu0 0.0
    %1059 = vmatpush2.msra.mxu0 0.0
    %1060 = vmatprep.subr.mxu0 0.0
    %1061 = vmatpush2.msra.mxu0 0.0
    %1062 = vmatprep.subr.mxu0 0.0
    %1063 = vmatpush2.msra.mxu0 0.0
    %1064 = vmatprep.subr.mxu0 0.0
    %1065 = vmatpush2.msra.mxu0 0.0
    %1066 = vmatprep.subr.mxu0 0.0
    %1067 = vmatpush2.msra.mxu0 0.0
    %1068 = vmatprep.subr.mxu0 0.0
    %1069 = vmatpush2.msra.mxu0 0.0
    %1070 = vmatprep.subr.mxu0 0.0
    %1071 = vmatpush2.msra.mxu0 0.0
    %1072 = vmatprep.subr.mxu0 0.0
    %1073 = vmatpush2.msra.mxu0 0.0
    %1074 = vmatprep.subr.mxu0 0.0
    %1075 = vmatpush2.msra.mxu0 0.0
    %1076 = vmatprep.mubr.f32.mxu0 0.0
    %1077 = vmatmul.mubr.f32.gmra.mxu0 %v733
    %v1078 = vpop.f32.mrf.mxu0
    %v1079 = vadd.f32 0.0, %v1078
    %v1080 = vpop.f32.mrf.mxu0
    %1081 = vdwg.mxu0
    %v1082 = vadd.f32 %v995, %v1079
    %v1083 = vtanh.pop %v1082
    %v1084 = vld [vmem:[#allocation11] sm:$0xff]
    %v1085 = vld [vmem:[#allocation11 + $0x8] sm:$0xff]
    %v1086 = vld [vmem:[#allocation11 + $0x10] sm:$0xff]
    %v1087 = vld [vmem:[#allocation11 + $0x18] sm:$0xff]
    %v1088 = vld [vmem:[#allocation11 + $0x20] sm:$0xff]
    %v1089 = vld [vmem:[#allocation11 + $0x28] sm:$0xff]
    %v1090 = vld [vmem:[#allocation11 + $0x30] sm:$0xff]
    %v1091 = vld [vmem:[#allocation11 + $0x38] sm:$0xff]
    %v1092 = vld [vmem:[#allocation11 + $0x40] sm:$0xff]
    %v1093 = vld [vmem:[#allocation11 + $0x48] sm:$0xff]
    %v1094 = vld [vmem:[#allocation11 + $0x50] sm:$0xff]
    %v1095 = vld [vmem:[#allocation11 + $0x58] sm:$0xff]
    %v1096 = vld [vmem:[#allocation11 + $0x60] sm:$0xff]
    %v1097 = vld [vmem:[#allocation11 + $0x68] sm:$0xff]
    %v1098 = vld [vmem:[#allocation11 + $0x70] sm:$0xff]
    %v1099 = vld [vmem:[#allocation11 + $0x78] sm:$0xff]
    %1100 = vmatprep.subr.mxu0 0.0
    %1101 = vmatpush1.msra.mxu0 %v1099
    %1102 = vmatprep.subr.mxu0 0.0
    %1103 = vmatpush1.msra.mxu0 %v1098
    %1104 = vmatprep.subr.mxu0 0.0
    %1105 = vmatpush1.msra.mxu0 %v1097
    %1106 = vmatprep.subr.mxu0 0.0
    %1107 = vmatpush1.msra.mxu0 %v1096
    %1108 = vmatprep.subr.mxu0 0.0
    %1109 = vmatpush1.msra.mxu0 %v1095
    %1110 = vmatprep.subr.mxu0 0.0
    %1111 = vmatpush1.msra.mxu0 %v1094
    %1112 = vmatprep.subr.mxu0 0.0
    %1113 = vmatpush1.msra.mxu0 %v1093
    %1114 = vmatprep.subr.mxu0 0.0
    %1115 = vmatpush1.msra.mxu0 %v1092
    %1116 = vmatprep.subr.mxu0 0.0
    %1117 = vmatpush1.msra.mxu0 %v1091
    %1118 = vmatprep.subr.mxu0 0.0
    %1119 = vmatpush1.msra.mxu0 %v1090
    %1120 = vmatprep.subr.mxu0 0.0
    %1121 = vmatpush1.msra.mxu0 %v1089
    %1122 = vmatprep.subr.mxu0 0.0
    %1123 = vmatpush1.msra.mxu0 %v1088
    %1124 = vmatprep.subr.mxu0 0.0
    %1125 = vmatpush1.msra.mxu0 %v1087
    %1126 = vmatprep.subr.mxu0 0.0
    %1127 = vmatpush1.msra.mxu0 %v1086
    %1128 = vmatprep.subr.mxu0 0.0
    %1129 = vmatpush1.msra.mxu0 %v1085
    %1130 = vmatprep.subr.mxu0 0.0
    %1131 = vmatpush1.msra.mxu0 %v1084
    %1132 = vmatprep.subr.mxu0 0.0
    %1133 = vmatpush2.msra.mxu0 0.0
    %1134 = vmatprep.subr.mxu0 0.0
    %1135 = vmatpush2.msra.mxu0 0.0
    %1136 = vmatprep.subr.mxu0 0.0
    %1137 = vmatpush2.msra.mxu0 0.0
    %1138 = vmatprep.subr.mxu0 0.0
    %1139 = vmatpush2.msra.mxu0 0.0
    %1140 = vmatprep.subr.mxu0 0.0
    %1141 = vmatpush2.msra.mxu0 0.0
    %1142 = vmatprep.subr.mxu0 0.0
    %1143 = vmatpush2.msra.mxu0 0.0
    %1144 = vmatprep.subr.mxu0 0.0
    %1145 = vmatpush2.msra.mxu0 0.0
    %1146 = vmatprep.subr.mxu0 0.0
    %1147 = vmatpush2.msra.mxu0 0.0
    %1148 = vmatprep.subr.mxu0 0.0
    %1149 = vmatpush2.msra.mxu0 0.0
    %1150 = vmatprep.subr.mxu0 0.0
    %1151 = vmatpush2.msra.mxu0 0.0
    %1152 = vmatprep.subr.mxu0 0.0
    %1153 = vmatpush2.msra.mxu0 0.0
    %1154 = vmatprep.subr.mxu0 0.0
    %1155 = vmatpush2.msra.mxu0 0.0
    %1156 = vmatprep.subr.mxu0 0.0
    %1157 = vmatpush2.msra.mxu0 0.0
    %1158 = vmatprep.subr.mxu0 0.0
    %1159 = vmatpush2.msra.mxu0 0.0
    %1160 = vmatprep.subr.mxu0 0.0
    %1161 = vmatpush2.msra.mxu0 0.0
    %1162 = vmatprep.subr.mxu0 0.0
    %1163 = vmatpush2.msra.mxu0 0.0
    %1164 = vmatprep.mubr.f32.mxu0 0.0
    %1165 = vmatmul.mubr.f32.gmra.mxu0 %v1083
    %v1166 = vpop.f32.mrf.mxu0
    %v1167 = vadd.f32 %v392, %v1166
    %v1168 = vpop.f32.mrf.mxu0
    %1169 = vdwg.mxu0
    %v1170 = vld [vmem:[#allocation12] sm:$0xff]
    %v1171 = vld [vmem:[#allocation12 + $0x8] sm:$0xff]
    %v1172 = vld [vmem:[#allocation12 + $0x10] sm:$0xff]
    %v1173 = vld [vmem:[#allocation12 + $0x18] sm:$0xff]
    %v1174 = vld [vmem:[#allocation12 + $0x20] sm:$0xff]
    %v1175 = vld [vmem:[#allocation12 + $0x28] sm:$0xff]
    %v1176 = vld [vmem:[#allocation12 + $0x30] sm:$0xff]
    %v1177 = vld [vmem:[#allocation12 + $0x38] sm:$0xff]
    %v1178 = vld [vmem:[#allocation12 + $0x40] sm:$0xff]
    %v1179 = vld [vmem:[#allocation12 + $0x48] sm:$0xff]
    %v1180 = vld [vmem:[#allocation12 + $0x50] sm:$0xff]
    %v1181 = vld [vmem:[#allocation12 + $0x58] sm:$0xff]
    %v1182 = vld [vmem:[#allocation12 + $0x60] sm:$0xff]
    %v1183 = vld [vmem:[#allocation12 + $0x68] sm:$0xff]
    %v1184 = vld [vmem:[#allocation12 + $0x70] sm:$0xff]
    %v1185 = vld [vmem:[#allocation12 + $0x78] sm:$0xff]
    %1186 = vmatprep.subr.mxu0 0.0
    %1187 = vmatpush1.msra.mxu0 %v1185
    %1188 = vmatprep.subr.mxu0 0.0
    %1189 = vmatpush1.msra.mxu0 %v1184
    %1190 = vmatprep.subr.mxu0 0.0
    %1191 = vmatpush1.msra.mxu0 %v1183
    %1192 = vmatprep.subr.mxu0 0.0
    %1193 = vmatpush1.msra.mxu0 %v1182
    %1194 = vmatprep.subr.mxu0 0.0
    %1195 = vmatpush1.msra.mxu0 %v1181
    %1196 = vmatprep.subr.mxu0 0.0
    %1197 = vmatpush1.msra.mxu0 %v1180
    %1198 = vmatprep.subr.mxu0 0.0
    %1199 = vmatpush1.msra.mxu0 %v1179
    %1200 = vmatprep.subr.mxu0 0.0
    %1201 = vmatpush1.msra.mxu0 %v1178
    %1202 = vmatprep.subr.mxu0 0.0
    %1203 = vmatpush1.msra.mxu0 %v1177
    %1204 = vmatprep.subr.mxu0 0.0
    %1205 = vmatpush1.msra.mxu0 %v1176
    %1206 = vmatprep.subr.mxu0 0.0
    %1207 = vmatpush1.msra.mxu0 %v1175
    %1208 = vmatprep.subr.mxu0 0.0
    %1209 = vmatpush1.msra.mxu0 %v1174
    %1210 = vmatprep.subr.mxu0 0.0
    %1211 = vmatpush1.msra.mxu0 %v1173
    %1212 = vmatprep.subr.mxu0 0.0
    %1213 = vmatpush1.msra.mxu0 %v1172
    %1214 = vmatprep.subr.mxu0 0.0
    %1215 = vmatpush1.msra.mxu0 %v1171
    %1216 = vmatprep.subr.mxu0 0.0
    %1217 = vmatpush1.msra.mxu0 %v1170
    %1218 = vmatprep.subr.mxu0 0.0
    %1219 = vmatpush2.msra.mxu0 0.0
    %1220 = vmatprep.subr.mxu0 0.0
    %1221 = vmatpush2.msra.mxu0 0.0
    %1222 = vmatprep.subr.mxu0 0.0
    %1223 = vmatpush2.msra.mxu0 0.0
    %1224 = vmatprep.subr.mxu0 0.0
    %1225 = vmatpush2.msra.mxu0 0.0
    %1226 = vmatprep.subr.mxu0 0.0
    %1227 = vmatpush2.msra.mxu0 0.0
    %1228 = vmatprep.subr.mxu0 0.0
    %1229 = vmatpush2.msra.mxu0 0.0
    %1230 = vmatprep.subr.mxu0 0.0
    %1231 = vmatpush2.msra.mxu0 0.0
    %1232 = vmatprep.subr.mxu0 0.0
    %1233 = vmatpush2.msra.mxu0 0.0
    %1234 = vmatprep.subr.mxu0 0.0
    %1235 = vmatpush2.msra.mxu0 0.0
    %1236 = vmatprep.subr.mxu0 0.0
    %1237 = vmatpush2.msra.mxu0 0.0
    %1238 = vmatprep.subr.mxu0 0.0
    %1239 = vmatpush2.msra.mxu0 0.0
    %1240 = vmatprep.subr.mxu0 0.0
    %1241 = vmatpush2.msra.mxu0 0.0
    %1242 = vmatprep.subr.mxu0 0.0
    %1243 = vmatpush2.msra.mxu0 0.0
    %1244 = vmatprep.subr.mxu0 0.0
    %1245 = vmatpush2.msra.mxu0 0.0
    %1246 = vmatprep.subr.mxu0 0.0
    %1247 = vmatpush2.msra.mxu0 0.0
    %1248 = vmatprep.subr.mxu0 0.0
    %1249 = vmatpush2.msra.mxu0 0.0
    %1250 = vmatprep.mubr.f32.mxu0 0.0
    %1251 = vmatmul.mubr.f32.gmra.mxu0 %v907
    %v1252 = vpop.f32.mrf.mxu0
    %v1253 = vadd.f32 0.0, %v1252
    %v1254 = vpop.f32.mrf.mxu0
    %1255 = vdwg.mxu0
    %v1256 = vadd.f32 %v1167, %v1253
    %v1257 = vtanh.pop %v1256
    %v1258 = vld [vmem:[#allocation14] sm:$0xff]
    %v1259 = vld [vmem:[#allocation14 + $0x8] sm:$0xff]
    %v1260 = vld [vmem:[#allocation14 + $0x10] sm:$0xff]
    %v1261 = vld [vmem:[#allocation14 + $0x18] sm:$0xff]
    %v1262 = vld [vmem:[#allocation14 + $0x20] sm:$0xff]
    %v1263 = vld [vmem:[#allocation14 + $0x28] sm:$0xff]
    %v1264 = vld [vmem:[#allocation14 + $0x30] sm:$0xff]
    %v1265 = vld [vmem:[#allocation14 + $0x38] sm:$0xff]
    %v1266 = vld [vmem:[#allocation14 + $0x40] sm:$0xff]
    %v1267 = vld [vmem:[#allocation14 + $0x48] sm:$0xff]
    %v1268 = vld [vmem:[#allocation14 + $0x50] sm:$0xff]
    %v1269 = vld [vmem:[#allocation14 + $0x58] sm:$0xff]
    %v1270 = vld [vmem:[#allocation14 + $0x60] sm:$0xff]
    %v1271 = vld [vmem:[#allocation14 + $0x68] sm:$0xff]
    %v1272 = vld [vmem:[#allocation14 + $0x70] sm:$0xff]
    %v1273 = vld [vmem:[#allocation14 + $0x78] sm:$0xff]
    %1274 = vmatprep.subr.mxu0 0.0
    %1275 = vmatpush1.msra.mxu0 %v1273
    %1276 = vmatprep.subr.mxu0 0.0
    %1277 = vmatpush1.msra.mxu0 %v1272
    %1278 = vmatprep.subr.mxu0 0.0
    %1279 = vmatpush1.msra.mxu0 %v1271
    %1280 = vmatprep.subr.mxu0 0.0
    %1281 = vmatpush1.msra.mxu0 %v1270
    %1282 = vmatprep.subr.mxu0 0.0
    %1283 = vmatpush1.msra.mxu0 %v1269
    %1284 = vmatprep.subr.mxu0 0.0
    %1285 = vmatpush1.msra.mxu0 %v1268
    %1286 = vmatprep.subr.mxu0 0.0
    %1287 = vmatpush1.msra.mxu0 %v1267
    %1288 = vmatprep.subr.mxu0 0.0
    %1289 = vmatpush1.msra.mxu0 %v1266
    %1290 = vmatprep.subr.mxu0 0.0
    %1291 = vmatpush1.msra.mxu0 %v1265
    %1292 = vmatprep.subr.mxu0 0.0
    %1293 = vmatpush1.msra.mxu0 %v1264
    %1294 = vmatprep.subr.mxu0 0.0
    %1295 = vmatpush1.msra.mxu0 %v1263
    %1296 = vmatprep.subr.mxu0 0.0
    %1297 = vmatpush1.msra.mxu0 %v1262
    %1298 = vmatprep.subr.mxu0 0.0
    %1299 = vmatpush1.msra.mxu0 %v1261
    %1300 = vmatprep.subr.mxu0 0.0
    %1301 = vmatpush1.msra.mxu0 %v1260
    %1302 = vmatprep.subr.mxu0 0.0
    %1303 = vmatpush1.msra.mxu0 %v1259
    %1304 = vmatprep.subr.mxu0 0.0
    %1305 = vmatpush1.msra.mxu0 %v1258
    %1306 = vmatprep.subr.mxu0 0.0
    %1307 = vmatpush2.msra.mxu0 0.0
    %1308 = vmatprep.subr.mxu0 0.0
    %1309 = vmatpush2.msra.mxu0 0.0
    %1310 = vmatprep.subr.mxu0 0.0
    %1311 = vmatpush2.msra.mxu0 0.0
    %1312 = vmatprep.subr.mxu0 0.0
    %1313 = vmatpush2.msra.mxu0 0.0
    %1314 = vmatprep.subr.mxu0 0.0
    %1315 = vmatpush2.msra.mxu0 0.0
    %1316 = vmatprep.subr.mxu0 0.0
    %1317 = vmatpush2.msra.mxu0 0.0
    %1318 = vmatprep.subr.mxu0 0.0
    %1319 = vmatpush2.msra.mxu0 0.0
    %1320 = vmatprep.subr.mxu0 0.0
    %1321 = vmatpush2.msra.mxu0 0.0
    %1322 = vmatprep.subr.mxu0 0.0
    %1323 = vmatpush2.msra.mxu0 0.0
    %1324 = vmatprep.subr.mxu0 0.0
    %1325 = vmatpush2.msra.mxu0 0.0
    %1326 = vmatprep.subr.mxu0 0.0
    %1327 = vmatpush2.msra.mxu0 0.0
    %1328 = vmatprep.subr.mxu0 0.0
    %1329 = vmatpush2.msra.mxu0 0.0
    %1330 = vmatprep.subr.mxu0 0.0
    %1331 = vmatpush2.msra.mxu0 0.0
    %1332 = vmatprep.subr.mxu0 0.0
    %1333 = vmatpush2.msra.mxu0 0.0
    %1334 = vmatprep.subr.mxu0 0.0
    %1335 = vmatpush2.msra.mxu0 0.0
    %1336 = vmatprep.subr.mxu0 0.0
    %1337 = vmatpush2.msra.mxu0 0.0
    %1338 = vmatprep.mubr.f32.mxu0 0.0
    %1339 = vmatmul.mubr.f32.gmra.mxu0 %v1257
    %v1340 = vpop.f32.mrf.mxu0
    %v1341 = vadd.f32 %v572, %v1340
    %v1342 = vpop.f32.mrf.mxu0
    %1343 = vdwg.mxu0
    %1344 = vst [vmem:[#allocation15 + $0x10] sm:$0xff] %v1341
    %v1345 = vld [vmem:[#allocation2 + $0x18] sm:$0xff]
    %v1346 = vld [vmem:[#allocation9] sm:$0xff]
    %v1347 = vld [vmem:[#allocation9 + $0x8] sm:$0xff]
    %v1348 = vld [vmem:[#allocation9 + $0x10] sm:$0xff]
    %v1349 = vld [vmem:[#allocation9 + $0x18] sm:$0xff]
    %v1350 = vld [vmem:[#allocation9 + $0x20] sm:$0xff]
    %v1351 = vld [vmem:[#allocation9 + $0x28] sm:$0xff]
    %v1352 = vld [vmem:[#allocation9 + $0x30] sm:$0xff]
    %v1353 = vld [vmem:[#allocation9 + $0x38] sm:$0xff]
    %v1354 = vld [vmem:[#allocation9 + $0x40] sm:$0xff]
    %v1355 = vld [vmem:[#allocation9 + $0x48] sm:$0xff]
    %v1356 = vld [vmem:[#allocation9 + $0x50] sm:$0xff]
    %v1357 = vld [vmem:[#allocation9 + $0x58] sm:$0xff]
    %v1358 = vld [vmem:[#allocation9 + $0x60] sm:$0xff]
    %v1359 = vld [vmem:[#allocation9 + $0x68] sm:$0xff]
    %v1360 = vld [vmem:[#allocation9 + $0x70] sm:$0xff]
    %v1361 = vld [vmem:[#allocation9 + $0x78] sm:$0xff]
    %1362 = vmatprep.subr.mxu0 0.0
    %1363 = vmatpush1.msra.mxu0 %v1361
    %1364 = vmatprep.subr.mxu0 0.0
    %1365 = vmatpush1.msra.mxu0 %v1360
    %1366 = vmatprep.subr.mxu0 0.0
    %1367 = vmatpush1.msra.mxu0 %v1359
    %1368 = vmatprep.subr.mxu0 0.0
    %1369 = vmatpush1.msra.mxu0 %v1358
    %1370 = vmatprep.subr.mxu0 0.0
    %1371 = vmatpush1.msra.mxu0 %v1357
    %1372 = vmatprep.subr.mxu0 0.0
    %1373 = vmatpush1.msra.mxu0 %v1356
    %1374 = vmatprep.subr.mxu0 0.0
    %1375 = vmatpush1.msra.mxu0 %v1355
    %1376 = vmatprep.subr.mxu0 0.0
    %1377 = vmatpush1.msra.mxu0 %v1354
    %1378 = vmatprep.subr.mxu0 0.0
    %1379 = vmatpush1.msra.mxu0 %v1353
    %1380 = vmatprep.subr.mxu0 0.0
    %1381 = vmatpush1.msra.mxu0 %v1352
    %1382 = vmatprep.subr.mxu0 0.0
    %1383 = vmatpush1.msra.mxu0 %v1351
    %1384 = vmatprep.subr.mxu0 0.0
    %1385 = vmatpush1.msra.mxu0 %v1350
    %1386 = vmatprep.subr.mxu0 0.0
    %1387 = vmatpush1.msra.mxu0 %v1349
    %1388 = vmatprep.subr.mxu0 0.0
    %1389 = vmatpush1.msra.mxu0 %v1348
    %1390 = vmatprep.subr.mxu0 0.0
    %1391 = vmatpush1.msra.mxu0 %v1347
    %1392 = vmatprep.subr.mxu0 0.0
    %1393 = vmatpush1.msra.mxu0 %v1346
    %1394 = vmatprep.subr.mxu0 0.0
    %1395 = vmatpush2.msra.mxu0 0.0
    %1396 = vmatprep.subr.mxu0 0.0
    %1397 = vmatpush2.msra.mxu0 0.0
    %1398 = vmatprep.subr.mxu0 0.0
    %1399 = vmatpush2.msra.mxu0 0.0
    %1400 = vmatprep.subr.mxu0 0.0
    %1401 = vmatpush2.msra.mxu0 0.0
    %1402 = vmatprep.subr.mxu0 0.0
    %1403 = vmatpush2.msra.mxu0 0.0
    %1404 = vmatprep.subr.mxu0 0.0
    %1405 = vmatpush2.msra.mxu0 0.0
    %1406 = vmatprep.subr.mxu0 0.0
    %1407 = vmatpush2.msra.mxu0 0.0
    %1408 = vmatprep.subr.mxu0 0.0
    %1409 = vmatpush2.msra.mxu0 0.0
    %1410 = vmatprep.subr.mxu0 0.0
    %1411 = vmatpush2.msra.mxu0 0.0
    %1412 = vmatprep.subr.mxu0 0.0
    %1413 = vmatpush2.msra.mxu0 0.0
    %1414 = vmatprep.subr.mxu0 0.0
    %1415 = vmatpush2.msra.mxu0 0.0
    %1416 = vmatprep.subr.mxu0 0.0
    %1417 = vmatpush2.msra.mxu0 0.0
    %1418 = vmatprep.subr.mxu0 0.0
    %1419 = vmatpush2.msra.mxu0 0.0
    %1420 = vmatprep.subr.mxu0 0.0
    %1421 = vmatpush2.msra.mxu0 0.0
    %1422 = vmatprep.subr.mxu0 0.0
    %1423 = vmatpush2.msra.mxu0 0.0
    %1424 = vmatprep.subr.mxu0 0.0
    %1425 = vmatpush2.msra.mxu0 0.0
    %1426 = vmatprep.mubr.f32.mxu0 0.0
    %1427 = vmatmul.mubr.f32.gmra.mxu0 %v1083
    %v1428 = vpop.f32.mrf.mxu0
    %v1429 = vadd.f32 0.0, %v1428
    %v1430 = vpop.f32.mrf.mxu0
    %1431 = vdwg.mxu0
    %v1432 = vadd.f32 %v1345, %v1429
    %v1433 = vtanh.pop %v1432
    %v1434 = vld [vmem:[#allocation11] sm:$0xff]
    %v1435 = vld [vmem:[#allocation11 + $0x8] sm:$0xff]
    %v1436 = vld [vmem:[#allocation11 + $0x10] sm:$0xff]
    %v1437 = vld [vmem:[#allocation11 + $0x18] sm:$0xff]
    %v1438 = vld [vmem:[#allocation11 + $0x20] sm:$0xff]
    %v1439 = vld [vmem:[#allocation11 + $0x28] sm:$0xff]
    %v1440 = vld [vmem:[#allocation11 + $0x30] sm:$0xff]
    %v1441 = vld [vmem:[#allocation11 + $0x38] sm:$0xff]
    %v1442 = vld [vmem:[#allocation11 + $0x40] sm:$0xff]
    %v1443 = vld [vmem:[#allocation11 + $0x48] sm:$0xff]
    %v1444 = vld [vmem:[#allocation11 + $0x50] sm:$0xff]
    %v1445 = vld [vmem:[#allocation11 + $0x58] sm:$0xff]
    %v1446 = vld [vmem:[#allocation11 + $0x60] sm:$0xff]
    %v1447 = vld [vmem:[#allocation11 + $0x68] sm:$0xff]
    %v1448 = vld [vmem:[#allocation11 + $0x70] sm:$0xff]
    %v1449 = vld [vmem:[#allocation11 + $0x78] sm:$0xff]
    %1450 = vmatprep.subr.mxu0 0.0
    %1451 = vmatpush1.msra.mxu0 %v1449
    %1452 = vmatprep.subr.mxu0 0.0
    %1453 = vmatpush1.msra.mxu0 %v1448
    %1454 = vmatprep.subr.mxu0 0.0
    %1455 = vmatpush1.msra.mxu0 %v1447
    %1456 = vmatprep.subr.mxu0 0.0
    %1457 = vmatpush1.msra.mxu0 %v1446
    %1458 = vmatprep.subr.mxu0 0.0
    %1459 = vmatpush1.msra.mxu0 %v1445
    %1460 = vmatprep.subr.mxu0 0.0
    %1461 = vmatpush1.msra.mxu0 %v1444
    %1462 = vmatprep.subr.mxu0 0.0
    %1463 = vmatpush1.msra.mxu0 %v1443
    %1464 = vmatprep.subr.mxu0 0.0
    %1465 = vmatpush1.msra.mxu0 %v1442
    %1466 = vmatprep.subr.mxu0 0.0
    %1467 = vmatpush1.msra.mxu0 %v1441
    %1468 = vmatprep.subr.mxu0 0.0
    %1469 = vmatpush1.msra.mxu0 %v1440
    %1470 = vmatprep.subr.mxu0 0.0
    %1471 = vmatpush1.msra.mxu0 %v1439
    %1472 = vmatprep.subr.mxu0 0.0
    %1473 = vmatpush1.msra.mxu0 %v1438
    %1474 = vmatprep.subr.mxu0 0.0
    %1475 = vmatpush1.msra.mxu0 %v1437
    %1476 = vmatprep.subr.mxu0 0.0
    %1477 = vmatpush1.msra.mxu0 %v1436
    %1478 = vmatprep.subr.mxu0 0.0
    %1479 = vmatpush1.msra.mxu0 %v1435
    %1480 = vmatprep.subr.mxu0 0.0
    %1481 = vmatpush1.msra.mxu0 %v1434
    %1482 = vmatprep.subr.mxu0 0.0
    %1483 = vmatpush2.msra.mxu0 0.0
    %1484 = vmatprep.subr.mxu0 0.0
    %1485 = vmatpush2.msra.mxu0 0.0
    %1486 = vmatprep.subr.mxu0 0.0
    %1487 = vmatpush2.msra.mxu0 0.0
    %1488 = vmatprep.subr.mxu0 0.0
    %1489 = vmatpush2.msra.mxu0 0.0
    %1490 = vmatprep.subr.mxu0 0.0
    %1491 = vmatpush2.msra.mxu0 0.0
    %1492 = vmatprep.subr.mxu0 0.0
    %1493 = vmatpush2.msra.mxu0 0.0
    %1494 = vmatprep.subr.mxu0 0.0
    %1495 = vmatpush2.msra.mxu0 0.0
    %1496 = vmatprep.subr.mxu0 0.0
    %1497 = vmatpush2.msra.mxu0 0.0
    %1498 = vmatprep.subr.mxu0 0.0
    %1499 = vmatpush2.msra.mxu0 0.0
    %1500 = vmatprep.subr.mxu0 0.0
    %1501 = vmatpush2.msra.mxu0 0.0
    %1502 = vmatprep.subr.mxu0 0.0
    %1503 = vmatpush2.msra.mxu0 0.0
    %1504 = vmatprep.subr.mxu0 0.0
    %1505 = vmatpush2.msra.mxu0 0.0
    %1506 = vmatprep.subr.mxu0 0.0
    %1507 = vmatpush2.msra.mxu0 0.0
    %1508 = vmatprep.subr.mxu0 0.0
    %1509 = vmatpush2.msra.mxu0 0.0
    %1510 = vmatprep.subr.mxu0 0.0
    %1511 = vmatpush2.msra.mxu0 0.0
    %1512 = vmatprep.subr.mxu0 0.0
    %1513 = vmatpush2.msra.mxu0 0.0
    %1514 = vmatprep.mubr.f32.mxu0 0.0
    %1515 = vmatmul.mubr.f32.gmra.mxu0 %v1433
    %v1516 = vpop.f32.mrf.mxu0
    %v1517 = vadd.f32 %v392, %v1516
    %v1518 = vpop.f32.mrf.mxu0
    %1519 = vdwg.mxu0
    %v1520 = vld [vmem:[#allocation12] sm:$0xff]
    %v1521 = vld [vmem:[#allocation12 + $0x8] sm:$0xff]
    %v1522 = vld [vmem:[#allocation12 + $0x10] sm:$0xff]
    %v1523 = vld [vmem:[#allocation12 + $0x18] sm:$0xff]
    %v1524 = vld [vmem:[#allocation12 + $0x20] sm:$0xff]
    %v1525 = vld [vmem:[#allocation12 + $0x28] sm:$0xff]
    %v1526 = vld [vmem:[#allocation12 + $0x30] sm:$0xff]
    %v1527 = vld [vmem:[#allocation12 + $0x38] sm:$0xff]
    %v1528 = vld [vmem:[#allocation12 + $0x40] sm:$0xff]
    %v1529 = vld [vmem:[#allocation12 + $0x48] sm:$0xff]
    %v1530 = vld [vmem:[#allocation12 + $0x50] sm:$0xff]
    %v1531 = vld [vmem:[#allocation12 + $0x58] sm:$0xff]
    %v1532 = vld [vmem:[#allocation12 + $0x60] sm:$0xff]
    %v1533 = vld [vmem:[#allocation12 + $0x68] sm:$0xff]
    %v1534 = vld [vmem:[#allocation12 + $0x70] sm:$0xff]
    %v1535 = vld [vmem:[#allocation12 + $0x78] sm:$0xff]
    %1536 = vmatprep.subr.mxu0 0.0
    %1537 = vmatpush1.msra.mxu0 %v1535
    %1538 = vmatprep.subr.mxu0 0.0
    %1539 = vmatpush1.msra.mxu0 %v1534
    %1540 = vmatprep.subr.mxu0 0.0
    %1541 = vmatpush1.msra.mxu0 %v1533
    %1542 = vmatprep.subr.mxu0 0.0
    %1543 = vmatpush1.msra.mxu0 %v1532
    %1544 = vmatprep.subr.mxu0 0.0
    %1545 = vmatpush1.msra.mxu0 %v1531
    %1546 = vmatprep.subr.mxu0 0.0
    %1547 = vmatpush1.msra.mxu0 %v1530
    %1548 = vmatprep.subr.mxu0 0.0
    %1549 = vmatpush1.msra.mxu0 %v1529
    %1550 = vmatprep.subr.mxu0 0.0
    %1551 = vmatpush1.msra.mxu0 %v1528
    %1552 = vmatprep.subr.mxu0 0.0
    %1553 = vmatpush1.msra.mxu0 %v1527
    %1554 = vmatprep.subr.mxu0 0.0
    %1555 = vmatpush1.msra.mxu0 %v1526
    %1556 = vmatprep.subr.mxu0 0.0
    %1557 = vmatpush1.msra.mxu0 %v1525
    %1558 = vmatprep.subr.mxu0 0.0
    %1559 = vmatpush1.msra.mxu0 %v1524
    %1560 = vmatprep.subr.mxu0 0.0
    %1561 = vmatpush1.msra.mxu0 %v1523
    %1562 = vmatprep.subr.mxu0 0.0
    %1563 = vmatpush1.msra.mxu0 %v1522
    %1564 = vmatprep.subr.mxu0 0.0
    %1565 = vmatpush1.msra.mxu0 %v1521
    %1566 = vmatprep.subr.mxu0 0.0
    %1567 = vmatpush1.msra.mxu0 %v1520
    %1568 = vmatprep.subr.mxu0 0.0
    %1569 = vmatpush2.msra.mxu0 0.0
    %1570 = vmatprep.subr.mxu0 0.0
    %1571 = vmatpush2.msra.mxu0 0.0
    %1572 = vmatprep.subr.mxu0 0.0
    %1573 = vmatpush2.msra.mxu0 0.0
    %1574 = vmatprep.subr.mxu0 0.0
    %1575 = vmatpush2.msra.mxu0 0.0
    %1576 = vmatprep.subr.mxu0 0.0
    %1577 = vmatpush2.msra.mxu0 0.0
    %1578 = vmatprep.subr.mxu0 0.0
    %1579 = vmatpush2.msra.mxu0 0.0
    %1580 = vmatprep.subr.mxu0 0.0
    %1581 = vmatpush2.msra.mxu0 0.0
    %1582 = vmatprep.subr.mxu0 0.0
    %1583 = vmatpush2.msra.mxu0 0.0
    %1584 = vmatprep.subr.mxu0 0.0
    %1585 = vmatpush2.msra.mxu0 0.0
    %1586 = vmatprep.subr.mxu0 0.0
    %1587 = vmatpush2.msra.mxu0 0.0
    %1588 = vmatprep.subr.mxu0 0.0
    %1589 = vmatpush2.msra.mxu0 0.0
    %1590 = vmatprep.subr.mxu0 0.0
    %1591 = vmatpush2.msra.mxu0 0.0
    %1592 = vmatprep.subr.mxu0 0.0
    %1593 = vmatpush2.msra.mxu0 0.0
    %1594 = vmatprep.subr.mxu0 0.0
    %1595 = vmatpush2.msra.mxu0 0.0
    %1596 = vmatprep.subr.mxu0 0.0
    %1597 = vmatpush2.msra.mxu0 0.0
    %1598 = vmatprep.subr.mxu0 0.0
    %1599 = vmatpush2.msra.mxu0 0.0
    %1600 = vmatprep.mubr.f32.mxu0 0.0
    %1601 = vmatmul.mubr.f32.gmra.mxu0 %v1257
    %v1602 = vpop.f32.mrf.mxu0
    %v1603 = vadd.f32 0.0, %v1602
    %v1604 = vpop.f32.mrf.mxu0
    %1605 = vdwg.mxu0
    %v1606 = vadd.f32 %v1517, %v1603
    %v1607 = vtanh.pop %v1606
    %v1608 = vld [vmem:[#allocation14] sm:$0xff]
    %v1609 = vld [vmem:[#allocation14 + $0x8] sm:$0xff]
    %v1610 = vld [vmem:[#allocation14 + $0x10] sm:$0xff]
    %v1611 = vld [vmem:[#allocation14 + $0x18] sm:$0xff]
    %v1612 = vld [vmem:[#allocation14 + $0x20] sm:$0xff]
    %v1613 = vld [vmem:[#allocation14 + $0x28] sm:$0xff]
    %v1614 = vld [vmem:[#allocation14 + $0x30] sm:$0xff]
    %v1615 = vld [vmem:[#allocation14 + $0x38] sm:$0xff]
    %v1616 = vld [vmem:[#allocation14 + $0x40] sm:$0xff]
    %v1617 = vld [vmem:[#allocation14 + $0x48] sm:$0xff]
    %v1618 = vld [vmem:[#allocation14 + $0x50] sm:$0xff]
    %v1619 = vld [vmem:[#allocation14 + $0x58] sm:$0xff]
    %v1620 = vld [vmem:[#allocation14 + $0x60] sm:$0xff]
    %v1621 = vld [vmem:[#allocation14 + $0x68] sm:$0xff]
    %v1622 = vld [vmem:[#allocation14 + $0x70] sm:$0xff]
    %v1623 = vld [vmem:[#allocation14 + $0x78] sm:$0xff]
    %1624 = vmatprep.subr.mxu0 0.0
    %1625 = vmatpush1.msra.mxu0 %v1623
    %1626 = vmatprep.subr.mxu0 0.0
    %1627 = vmatpush1.msra.mxu0 %v1622
    %1628 = vmatprep.subr.mxu0 0.0
    %1629 = vmatpush1.msra.mxu0 %v1621
    %1630 = vmatprep.subr.mxu0 0.0
    %1631 = vmatpush1.msra.mxu0 %v1620
    %1632 = vmatprep.subr.mxu0 0.0
    %1633 = vmatpush1.msra.mxu0 %v1619
    %1634 = vmatprep.subr.mxu0 0.0
    %1635 = vmatpush1.msra.mxu0 %v1618
    %1636 = vmatprep.subr.mxu0 0.0
    %1637 = vmatpush1.msra.mxu0 %v1617
    %1638 = vmatprep.subr.mxu0 0.0
    %1639 = vmatpush1.msra.mxu0 %v1616
    %1640 = vmatprep.subr.mxu0 0.0
    %1641 = vmatpush1.msra.mxu0 %v1615
    %1642 = vmatprep.subr.mxu0 0.0
    %1643 = vmatpush1.msra.mxu0 %v1614
    %1644 = vmatprep.subr.mxu0 0.0
    %1645 = vmatpush1.msra.mxu0 %v1613
    %1646 = vmatprep.subr.mxu0 0.0
    %1647 = vmatpush1.msra.mxu0 %v1612
    %1648 = vmatprep.subr.mxu0 0.0
    %1649 = vmatpush1.msra.mxu0 %v1611
    %1650 = vmatprep.subr.mxu0 0.0
    %1651 = vmatpush1.msra.mxu0 %v1610
    %1652 = vmatprep.subr.mxu0 0.0
    %1653 = vmatpush1.msra.mxu0 %v1609
    %1654 = vmatprep.subr.mxu0 0.0
    %1655 = vmatpush1.msra.mxu0 %v1608
    %1656 = vmatprep.subr.mxu0 0.0
    %1657 = vmatpush2.msra.mxu0 0.0
    %1658 = vmatprep.subr.mxu0 0.0
    %1659 = vmatpush2.msra.mxu0 0.0
    %1660 = vmatprep.subr.mxu0 0.0
    %1661 = vmatpush2.msra.mxu0 0.0
    %1662 = vmatprep.subr.mxu0 0.0
    %1663 = vmatpush2.msra.mxu0 0.0
    %1664 = vmatprep.subr.mxu0 0.0
    %1665 = vmatpush2.msra.mxu0 0.0
    %1666 = vmatprep.subr.mxu0 0.0
    %1667 = vmatpush2.msra.mxu0 0.0
    %1668 = vmatprep.subr.mxu0 0.0
    %1669 = vmatpush2.msra.mxu0 0.0
    %1670 = vmatprep.subr.mxu0 0.0
    %1671 = vmatpush2.msra.mxu0 0.0
    %1672 = vmatprep.subr.mxu0 0.0
    %1673 = vmatpush2.msra.mxu0 0.0
    %1674 = vmatprep.subr.mxu0 0.0
    %1675 = vmatpush2.msra.mxu0 0.0
    %1676 = vmatprep.subr.mxu0 0.0
    %1677 = vmatpush2.msra.mxu0 0.0
    %1678 = vmatprep.subr.mxu0 0.0
    %1679 = vmatpush2.msra.mxu0 0.0
    %1680 = vmatprep.subr.mxu0 0.0
    %1681 = vmatpush2.msra.mxu0 0.0
    %1682 = vmatprep.subr.mxu0 0.0
    %1683 = vmatpush2.msra.mxu0 0.0
    %1684 = vmatprep.subr.mxu0 0.0
    %1685 = vmatpush2.msra.mxu0 0.0
    %1686 = vmatprep.subr.mxu0 0.0
    %1687 = vmatpush2.msra.mxu0 0.0
    %1688 = vmatprep.mubr.f32.mxu0 0.0
    %1689 = vmatmul.mubr.f32.gmra.mxu0 %v1607
    %v1690 = vpop.f32.mrf.mxu0
    %v1691 = vadd.f32 %v572, %v1690
    %v1692 = vpop.f32.mrf.mxu0
    %1693 = vdwg.mxu0
    %1694 = vst [vmem:[#allocation15 + $0x18] sm:$0xff] %v1691
    %v1695 = vld [vmem:[#allocation2 + $0x20] sm:$0xff]
    %v1696 = vld [vmem:[#allocation9] sm:$0xff]
    %v1697 = vld [vmem:[#allocation9 + $0x8] sm:$0xff]
    %v1698 = vld [vmem:[#allocation9 + $0x10] sm:$0xff]
    %v1699 = vld [vmem:[#allocation9 + $0x18] sm:$0xff]
    %v1700 = vld [vmem:[#allocation9 + $0x20] sm:$0xff]
    %v1701 = vld [vmem:[#allocation9 + $0x28] sm:$0xff]
    %v1702 = vld [vmem:[#allocation9 + $0x30] sm:$0xff]
    %v1703 = vld [vmem:[#allocation9 + $0x38] sm:$0xff]
    %v1704 = vld [vmem:[#allocation9 + $0x40] sm:$0xff]
    %v1705 = vld [vmem:[#allocation9 + $0x48] sm:$0xff]
    %v1706 = vld [vmem:[#allocation9 + $0x50] sm:$0xff]
    %v1707 = vld [vmem:[#allocation9 + $0x58] sm:$0xff]
    %v1708 = vld [vmem:[#allocation9 + $0x60] sm:$0xff]
    %v1709 = vld [vmem:[#allocation9 + $0x68] sm:$0xff]
    %v1710 = vld [vmem:[#allocation9 + $0x70] sm:$0xff]
    %v1711 = vld [vmem:[#allocation9 + $0x78] sm:$0xff]
    %1712 = vmatprep.subr.mxu0 0.0
    %1713 = vmatpush1.msra.mxu0 %v1711
    %1714 = vmatprep.subr.mxu0 0.0
    %1715 = vmatpush1.msra.mxu0 %v1710
    %1716 = vmatprep.subr.mxu0 0.0
    %1717 = vmatpush1.msra.mxu0 %v1709
    %1718 = vmatprep.subr.mxu0 0.0
    %1719 = vmatpush1.msra.mxu0 %v1708
    %1720 = vmatprep.subr.mxu0 0.0
    %1721 = vmatpush1.msra.mxu0 %v1707
    %1722 = vmatprep.subr.mxu0 0.0
    %1723 = vmatpush1.msra.mxu0 %v1706
    %1724 = vmatprep.subr.mxu0 0.0
    %1725 = vmatpush1.msra.mxu0 %v1705
    %1726 = vmatprep.subr.mxu0 0.0
    %1727 = vmatpush1.msra.mxu0 %v1704
    %1728 = vmatprep.subr.mxu0 0.0
    %1729 = vmatpush1.msra.mxu0 %v1703
    %1730 = vmatprep.subr.mxu0 0.0
    %1731 = vmatpush1.msra.mxu0 %v1702
    %1732 = vmatprep.subr.mxu0 0.0
    %1733 = vmatpush1.msra.mxu0 %v1701
    %1734 = vmatprep.subr.mxu0 0.0
    %1735 = vmatpush1.msra.mxu0 %v1700
    %1736 = vmatprep.subr.mxu0 0.0
    %1737 = vmatpush1.msra.mxu0 %v1699
    %1738 = vmatprep.subr.mxu0 0.0
    %1739 = vmatpush1.msra.mxu0 %v1698
    %1740 = vmatprep.subr.mxu0 0.0
    %1741 = vmatpush1.msra.mxu0 %v1697
    %1742 = vmatprep.subr.mxu0 0.0
    %1743 = vmatpush1.msra.mxu0 %v1696
    %1744 = vmatprep.subr.mxu0 0.0
    %1745 = vmatpush2.msra.mxu0 0.0
    %1746 = vmatprep.subr.mxu0 0.0
    %1747 = vmatpush2.msra.mxu0 0.0
    %1748 = vmatprep.subr.mxu0 0.0
    %1749 = vmatpush2.msra.mxu0 0.0
    %1750 = vmatprep.subr.mxu0 0.0
    %1751 = vmatpush2.msra.mxu0 0.0
    %1752 = vmatprep.subr.mxu0 0.0
    %1753 = vmatpush2.msra.mxu0 0.0
    %1754 = vmatprep.subr.mxu0 0.0
    %1755 = vmatpush2.msra.mxu0 0.0
    %1756 = vmatprep.subr.mxu0 0.0
    %1757 = vmatpush2.msra.mxu0 0.0
    %1758 = vmatprep.subr.mxu0 0.0
    %1759 = vmatpush2.msra.mxu0 0.0
    %1760 = vmatprep.subr.mxu0 0.0
    %1761 = vmatpush2.msra.mxu0 0.0
    %1762 = vmatprep.subr.mxu0 0.0
    %1763 = vmatpush2.msra.mxu0 0.0
    %1764 = vmatprep.subr.mxu0 0.0
    %1765 = vmatpush2.msra.mxu0 0.0
    %1766 = vmatprep.subr.mxu0 0.0
    %1767 = vmatpush2.msra.mxu0 0.0
    %1768 = vmatprep.subr.mxu0 0.0
    %1769 = vmatpush2.msra.mxu0 0.0
    %1770 = vmatprep.subr.mxu0 0.0
    %1771 = vmatpush2.msra.mxu0 0.0
    %1772 = vmatprep.subr.mxu0 0.0
    %1773 = vmatpush2.msra.mxu0 0.0
    %1774 = vmatprep.subr.mxu0 0.0
    %1775 = vmatpush2.msra.mxu0 0.0
    %1776 = vmatprep.mubr.f32.mxu0 0.0
    %1777 = vmatmul.mubr.f32.gmra.mxu0 %v1433
    %v1778 = vpop.f32.mrf.mxu0
    %v1779 = vadd.f32 0.0, %v1778
    %v1780 = vpop.f32.mrf.mxu0
    %1781 = vdwg.mxu0
    %v1782 = vadd.f32 %v1695, %v1779
    %v1783 = vtanh.pop %v1782
    %v1784 = vld [vmem:[#allocation11] sm:$0xff]
    %v1785 = vld [vmem:[#allocation11 + $0x8] sm:$0xff]
    %v1786 = vld [vmem:[#allocation11 + $0x10] sm:$0xff]
    %v1787 = vld [vmem:[#allocation11 + $0x18] sm:$0xff]
    %v1788 = vld [vmem:[#allocation11 + $0x20] sm:$0xff]
    %v1789 = vld [vmem:[#allocation11 + $0x28] sm:$0xff]
    %v1790 = vld [vmem:[#allocation11 + $0x30] sm:$0xff]
    %v1791 = vld [vmem:[#allocation11 + $0x38] sm:$0xff]
    %v1792 = vld [vmem:[#allocation11 + $0x40] sm:$0xff]
    %v1793 = vld [vmem:[#allocation11 + $0x48] sm:$0xff]
    %v1794 = vld [vmem:[#allocation11 + $0x50] sm:$0xff]
    %v1795 = vld [vmem:[#allocation11 + $0x58] sm:$0xff]
    %v1796 = vld [vmem:[#allocation11 + $0x60] sm:$0xff]
    %v1797 = vld [vmem:[#allocation11 + $0x68] sm:$0xff]
    %v1798 = vld [vmem:[#allocation11 + $0x70] sm:$0xff]
    %v1799 = vld [vmem:[#allocation11 + $0x78] sm:$0xff]
    %1800 = vmatprep.subr.mxu0 0.0
    %1801 = vmatpush1.msra.mxu0 %v1799
    %1802 = vmatprep.subr.mxu0 0.0
    %1803 = vmatpush1.msra.mxu0 %v1798
    %1804 = vmatprep.subr.mxu0 0.0
    %1805 = vmatpush1.msra.mxu0 %v1797
    %1806 = vmatprep.subr.mxu0 0.0
    %1807 = vmatpush1.msra.mxu0 %v1796
    %1808 = vmatprep.subr.mxu0 0.0
    %1809 = vmatpush1.msra.mxu0 %v1795
    %1810 = vmatprep.subr.mxu0 0.0
    %1811 = vmatpush1.msra.mxu0 %v1794
    %1812 = vmatprep.subr.mxu0 0.0
    %1813 = vmatpush1.msra.mxu0 %v1793
    %1814 = vmatprep.subr.mxu0 0.0
    %1815 = vmatpush1.msra.mxu0 %v1792
    %1816 = vmatprep.subr.mxu0 0.0
    %1817 = vmatpush1.msra.mxu0 %v1791
    %1818 = vmatprep.subr.mxu0 0.0
    %1819 = vmatpush1.msra.mxu0 %v1790
    %1820 = vmatprep.subr.mxu0 0.0
    %1821 = vmatpush1.msra.mxu0 %v1789
    %1822 = vmatprep.subr.mxu0 0.0
    %1823 = vmatpush1.msra.mxu0 %v1788
    %1824 = vmatprep.subr.mxu0 0.0
    %1825 = vmatpush1.msra.mxu0 %v1787
    %1826 = vmatprep.subr.mxu0 0.0
    %1827 = vmatpush1.msra.mxu0 %v1786
    %1828 = vmatprep.subr.mxu0 0.0
    %1829 = vmatpush1.msra.mxu0 %v1785
    %1830 = vmatprep.subr.mxu0 0.0
    %1831 = vmatpush1.msra.mxu0 %v1784
    %1832 = vmatprep.subr.mxu0 0.0
    %1833 = vmatpush2.msra.mxu0 0.0
    %1834 = vmatprep.subr.mxu0 0.0
    %1835 = vmatpush2.msra.mxu0 0.0
    %1836 = vmatprep.subr.mxu0 0.0
    %1837 = vmatpush2.msra.mxu0 0.0
    %1838 = vmatprep.subr.mxu0 0.0
    %1839 = vmatpush2.msra.mxu0 0.0
    %1840 = vmatprep.subr.mxu0 0.0
    %1841 = vmatpush2.msra.mxu0 0.0
    %1842 = vmatprep.subr.mxu0 0.0
    %1843 = vmatpush2.msra.mxu0 0.0
    %1844 = vmatprep.subr.mxu0 0.0
    %1845 = vmatpush2.msra.mxu0 0.0
    %1846 = vmatprep.subr.mxu0 0.0
    %1847 = vmatpush2.msra.mxu0 0.0
    %1848 = vmatprep.subr.mxu0 0.0
    %1849 = vmatpush2.msra.mxu0 0.0
    %1850 = vmatprep.subr.mxu0 0.0
    %1851 = vmatpush2.msra.mxu0 0.0
    %1852 = vmatprep.subr.mxu0 0.0
    %1853 = vmatpush2.msra.mxu0 0.0
    %1854 = vmatprep.subr.mxu0 0.0
    %1855 = vmatpush2.msra.mxu0 0.0
    %1856 = vmatprep.subr.mxu0 0.0
    %1857 = vmatpush2.msra.mxu0 0.0
    %1858 = vmatprep.subr.mxu0 0.0
    %1859 = vmatpush2.msra.mxu0 0.0
    %1860 = vmatprep.subr.mxu0 0.0
    %1861 = vmatpush2.msra.mxu0 0.0
    %1862 = vmatprep.subr.mxu0 0.0
    %1863 = vmatpush2.msra.mxu0 0.0
    %1864 = vmatprep.mubr.f32.mxu0 0.0
    %1865 = vmatmul.mubr.f32.gmra.mxu0 %v1783
    %v1866 = vpop.f32.mrf.mxu0
    %v1867 = vadd.f32 %v392, %v1866
    %v1868 = vpop.f32.mrf.mxu0
    %1869 = vdwg.mxu0
    %v1870 = vld [vmem:[#allocation12] sm:$0xff]
    %v1871 = vld [vmem:[#allocation12 + $0x8] sm:$0xff]
    %v1872 = vld [vmem:[#allocation12 + $0x10] sm:$0xff]
    %v1873 = vld [vmem:[#allocation12 + $0x18] sm:$0xff]
    %v1874 = vld [vmem:[#allocation12 + $0x20] sm:$0xff]
    %v1875 = vld [vmem:[#allocation12 + $0x28] sm:$0xff]
    %v1876 = vld [vmem:[#allocation12 + $0x30] sm:$0xff]
    %v1877 = vld [vmem:[#allocation12 + $0x38] sm:$0xff]
    %v1878 = vld [vmem:[#allocation12 + $0x40] sm:$0xff]
    %v1879 = vld [vmem:[#allocation12 + $0x48] sm:$0xff]
    %v1880 = vld [vmem:[#allocation12 + $0x50] sm:$0xff]
    %v1881 = vld [vmem:[#allocation12 + $0x58] sm:$0xff]
    %v1882 = vld [vmem:[#allocation12 + $0x60] sm:$0xff]
    %v1883 = vld [vmem:[#allocation12 + $0x68] sm:$0xff]
    %v1884 = vld [vmem:[#allocation12 + $0x70] sm:$0xff]
    %v1885 = vld [vmem:[#allocation12 + $0x78] sm:$0xff]
    %1886 = vmatprep.subr.mxu0 0.0
    %1887 = vmatpush1.msra.mxu0 %v1885
    %1888 = vmatprep.subr.mxu0 0.0
    %1889 = vmatpush1.msra.mxu0 %v1884
    %1890 = vmatprep.subr.mxu0 0.0
    %1891 = vmatpush1.msra.mxu0 %v1883
    %1892 = vmatprep.subr.mxu0 0.0
    %1893 = vmatpush1.msra.mxu0 %v1882
    %1894 = vmatprep.subr.mxu0 0.0
    %1895 = vmatpush1.msra.mxu0 %v1881
    %1896 = vmatprep.subr.mxu0 0.0
    %1897 = vmatpush1.msra.mxu0 %v1880
    %1898 = vmatprep.subr.mxu0 0.0
    %1899 = vmatpush1.msra.mxu0 %v1879
    %1900 = vmatprep.subr.mxu0 0.0
    %1901 = vmatpush1.msra.mxu0 %v1878
    %1902 = vmatprep.subr.mxu0 0.0
    %1903 = vmatpush1.msra.mxu0 %v1877
    %1904 = vmatprep.subr.mxu0 0.0
    %1905 = vmatpush1.msra.mxu0 %v1876
    %1906 = vmatprep.subr.mxu0 0.0
    %1907 = vmatpush1.msra.mxu0 %v1875
    %1908 = vmatprep.subr.mxu0 0.0
    %1909 = vmatpush1.msra.mxu0 %v1874
    %1910 = vmatprep.subr.mxu0 0.0
    %1911 = vmatpush1.msra.mxu0 %v1873
    %1912 = vmatprep.subr.mxu0 0.0
    %1913 = vmatpush1.msra.mxu0 %v1872
    %1914 = vmatprep.subr.mxu0 0.0
    %1915 = vmatpush1.msra.mxu0 %v1871
    %1916 = vmatprep.subr.mxu0 0.0
    %1917 = vmatpush1.msra.mxu0 %v1870
    %1918 = vmatprep.subr.mxu0 0.0
    %1919 = vmatpush2.msra.mxu0 0.0
    %1920 = vmatprep.subr.mxu0 0.0
    %1921 = vmatpush2.msra.mxu0 0.0
    %1922 = vmatprep.subr.mxu0 0.0
    %1923 = vmatpush2.msra.mxu0 0.0
    %1924 = vmatprep.subr.mxu0 0.0
    %1925 = vmatpush2.msra.mxu0 0.0
    %1926 = vmatprep.subr.mxu0 0.0
    %1927 = vmatpush2.msra.mxu0 0.0
    %1928 = vmatprep.subr.mxu0 0.0
    %1929 = vmatpush2.msra.mxu0 0.0
    %1930 = vmatprep.subr.mxu0 0.0
    %1931 = vmatpush2.msra.mxu0 0.0
    %1932 = vmatprep.subr.mxu0 0.0
    %1933 = vmatpush2.msra.mxu0 0.0
    %1934 = vmatprep.subr.mxu0 0.0
    %1935 = vmatpush2.msra.mxu0 0.0
    %1936 = vmatprep.subr.mxu0 0.0
    %1937 = vmatpush2.msra.mxu0 0.0
    %1938 = vmatprep.subr.mxu0 0.0
    %1939 = vmatpush2.msra.mxu0 0.0
    %1940 = vmatprep.subr.mxu0 0.0
    %1941 = vmatpush2.msra.mxu0 0.0
    %1942 = vmatprep.subr.mxu0 0.0
    %1943 = vmatpush2.msra.mxu0 0.0
    %1944 = vmatprep.subr.mxu0 0.0
    %1945 = vmatpush2.msra.mxu0 0.0
    %1946 = vmatprep.subr.mxu0 0.0
    %1947 = vmatpush2.msra.mxu0 0.0
    %1948 = vmatprep.subr.mxu0 0.0
    %1949 = vmatpush2.msra.mxu0 0.0
    %1950 = vmatprep.mubr.f32.mxu0 0.0
    %1951 = vmatmul.mubr.f32.gmra.mxu0 %v1607
    %v1952 = vpop.f32.mrf.mxu0
    %v1953 = vadd.f32 0.0, %v1952
    %v1954 = vpop.f32.mrf.mxu0
    %1955 = vdwg.mxu0
    %v1956 = vadd.f32 %v1867, %v1953
    %v1957 = vtanh.pop %v1956
    %v1958 = vld [vmem:[#allocation14] sm:$0xff]
    %v1959 = vld [vmem:[#allocation14 + $0x8] sm:$0xff]
    %v1960 = vld [vmem:[#allocation14 + $0x10] sm:$0xff]
    %v1961 = vld [vmem:[#allocation14 + $0x18] sm:$0xff]
    %v1962 = vld [vmem:[#allocation14 + $0x20] sm:$0xff]
    %v1963 = vld [vmem:[#allocation14 + $0x28] sm:$0xff]
    %v1964 = vld [vmem:[#allocation14 + $0x30] sm:$0xff]
    %v1965 = vld [vmem:[#allocation14 + $0x38] sm:$0xff]
    %v1966 = vld [vmem:[#allocation14 + $0x40] sm:$0xff]
    %v1967 = vld [vmem:[#allocation14 + $0x48] sm:$0xff]
    %v1968 = vld [vmem:[#allocation14 + $0x50] sm:$0xff]
    %v1969 = vld [vmem:[#allocation14 + $0x58] sm:$0xff]
    %v1970 = vld [vmem:[#allocation14 + $0x60] sm:$0xff]
    %v1971 = vld [vmem:[#allocation14 + $0x68] sm:$0xff]
    %v1972 = vld [vmem:[#allocation14 + $0x70] sm:$0xff]
    %v1973 = vld [vmem:[#allocation14 + $0x78] sm:$0xff]
    %1974 = vmatprep.subr.mxu0 0.0
    %1975 = vmatpush1.msra.mxu0 %v1973
    %1976 = vmatprep.subr.mxu0 0.0
    %1977 = vmatpush1.msra.mxu0 %v1972
    %1978 = vmatprep.subr.mxu0 0.0
    %1979 = vmatpush1.msra.mxu0 %v1971
    %1980 = vmatprep.subr.mxu0 0.0
    %1981 = vmatpush1.msra.mxu0 %v1970
    %1982 = vmatprep.subr.mxu0 0.0
    %1983 = vmatpush1.msra.mxu0 %v1969
    %1984 = vmatprep.subr.mxu0 0.0
    %1985 = vmatpush1.msra.mxu0 %v1968
    %1986 = vmatprep.subr.mxu0 0.0
    %1987 = vmatpush1.msra.mxu0 %v1967
    %1988 = vmatprep.subr.mxu0 0.0
    %1989 = vmatpush1.msra.mxu0 %v1966
    %1990 = vmatprep.subr.mxu0 0.0
    %1991 = vmatpush1.msra.mxu0 %v1965
    %1992 = vmatprep.subr.mxu0 0.0
    %1993 = vmatpush1.msra.mxu0 %v1964
    %1994 = vmatprep.subr.mxu0 0.0
    %1995 = vmatpush1.msra.mxu0 %v1963
    %1996 = vmatprep.subr.mxu0 0.0
    %1997 = vmatpush1.msra.mxu0 %v1962
    %1998 = vmatprep.subr.mxu0 0.0
    %1999 = vmatpush1.msra.mxu0 %v1961
    %2000 = vmatprep.subr.mxu0 0.0
    %2001 = vmatpush1.msra.mxu0 %v1960
    %2002 = vmatprep.subr.mxu0 0.0
    %2003 = vmatpush1.msra.mxu0 %v1959
    %2004 = vmatprep.subr.mxu0 0.0
    %2005 = vmatpush1.msra.mxu0 %v1958
    %2006 = vmatprep.subr.mxu0 0.0
    %2007 = vmatpush2.msra.mxu0 0.0
    %2008 = vmatprep.subr.mxu0 0.0
    %2009 = vmatpush2.msra.mxu0 0.0
    %2010 = vmatprep.subr.mxu0 0.0
    %2011 = vmatpush2.msra.mxu0 0.0
    %2012 = vmatprep.subr.mxu0 0.0
    %2013 = vmatpush2.msra.mxu0 0.0
    %2014 = vmatprep.subr.mxu0 0.0
    %2015 = vmatpush2.msra.mxu0 0.0
    %2016 = vmatprep.subr.mxu0 0.0
    %2017 = vmatpush2.msra.mxu0 0.0
    %2018 = vmatprep.subr.mxu0 0.0
    %2019 = vmatpush2.msra.mxu0 0.0
    %2020 = vmatprep.subr.mxu0 0.0
    %2021 = vmatpush2.msra.mxu0 0.0
    %2022 = vmatprep.subr.mxu0 0.0
    %2023 = vmatpush2.msra.mxu0 0.0
    %2024 = vmatprep.subr.mxu0 0.0
    %2025 = vmatpush2.msra.mxu0 0.0
    %2026 = vmatprep.subr.mxu0 0.0
    %2027 = vmatpush2.msra.mxu0 0.0
    %2028 = vmatprep.subr.mxu0 0.0
    %2029 = vmatpush2.msra.mxu0 0.0
    %2030 = vmatprep.subr.mxu0 0.0
    %2031 = vmatpush2.msra.mxu0 0.0
    %2032 = vmatprep.subr.mxu0 0.0
    %2033 = vmatpush2.msra.mxu0 0.0
    %2034 = vmatprep.subr.mxu0 0.0
    %2035 = vmatpush2.msra.mxu0 0.0
    %2036 = vmatprep.subr.mxu0 0.0
    %2037 = vmatpush2.msra.mxu0 0.0
    %2038 = vmatprep.mubr.f32.mxu0 0.0
    %2039 = vmatmul.mubr.f32.gmra.mxu0 %v1957
    %v2040 = vpop.f32.mrf.mxu0
    %v2041 = vadd.f32 %v572, %v2040
    %v2042 = vpop.f32.mrf.mxu0
    %2043 = vdwg.mxu0
    %2044 = vst [vmem:[#allocation15 + $0x20] sm:$0xff] %v2041
    %v2045 = vld [vmem:[#allocation2 + $0x28] sm:$0xff]
    %v2046 = vld [vmem:[#allocation9] sm:$0xff]
    %v2047 = vld [vmem:[#allocation9 + $0x8] sm:$0xff]
    %v2048 = vld [vmem:[#allocation9 + $0x10] sm:$0xff]
    %v2049 = vld [vmem:[#allocation9 + $0x18] sm:$0xff]
    %v2050 = vld [vmem:[#allocation9 + $0x20] sm:$0xff]
    %v2051 = vld [vmem:[#allocation9 + $0x28] sm:$0xff]
    %v2052 = vld [vmem:[#allocation9 + $0x30] sm:$0xff]
    %v2053 = vld [vmem:[#allocation9 + $0x38] sm:$0xff]
    %v2054 = vld [vmem:[#allocation9 + $0x40] sm:$0xff]
    %v2055 = vld [vmem:[#allocation9 + $0x48] sm:$0xff]
    %v2056 = vld [vmem:[#allocation9 + $0x50] sm:$0xff]
    %v2057 = vld [vmem:[#allocation9 + $0x58] sm:$0xff]
    %v2058 = vld [vmem:[#allocation9 + $0x60] sm:$0xff]
    %v2059 = vld [vmem:[#allocation9 + $0x68] sm:$0xff]
    %v2060 = vld [vmem:[#allocation9 + $0x70] sm:$0xff]
    %v2061 = vld [vmem:[#allocation9 + $0x78] sm:$0xff]
    %2062 = vmatprep.subr.mxu0 0.0
    %2063 = vmatpush1.msra.mxu0 %v2061
    %2064 = vmatprep.subr.mxu0 0.0
    %2065 = vmatpush1.msra.mxu0 %v2060
    %2066 = vmatprep.subr.mxu0 0.0
    %2067 = vmatpush1.msra.mxu0 %v2059
    %2068 = vmatprep.subr.mxu0 0.0
    %2069 = vmatpush1.msra.mxu0 %v2058
    %2070 = vmatprep.subr.mxu0 0.0
    %2071 = vmatpush1.msra.mxu0 %v2057
    %2072 = vmatprep.subr.mxu0 0.0
    %2073 = vmatpush1.msra.mxu0 %v2056
    %2074 = vmatprep.subr.mxu0 0.0
    %2075 = vmatpush1.msra.mxu0 %v2055
    %2076 = vmatprep.subr.mxu0 0.0
    %2077 = vmatpush1.msra.mxu0 %v2054
    %2078 = vmatprep.subr.mxu0 0.0
    %2079 = vmatpush1.msra.mxu0 %v2053
    %2080 = vmatprep.subr.mxu0 0.0
    %2081 = vmatpush1.msra.mxu0 %v2052
    %2082 = vmatprep.subr.mxu0 0.0
    %2083 = vmatpush1.msra.mxu0 %v2051
    %2084 = vmatprep.subr.mxu0 0.0
    %2085 = vmatpush1.msra.mxu0 %v2050
    %2086 = vmatprep.subr.mxu0 0.0
    %2087 = vmatpush1.msra.mxu0 %v2049
    %2088 = vmatprep.subr.mxu0 0.0
    %2089 = vmatpush1.msra.mxu0 %v2048
    %2090 = vmatprep.subr.mxu0 0.0
    %2091 = vmatpush1.msra.mxu0 %v2047
    %2092 = vmatprep.subr.mxu0 0.0
    %2093 = vmatpush1.msra.mxu0 %v2046
    %2094 = vmatprep.subr.mxu0 0.0
    %2095 = vmatpush2.msra.mxu0 0.0
    %2096 = vmatprep.subr.mxu0 0.0
    %2097 = vmatpush2.msra.mxu0 0.0
    %2098 = vmatprep.subr.mxu0 0.0
    %2099 = vmatpush2.msra.mxu0 0.0
    %2100 = vmatprep.subr.mxu0 0.0
    %2101 = vmatpush2.msra.mxu0 0.0
    %2102 = vmatprep.subr.mxu0 0.0
    %2103 = vmatpush2.msra.mxu0 0.0
    %2104 = vmatprep.subr.mxu0 0.0
    %2105 = vmatpush2.msra.mxu0 0.0
    %2106 = vmatprep.subr.mxu0 0.0
    %2107 = vmatpush2.msra.mxu0 0.0
    %2108 = vmatprep.subr.mxu0 0.0
    %2109 = vmatpush2.msra.mxu0 0.0
    %2110 = vmatprep.subr.mxu0 0.0
    %2111 = vmatpush2.msra.mxu0 0.0
    %2112 = vmatprep.subr.mxu0 0.0
    %2113 = vmatpush2.msra.mxu0 0.0
    %2114 = vmatprep.subr.mxu0 0.0
    %2115 = vmatpush2.msra.mxu0 0.0
    %2116 = vmatprep.subr.mxu0 0.0
    %2117 = vmatpush2.msra.mxu0 0.0
    %2118 = vmatprep.subr.mxu0 0.0
    %2119 = vmatpush2.msra.mxu0 0.0
    %2120 = vmatprep.subr.mxu0 0.0
    %2121 = vmatpush2.msra.mxu0 0.0
    %2122 = vmatprep.subr.mxu0 0.0
    %2123 = vmatpush2.msra.mxu0 0.0
    %2124 = vmatprep.subr.mxu0 0.0
    %2125 = vmatpush2.msra.mxu0 0.0
    %2126 = vmatprep.mubr.f32.mxu0 0.0
    %2127 = vmatmul.mubr.f32.gmra.mxu0 %v1783
    %v2128 = vpop.f32.mrf.mxu0
    %v2129 = vadd.f32 0.0, %v2128
    %v2130 = vpop.f32.mrf.mxu0
    %2131 = vdwg.mxu0
    %v2132 = vadd.f32 %v2045, %v2129
    %v2133 = vtanh.pop %v2132
    %v2134 = vld [vmem:[#allocation11] sm:$0xff]
    %v2135 = vld [vmem:[#allocation11 + $0x8] sm:$0xff]
    %v2136 = vld [vmem:[#allocation11 + $0x10] sm:$0xff]
    %v2137 = vld [vmem:[#allocation11 + $0x18] sm:$0xff]
    %v2138 = vld [vmem:[#allocation11 + $0x20] sm:$0xff]
    %v2139 = vld [vmem:[#allocation11 + $0x28] sm:$0xff]
    %v2140 = vld [vmem:[#allocation11 + $0x30] sm:$0xff]
    %v2141 = vld [vmem:[#allocation11 + $0x38] sm:$0xff]
    %v2142 = vld [vmem:[#allocation11 + $0x40] sm:$0xff]
    %v2143 = vld [vmem:[#allocation11 + $0x48] sm:$0xff]
    %v2144 = vld [vmem:[#allocation11 + $0x50] sm:$0xff]
    %v2145 = vld [vmem:[#allocation11 + $0x58] sm:$0xff]
    %v2146 = vld [vmem:[#allocation11 + $0x60] sm:$0xff]
    %v2147 = vld [vmem:[#allocation11 + $0x68] sm:$0xff]
    %v2148 = vld [vmem:[#allocation11 + $0x70] sm:$0xff]
    %v2149 = vld [vmem:[#allocation11 + $0x78] sm:$0xff]
    %2150 = vmatprep.subr.mxu0 0.0
    %2151 = vmatpush1.msra.mxu0 %v2149
    %2152 = vmatprep.subr.mxu0 0.0
    %2153 = vmatpush1.msra.mxu0 %v2148
    %2154 = vmatprep.subr.mxu0 0.0
    %2155 = vmatpush1.msra.mxu0 %v2147
    %2156 = vmatprep.subr.mxu0 0.0
    %2157 = vmatpush1.msra.mxu0 %v2146
    %2158 = vmatprep.subr.mxu0 0.0
    %2159 = vmatpush1.msra.mxu0 %v2145
    %2160 = vmatprep.subr.mxu0 0.0
    %2161 = vmatpush1.msra.mxu0 %v2144
    %2162 = vmatprep.subr.mxu0 0.0
    %2163 = vmatpush1.msra.mxu0 %v2143
    %2164 = vmatprep.subr.mxu0 0.0
    %2165 = vmatpush1.msra.mxu0 %v2142
    %2166 = vmatprep.subr.mxu0 0.0
    %2167 = vmatpush1.msra.mxu0 %v2141
    %2168 = vmatprep.subr.mxu0 0.0
    %2169 = vmatpush1.msra.mxu0 %v2140
    %2170 = vmatprep.subr.mxu0 0.0
    %2171 = vmatpush1.msra.mxu0 %v2139
    %2172 = vmatprep.subr.mxu0 0.0
    %2173 = vmatpush1.msra.mxu0 %v2138
    %2174 = vmatprep.subr.mxu0 0.0
    %2175 = vmatpush1.msra.mxu0 %v2137
    %2176 = vmatprep.subr.mxu0 0.0
    %2177 = vmatpush1.msra.mxu0 %v2136
    %2178 = vmatprep.subr.mxu0 0.0
    %2179 = vmatpush1.msra.mxu0 %v2135
    %2180 = vmatprep.subr.mxu0 0.0
    %2181 = vmatpush1.msra.mxu0 %v2134
    %2182 = vmatprep.subr.mxu0 0.0
    %2183 = vmatpush2.msra.mxu0 0.0
    %2184 = vmatprep.subr.mxu0 0.0
    %2185 = vmatpush2.msra.mxu0 0.0
    %2186 = vmatprep.subr.mxu0 0.0
    %2187 = vmatpush2.msra.mxu0 0.0
    %2188 = vmatprep.subr.mxu0 0.0
    %2189 = vmatpush2.msra.mxu0 0.0
    %2190 = vmatprep.subr.mxu0 0.0
    %2191 = vmatpush2.msra.mxu0 0.0
    %2192 = vmatprep.subr.mxu0 0.0
    %2193 = vmatpush2.msra.mxu0 0.0
    %2194 = vmatprep.subr.mxu0 0.0
    %2195 = vmatpush2.msra.mxu0 0.0
    %2196 = vmatprep.subr.mxu0 0.0
    %2197 = vmatpush2.msra.mxu0 0.0
    %2198 = vmatprep.subr.mxu0 0.0
    %2199 = vmatpush2.msra.mxu0 0.0
    %2200 = vmatprep.subr.mxu0 0.0
    %2201 = vmatpush2.msra.mxu0 0.0
    %2202 = vmatprep.subr.mxu0 0.0
    %2203 = vmatpush2.msra.mxu0 0.0
    %2204 = vmatprep.subr.mxu0 0.0
    %2205 = vmatpush2.msra.mxu0 0.0
    %2206 = vmatprep.subr.mxu0 0.0
    %2207 = vmatpush2.msra.mxu0 0.0
    %2208 = vmatprep.subr.mxu0 0.0
    %2209 = vmatpush2.msra.mxu0 0.0
    %2210 = vmatprep.subr.mxu0 0.0
    %2211 = vmatpush2.msra.mxu0 0.0
    %2212 = vmatprep.subr.mxu0 0.0
    %2213 = vmatpush2.msra.mxu0 0.0
    %2214 = vmatprep.mubr.f32.mxu0 0.0
    %2215 = vmatmul.mubr.f32.gmra.mxu0 %v2133
    %v2216 = vpop.f32.mrf.mxu0
    %v2217 = vadd.f32 %v392, %v2216
    %v2218 = vpop.f32.mrf.mxu0
    %2219 = vdwg.mxu0
    %v2220 = vld [vmem:[#allocation12] sm:$0xff]
    %v2221 = vld [vmem:[#allocation12 + $0x8] sm:$0xff]
    %v2222 = vld [vmem:[#allocation12 + $0x10] sm:$0xff]
    %v2223 = vld [vmem:[#allocation12 + $0x18] sm:$0xff]
    %v2224 = vld [vmem:[#allocation12 + $0x20] sm:$0xff]
    %v2225 = vld [vmem:[#allocation12 + $0x28] sm:$0xff]
    %v2226 = vld [vmem:[#allocation12 + $0x30] sm:$0xff]
    %v2227 = vld [vmem:[#allocation12 + $0x38] sm:$0xff]
    %v2228 = vld [vmem:[#allocation12 + $0x40] sm:$0xff]
    %v2229 = vld [vmem:[#allocation12 + $0x48] sm:$0xff]
    %v2230 = vld [vmem:[#allocation12 + $0x50] sm:$0xff]
    %v2231 = vld [vmem:[#allocation12 + $0x58] sm:$0xff]
    %v2232 = vld [vmem:[#allocation12 + $0x60] sm:$0xff]
    %v2233 = vld [vmem:[#allocation12 + $0x68] sm:$0xff]
    %v2234 = vld [vmem:[#allocation12 + $0x70] sm:$0xff]
    %v2235 = vld [vmem:[#allocation12 + $0x78] sm:$0xff]
    %2236 = vmatprep.subr.mxu0 0.0
    %2237 = vmatpush1.msra.mxu0 %v2235
    %2238 = vmatprep.subr.mxu0 0.0
    %2239 = vmatpush1.msra.mxu0 %v2234
    %2240 = vmatprep.subr.mxu0 0.0
    %2241 = vmatpush1.msra.mxu0 %v2233
    %2242 = vmatprep.subr.mxu0 0.0
    %2243 = vmatpush1.msra.mxu0 %v2232
    %2244 = vmatprep.subr.mxu0 0.0
    %2245 = vmatpush1.msra.mxu0 %v2231
    %2246 = vmatprep.subr.mxu0 0.0
    %2247 = vmatpush1.msra.mxu0 %v2230
    %2248 = vmatprep.subr.mxu0 0.0
    %2249 = vmatpush1.msra.mxu0 %v2229
    %2250 = vmatprep.subr.mxu0 0.0
    %2251 = vmatpush1.msra.mxu0 %v2228
    %2252 = vmatprep.subr.mxu0 0.0
    %2253 = vmatpush1.msra.mxu0 %v2227
    %2254 = vmatprep.subr.mxu0 0.0
    %2255 = vmatpush1.msra.mxu0 %v2226
    %2256 = vmatprep.subr.mxu0 0.0
    %2257 = vmatpush1.msra.mxu0 %v2225
    %2258 = vmatprep.subr.mxu0 0.0
    %2259 = vmatpush1.msra.mxu0 %v2224
    %2260 = vmatprep.subr.mxu0 0.0
    %2261 = vmatpush1.msra.mxu0 %v2223
    %2262 = vmatprep.subr.mxu0 0.0
    %2263 = vmatpush1.msra.mxu0 %v2222
    %2264 = vmatprep.subr.mxu0 0.0
    %2265 = vmatpush1.msra.mxu0 %v2221
    %2266 = vmatprep.subr.mxu0 0.0
    %2267 = vmatpush1.msra.mxu0 %v2220
    %2268 = vmatprep.subr.mxu0 0.0
    %2269 = vmatpush2.msra.mxu0 0.0
    %2270 = vmatprep.subr.mxu0 0.0
    %2271 = vmatpush2.msra.mxu0 0.0
    %2272 = vmatprep.subr.mxu0 0.0
    %2273 = vmatpush2.msra.mxu0 0.0
    %2274 = vmatprep.subr.mxu0 0.0
    %2275 = vmatpush2.msra.mxu0 0.0
    %2276 = vmatprep.subr.mxu0 0.0
    %2277 = vmatpush2.msra.mxu0 0.0
    %2278 = vmatprep.subr.mxu0 0.0
    %2279 = vmatpush2.msra.mxu0 0.0
    %2280 = vmatprep.subr.mxu0 0.0
    %2281 = vmatpush2.msra.mxu0 0.0
    %2282 = vmatprep.subr.mxu0 0.0
    %2283 = vmatpush2.msra.mxu0 0.0
    %2284 = vmatprep.subr.mxu0 0.0
    %2285 = vmatpush2.msra.mxu0 0.0
    %2286 = vmatprep.subr.mxu0 0.0
    %2287 = vmatpush2.msra.mxu0 0.0
    %2288 = vmatprep.subr.mxu0 0.0
    %2289 = vmatpush2.msra.mxu0 0.0
    %2290 = vmatprep.subr.mxu0 0.0
    %2291 = vmatpush2.msra.mxu0 0.0
    %2292 = vmatprep.subr.mxu0 0.0
    %2293 = vmatpush2.msra.mxu0 0.0
    %2294 = vmatprep.subr.mxu0 0.0
    %2295 = vmatpush2.msra.mxu0 0.0
    %2296 = vmatprep.subr.mxu0 0.0
    %2297 = vmatpush2.msra.mxu0 0.0
    %2298 = vmatprep.subr.mxu0 0.0
    %2299 = vmatpush2.msra.mxu0 0.0
    %2300 = vmatprep.mubr.f32.mxu0 0.0
    %2301 = vmatmul.mubr.f32.gmra.mxu0 %v1957
    %v2302 = vpop.f32.mrf.mxu0
    %v2303 = vadd.f32 0.0, %v2302
    %v2304 = vpop.f32.mrf.mxu0
    %2305 = vdwg.mxu0
    %v2306 = vadd.f32 %v2217, %v2303
    %v2307 = vtanh.pop %v2306
    %v2308 = vld [vmem:[#allocation14] sm:$0xff]
    %v2309 = vld [vmem:[#allocation14 + $0x8] sm:$0xff]
    %v2310 = vld [vmem:[#allocation14 + $0x10] sm:$0xff]
    %v2311 = vld [vmem:[#allocation14 + $0x18] sm:$0xff]
    %v2312 = vld [vmem:[#allocation14 + $0x20] sm:$0xff]
    %v2313 = vld [vmem:[#allocation14 + $0x28] sm:$0xff]
    %v2314 = vld [vmem:[#allocation14 + $0x30] sm:$0xff]
    %v2315 = vld [vmem:[#allocation14 + $0x38] sm:$0xff]
    %v2316 = vld [vmem:[#allocation14 + $0x40] sm:$0xff]
    %v2317 = vld [vmem:[#allocation14 + $0x48] sm:$0xff]
    %v2318 = vld [vmem:[#allocation14 + $0x50] sm:$0xff]
    %v2319 = vld [vmem:[#allocation14 + $0x58] sm:$0xff]
    %v2320 = vld [vmem:[#allocation14 + $0x60] sm:$0xff]
    %v2321 = vld [vmem:[#allocation14 + $0x68] sm:$0xff]
    %v2322 = vld [vmem:[#allocation14 + $0x70] sm:$0xff]
    %v2323 = vld [vmem:[#allocation14 + $0x78] sm:$0xff]
    %2324 = vmatprep.subr.mxu0 0.0
    %2325 = vmatpush1.msra.mxu0 %v2323
    %2326 = vmatprep.subr.mxu0 0.0
    %2327 = vmatpush1.msra.mxu0 %v2322
    %2328 = vmatprep.subr.mxu0 0.0
    %2329 = vmatpush1.msra.mxu0 %v2321
    %2330 = vmatprep.subr.mxu0 0.0
    %2331 = vmatpush1.msra.mxu0 %v2320
    %2332 = vmatprep.subr.mxu0 0.0
    %2333 = vmatpush1.msra.mxu0 %v2319
    %2334 = vmatprep.subr.mxu0 0.0
    %2335 = vmatpush1.msra.mxu0 %v2318
    %2336 = vmatprep.subr.mxu0 0.0
    %2337 = vmatpush1.msra.mxu0 %v2317
    %2338 = vmatprep.subr.mxu0 0.0
    %2339 = vmatpush1.msra.mxu0 %v2316
    %2340 = vmatprep.subr.mxu0 0.0
    %2341 = vmatpush1.msra.mxu0 %v2315
    %2342 = vmatprep.subr.mxu0 0.0
    %2343 = vmatpush1.msra.mxu0 %v2314
    %2344 = vmatprep.subr.mxu0 0.0
    %2345 = vmatpush1.msra.mxu0 %v2313
    %2346 = vmatprep.subr.mxu0 0.0
    %2347 = vmatpush1.msra.mxu0 %v2312
    %2348 = vmatprep.subr.mxu0 0.0
    %2349 = vmatpush1.msra.mxu0 %v2311
    %2350 = vmatprep.subr.mxu0 0.0
    %2351 = vmatpush1.msra.mxu0 %v2310
    %2352 = vmatprep.subr.mxu0 0.0
    %2353 = vmatpush1.msra.mxu0 %v2309
    %2354 = vmatprep.subr.mxu0 0.0
    %2355 = vmatpush1.msra.mxu0 %v2308
    %2356 = vmatprep.subr.mxu0 0.0
    %2357 = vmatpush2.msra.mxu0 0.0
    %2358 = vmatprep.subr.mxu0 0.0
    %2359 = vmatpush2.msra.mxu0 0.0
    %2360 = vmatprep.subr.mxu0 0.0
    %2361 = vmatpush2.msra.mxu0 0.0
    %2362 = vmatprep.subr.mxu0 0.0
    %2363 = vmatpush2.msra.mxu0 0.0
    %2364 = vmatprep.subr.mxu0 0.0
    %2365 = vmatpush2.msra.mxu0 0.0
    %2366 = vmatprep.subr.mxu0 0.0
    %2367 = vmatpush2.msra.mxu0 0.0
    %2368 = vmatprep.subr.mxu0 0.0
    %2369 = vmatpush2.msra.mxu0 0.0
    %2370 = vmatprep.subr.mxu0 0.0
    %2371 = vmatpush2.msra.mxu0 0.0
    %2372 = vmatprep.subr.mxu0 0.0
    %2373 = vmatpush2.msra.mxu0 0.0
    %2374 = vmatprep.subr.mxu0 0.0
    %2375 = vmatpush2.msra.mxu0 0.0
    %2376 = vmatprep.subr.mxu0 0.0
    %2377 = vmatpush2.msra.mxu0 0.0
    %2378 = vmatprep.subr.mxu0 0.0
    %2379 = vmatpush2.msra.mxu0 0.0
    %2380 = vmatprep.subr.mxu0 0.0
    %2381 = vmatpush2.msra.mxu0 0.0
    %2382 = vmatprep.subr.mxu0 0.0
    %2383 = vmatpush2.msra.mxu0 0.0
    %2384 = vmatprep.subr.mxu0 0.0
    %2385 = vmatpush2.msra.mxu0 0.0
    %2386 = vmatprep.subr.mxu0 0.0
    %2387 = vmatpush2.msra.mxu0 0.0
    %2388 = vmatprep.mubr.f32.mxu0 0.0
    %2389 = vmatmul.mubr.f32.gmra.mxu0 %v2307
    %v2390 = vpop.f32.mrf.mxu0
    %v2391 = vadd.f32 %v572, %v2390
    %v2392 = vpop.f32.mrf.mxu0
    %2393 = vdwg.mxu0
    %2394 = vst [vmem:[#allocation15 + $0x28] sm:$0xff] %v2391
    %v2395 = vld [vmem:[#allocation2 + $0x30] sm:$0xff]
    %v2396 = vld [vmem:[#allocation9] sm:$0xff]
    %v2397 = vld [vmem:[#allocation9 + $0x8] sm:$0xff]
    %v2398 = vld [vmem:[#allocation9 + $0x10] sm:$0xff]
    %v2399 = vld [vmem:[#allocation9 + $0x18] sm:$0xff]
    %v2400 = vld [vmem:[#allocation9 + $0x20] sm:$0xff]
    %v2401 = vld [vmem:[#allocation9 + $0x28] sm:$0xff]
    %v2402 = vld [vmem:[#allocation9 + $0x30] sm:$0xff]
    %v2403 = vld [vmem:[#allocation9 + $0x38] sm:$0xff]
    %v2404 = vld [vmem:[#allocation9 + $0x40] sm:$0xff]
    %v2405 = vld [vmem:[#allocation9 + $0x48] sm:$0xff]
    %v2406 = vld [vmem:[#allocation9 + $0x50] sm:$0xff]
    %v2407 = vld [vmem:[#allocation9 + $0x58] sm:$0xff]
    %v2408 = vld [vmem:[#allocation9 + $0x60] sm:$0xff]
    %v2409 = vld [vmem:[#allocation9 + $0x68] sm:$0xff]
    %v2410 = vld [vmem:[#allocation9 + $0x70] sm:$0xff]
    %v2411 = vld [vmem:[#allocation9 + $0x78] sm:$0xff]
    %2412 = vmatprep.subr.mxu0 0.0
    %2413 = vmatpush1.msra.mxu0 %v2411
    %2414 = vmatprep.subr.mxu0 0.0
    %2415 = vmatpush1.msra.mxu0 %v2410
    %2416 = vmatprep.subr.mxu0 0.0
    %2417 = vmatpush1.msra.mxu0 %v2409
    %2418 = vmatprep.subr.mxu0 0.0
    %2419 = vmatpush1.msra.mxu0 %v2408
    %2420 = vmatprep.subr.mxu0 0.0
    %2421 = vmatpush1.msra.mxu0 %v2407
    %2422 = vmatprep.subr.mxu0 0.0
    %2423 = vmatpush1.msra.mxu0 %v2406
    %2424 = vmatprep.subr.mxu0 0.0
    %2425 = vmatpush1.msra.mxu0 %v2405
    %2426 = vmatprep.subr.mxu0 0.0
    %2427 = vmatpush1.msra.mxu0 %v2404
    %2428 = vmatprep.subr.mxu0 0.0
    %2429 = vmatpush1.msra.mxu0 %v2403
    %2430 = vmatprep.subr.mxu0 0.0
    %2431 = vmatpush1.msra.mxu0 %v2402
    %2432 = vmatprep.subr.mxu0 0.0
    %2433 = vmatpush1.msra.mxu0 %v2401
    %2434 = vmatprep.subr.mxu0 0.0
    %2435 = vmatpush1.msra.mxu0 %v2400
    %2436 = vmatprep.subr.mxu0 0.0
    %2437 = vmatpush1.msra.mxu0 %v2399
    %2438 = vmatprep.subr.mxu0 0.0
    %2439 = vmatpush1.msra.mxu0 %v2398
    %2440 = vmatprep.subr.mxu0 0.0
    %2441 = vmatpush1.msra.mxu0 %v2397
    %2442 = vmatprep.subr.mxu0 0.0
    %2443 = vmatpush1.msra.mxu0 %v2396
    %2444 = vmatprep.subr.mxu0 0.0
    %2445 = vmatpush2.msra.mxu0 0.0
    %2446 = vmatprep.subr.mxu0 0.0
    %2447 = vmatpush2.msra.mxu0 0.0
    %2448 = vmatprep.subr.mxu0 0.0
    %2449 = vmatpush2.msra.mxu0 0.0
    %2450 = vmatprep.subr.mxu0 0.0
    %2451 = vmatpush2.msra.mxu0 0.0
    %2452 = vmatprep.subr.mxu0 0.0
    %2453 = vmatpush2.msra.mxu0 0.0
    %2454 = vmatprep.subr.mxu0 0.0
    %2455 = vmatpush2.msra.mxu0 0.0
    %2456 = vmatprep.subr.mxu0 0.0
    %2457 = vmatpush2.msra.mxu0 0.0
    %2458 = vmatprep.subr.mxu0 0.0
    %2459 = vmatpush2.msra.mxu0 0.0
    %2460 = vmatprep.subr.mxu0 0.0
    %2461 = vmatpush2.msra.mxu0 0.0
    %2462 = vmatprep.subr.mxu0 0.0
    %2463 = vmatpush2.msra.mxu0 0.0
    %2464 = vmatprep.subr.mxu0 0.0
    %2465 = vmatpush2.msra.mxu0 0.0
    %2466 = vmatprep.subr.mxu0 0.0
    %2467 = vmatpush2.msra.mxu0 0.0
    %2468 = vmatprep.subr.mxu0 0.0
    %2469 = vmatpush2.msra.mxu0 0.0
    %2470 = vmatprep.subr.mxu0 0.0
    %2471 = vmatpush2.msra.mxu0 0.0
    %2472 = vmatprep.subr.mxu0 0.0
    %2473 = vmatpush2.msra.mxu0 0.0
    %2474 = vmatprep.subr.mxu0 0.0
    %2475 = vmatpush2.msra.mxu0 0.0
    %2476 = vmatprep.mubr.f32.mxu0 0.0
    %2477 = vmatmul.mubr.f32.gmra.mxu0 %v2133
    %v2478 = vpop.f32.mrf.mxu0
    %v2479 = vadd.f32 0.0, %v2478
    %v2480 = vpop.f32.mrf.mxu0
    %2481 = vdwg.mxu0
    %v2482 = vadd.f32 %v2395, %v2479
    %v2483 = vtanh.pop %v2482
    %v2484 = vld [vmem:[#allocation11] sm:$0xff]
    %v2485 = vld [vmem:[#allocation11 + $0x8] sm:$0xff]
    %v2486 = vld [vmem:[#allocation11 + $0x10] sm:$0xff]
    %v2487 = vld [vmem:[#allocation11 + $0x18] sm:$0xff]
    %v2488 = vld [vmem:[#allocation11 + $0x20] sm:$0xff]
    %v2489 = vld [vmem:[#allocation11 + $0x28] sm:$0xff]
    %v2490 = vld [vmem:[#allocation11 + $0x30] sm:$0xff]
    %v2491 = vld [vmem:[#allocation11 + $0x38] sm:$0xff]
    %v2492 = vld [vmem:[#allocation11 + $0x40] sm:$0xff]
    %v2493 = vld [vmem:[#allocation11 + $0x48] sm:$0xff]
    %v2494 = vld [vmem:[#allocation11 + $0x50] sm:$0xff]
    %v2495 = vld [vmem:[#allocation11 + $0x58] sm:$0xff]
    %v2496 = vld [vmem:[#allocation11 + $0x60] sm:$0xff]
    %v2497 = vld [vmem:[#allocation11 + $0x68] sm:$0xff]
    %v2498 = vld [vmem:[#allocation11 + $0x70] sm:$0xff]
    %v2499 = vld [vmem:[#allocation11 + $0x78] sm:$0xff]
    %2500 = vmatprep.subr.mxu0 0.0
    %2501 = vmatpush1.msra.mxu0 %v2499
    %2502 = vmatprep.subr.mxu0 0.0
    %2503 = vmatpush1.msra.mxu0 %v2498
    %2504 = vmatprep.subr.mxu0 0.0
    %2505 = vmatpush1.msra.mxu0 %v2497
    %2506 = vmatprep.subr.mxu0 0.0
    %2507 = vmatpush1.msra.mxu0 %v2496
    %2508 = vmatprep.subr.mxu0 0.0
    %2509 = vmatpush1.msra.mxu0 %v2495
    %2510 = vmatprep.subr.mxu0 0.0
    %2511 = vmatpush1.msra.mxu0 %v2494
    %2512 = vmatprep.subr.mxu0 0.0
    %2513 = vmatpush1.msra.mxu0 %v2493
    %2514 = vmatprep.subr.mxu0 0.0
    %2515 = vmatpush1.msra.mxu0 %v2492
    %2516 = vmatprep.subr.mxu0 0.0
    %2517 = vmatpush1.msra.mxu0 %v2491
    %2518 = vmatprep.subr.mxu0 0.0
    %2519 = vmatpush1.msra.mxu0 %v2490
    %2520 = vmatprep.subr.mxu0 0.0
    %2521 = vmatpush1.msra.mxu0 %v2489
    %2522 = vmatprep.subr.mxu0 0.0
    %2523 = vmatpush1.msra.mxu0 %v2488
    %2524 = vmatprep.subr.mxu0 0.0
    %2525 = vmatpush1.msra.mxu0 %v2487
    %2526 = vmatprep.subr.mxu0 0.0
    %2527 = vmatpush1.msra.mxu0 %v2486
    %2528 = vmatprep.subr.mxu0 0.0
    %2529 = vmatpush1.msra.mxu0 %v2485
    %2530 = vmatprep.subr.mxu0 0.0
    %2531 = vmatpush1.msra.mxu0 %v2484
    %2532 = vmatprep.subr.mxu0 0.0
    %2533 = vmatpush2.msra.mxu0 0.0
    %2534 = vmatprep.subr.mxu0 0.0
    %2535 = vmatpush2.msra.mxu0 0.0
    %2536 = vmatprep.subr.mxu0 0.0
    %2537 = vmatpush2.msra.mxu0 0.0
    %2538 = vmatprep.subr.mxu0 0.0
    %2539 = vmatpush2.msra.mxu0 0.0
    %2540 = vmatprep.subr.mxu0 0.0
    %2541 = vmatpush2.msra.mxu0 0.0
    %2542 = vmatprep.subr.mxu0 0.0
    %2543 = vmatpush2.msra.mxu0 0.0
    %2544 = vmatprep.subr.mxu0 0.0
    %2545 = vmatpush2.msra.mxu0 0.0
    %2546 = vmatprep.subr.mxu0 0.0
    %2547 = vmatpush2.msra.mxu0 0.0
    %2548 = vmatprep.subr.mxu0 0.0
    %2549 = vmatpush2.msra.mxu0 0.0
    %2550 = vmatprep.subr.mxu0 0.0
    %2551 = vmatpush2.msra.mxu0 0.0
    %2552 = vmatprep.subr.mxu0 0.0
    %2553 = vmatpush2.msra.mxu0 0.0
    %2554 = vmatprep.subr.mxu0 0.0
    %2555 = vmatpush2.msra.mxu0 0.0
    %2556 = vmatprep.subr.mxu0 0.0
    %2557 = vmatpush2.msra.mxu0 0.0
    %2558 = vmatprep.subr.mxu0 0.0
    %2559 = vmatpush2.msra.mxu0 0.0
    %2560 = vmatprep.subr.mxu0 0.0
    %2561 = vmatpush2.msra.mxu0 0.0
    %2562 = vmatprep.subr.mxu0 0.0
    %2563 = vmatpush2.msra.mxu0 0.0
    %2564 = vmatprep.mubr.f32.mxu0 0.0
    %2565 = vmatmul.mubr.f32.gmra.mxu0 %v2483
    %v2566 = vpop.f32.mrf.mxu0
    %v2567 = vadd.f32 %v392, %v2566
    %v2568 = vpop.f32.mrf.mxu0
    %2569 = vdwg.mxu0
    %v2570 = vld [vmem:[#allocation12] sm:$0xff]
    %v2571 = vld [vmem:[#allocation12 + $0x8] sm:$0xff]
    %v2572 = vld [vmem:[#allocation12 + $0x10] sm:$0xff]
    %v2573 = vld [vmem:[#allocation12 + $0x18] sm:$0xff]
    %v2574 = vld [vmem:[#allocation12 + $0x20] sm:$0xff]
    %v2575 = vld [vmem:[#allocation12 + $0x28] sm:$0xff]
    %v2576 = vld [vmem:[#allocation12 + $0x30] sm:$0xff]
    %v2577 = vld [vmem:[#allocation12 + $0x38] sm:$0xff]
    %v2578 = vld [vmem:[#allocation12 + $0x40] sm:$0xff]
    %v2579 = vld [vmem:[#allocation12 + $0x48] sm:$0xff]
    %v2580 = vld [vmem:[#allocation12 + $0x50] sm:$0xff]
    %v2581 = vld [vmem:[#allocation12 + $0x58] sm:$0xff]
    %v2582 = vld [vmem:[#allocation12 + $0x60] sm:$0xff]
    %v2583 = vld [vmem:[#allocation12 + $0x68] sm:$0xff]
    %v2584 = vld [vmem:[#allocation12 + $0x70] sm:$0xff]
    %v2585 = vld [vmem:[#allocation12 + $0x78] sm:$0xff]
    %2586 = vmatprep.subr.mxu0 0.0
    %2587 = vmatpush1.msra.mxu0 %v2585
    %2588 = vmatprep.subr.mxu0 0.0
    %2589 = vmatpush1.msra.mxu0 %v2584
    %2590 = vmatprep.subr.mxu0 0.0
    %2591 = vmatpush1.msra.mxu0 %v2583
    %2592 = vmatprep.subr.mxu0 0.0
    %2593 = vmatpush1.msra.mxu0 %v2582
    %2594 = vmatprep.subr.mxu0 0.0
    %2595 = vmatpush1.msra.mxu0 %v2581
    %2596 = vmatprep.subr.mxu0 0.0
    %2597 = vmatpush1.msra.mxu0 %v2580
    %2598 = vmatprep.subr.mxu0 0.0
    %2599 = vmatpush1.msra.mxu0 %v2579
    %2600 = vmatprep.subr.mxu0 0.0
    %2601 = vmatpush1.msra.mxu0 %v2578
    %2602 = vmatprep.subr.mxu0 0.0
    %2603 = vmatpush1.msra.mxu0 %v2577
    %2604 = vmatprep.subr.mxu0 0.0
    %2605 = vmatpush1.msra.mxu0 %v2576
    %2606 = vmatprep.subr.mxu0 0.0
    %2607 = vmatpush1.msra.mxu0 %v2575
    %2608 = vmatprep.subr.mxu0 0.0
    %2609 = vmatpush1.msra.mxu0 %v2574
    %2610 = vmatprep.subr.mxu0 0.0
    %2611 = vmatpush1.msra.mxu0 %v2573
    %2612 = vmatprep.subr.mxu0 0.0
    %2613 = vmatpush1.msra.mxu0 %v2572
    %2614 = vmatprep.subr.mxu0 0.0
    %2615 = vmatpush1.msra.mxu0 %v2571
    %2616 = vmatprep.subr.mxu0 0.0
    %2617 = vmatpush1.msra.mxu0 %v2570
    %2618 = vmatprep.subr.mxu0 0.0
    %2619 = vmatpush2.msra.mxu0 0.0
    %2620 = vmatprep.subr.mxu0 0.0
    %2621 = vmatpush2.msra.mxu0 0.0
    %2622 = vmatprep.subr.mxu0 0.0
    %2623 = vmatpush2.msra.mxu0 0.0
    %2624 = vmatprep.subr.mxu0 0.0
    %2625 = vmatpush2.msra.mxu0 0.0
    %2626 = vmatprep.subr.mxu0 0.0
    %2627 = vmatpush2.msra.mxu0 0.0
    %2628 = vmatprep.subr.mxu0 0.0
    %2629 = vmatpush2.msra.mxu0 0.0
    %2630 = vmatprep.subr.mxu0 0.0
    %2631 = vmatpush2.msra.mxu0 0.0
    %2632 = vmatprep.subr.mxu0 0.0
    %2633 = vmatpush2.msra.mxu0 0.0
    %2634 = vmatprep.subr.mxu0 0.0
    %2635 = vmatpush2.msra.mxu0 0.0
    %2636 = vmatprep.subr.mxu0 0.0
    %2637 = vmatpush2.msra.mxu0 0.0
    %2638 = vmatprep.subr.mxu0 0.0
    %2639 = vmatpush2.msra.mxu0 0.0
    %2640 = vmatprep.subr.mxu0 0.0
    %2641 = vmatpush2.msra.mxu0 0.0
    %2642 = vmatprep.subr.mxu0 0.0
    %2643 = vmatpush2.msra.mxu0 0.0
    %2644 = vmatprep.subr.mxu0 0.0
    %2645 = vmatpush2.msra.mxu0 0.0
    %2646 = vmatprep.subr.mxu0 0.0
    %2647 = vmatpush2.msra.mxu0 0.0
    %2648 = vmatprep.subr.mxu0 0.0
    %2649 = vmatpush2.msra.mxu0 0.0
    %2650 = vmatprep.mubr.f32.mxu0 0.0
    %2651 = vmatmul.mubr.f32.gmra.mxu0 %v2307
    %v2652 = vpop.f32.mrf.mxu0
    %v2653 = vadd.f32 0.0, %v2652
    %v2654 = vpop.f32.mrf.mxu0
    %2655 = vdwg.mxu0
    %v2656 = vadd.f32 %v2567, %v2653
    %v2657 = vtanh.pop %v2656
    %v2658 = vld [vmem:[#allocation14] sm:$0xff]
    %v2659 = vld [vmem:[#allocation14 + $0x8] sm:$0xff]
    %v2660 = vld [vmem:[#allocation14 + $0x10] sm:$0xff]
    %v2661 = vld [vmem:[#allocation14 + $0x18] sm:$0xff]
    %v2662 = vld [vmem:[#allocation14 + $0x20] sm:$0xff]
    %v2663 = vld [vmem:[#allocation14 + $0x28] sm:$0xff]
    %v2664 = vld [vmem:[#allocation14 + $0x30] sm:$0xff]
    %v2665 = vld [vmem:[#allocation14 + $0x38] sm:$0xff]
    %v2666 = vld [vmem:[#allocation14 + $0x40] sm:$0xff]
    %v2667 = vld [vmem:[#allocation14 + $0x48] sm:$0xff]
    %v2668 = vld [vmem:[#allocation14 + $0x50] sm:$0xff]
    %v2669 = vld [vmem:[#allocation14 + $0x58] sm:$0xff]
    %v2670 = vld [vmem:[#allocation14 + $0x60] sm:$0xff]
    %v2671 = vld [vmem:[#allocation14 + $0x68] sm:$0xff]
    %v2672 = vld [vmem:[#allocation14 + $0x70] sm:$0xff]
    %v2673 = vld [vmem:[#allocation14 + $0x78] sm:$0xff]
    %2674 = vmatprep.subr.mxu0 0.0
    %2675 = vmatpush1.msra.mxu0 %v2673
    %2676 = vmatprep.subr.mxu0 0.0
    %2677 = vmatpush1.msra.mxu0 %v2672
    %2678 = vmatprep.subr.mxu0 0.0
    %2679 = vmatpush1.msra.mxu0 %v2671
    %2680 = vmatprep.subr.mxu0 0.0
    %2681 = vmatpush1.msra.mxu0 %v2670
    %2682 = vmatprep.subr.mxu0 0.0
    %2683 = vmatpush1.msra.mxu0 %v2669
    %2684 = vmatprep.subr.mxu0 0.0
    %2685 = vmatpush1.msra.mxu0 %v2668
    %2686 = vmatprep.subr.mxu0 0.0
    %2687 = vmatpush1.msra.mxu0 %v2667
    %2688 = vmatprep.subr.mxu0 0.0
    %2689 = vmatpush1.msra.mxu0 %v2666
    %2690 = vmatprep.subr.mxu0 0.0
    %2691 = vmatpush1.msra.mxu0 %v2665
    %2692 = vmatprep.subr.mxu0 0.0
    %2693 = vmatpush1.msra.mxu0 %v2664
    %2694 = vmatprep.subr.mxu0 0.0
    %2695 = vmatpush1.msra.mxu0 %v2663
    %2696 = vmatprep.subr.mxu0 0.0
    %2697 = vmatpush1.msra.mxu0 %v2662
    %2698 = vmatprep.subr.mxu0 0.0
    %2699 = vmatpush1.msra.mxu0 %v2661
    %2700 = vmatprep.subr.mxu0 0.0
    %2701 = vmatpush1.msra.mxu0 %v2660
    %2702 = vmatprep.subr.mxu0 0.0
    %2703 = vmatpush1.msra.mxu0 %v2659
    %2704 = vmatprep.subr.mxu0 0.0
    %2705 = vmatpush1.msra.mxu0 %v2658
    %2706 = vmatprep.subr.mxu0 0.0
    %2707 = vmatpush2.msra.mxu0 0.0
    %2708 = vmatprep.subr.mxu0 0.0
    %2709 = vmatpush2.msra.mxu0 0.0
    %2710 = vmatprep.subr.mxu0 0.0
    %2711 = vmatpush2.msra.mxu0 0.0
    %2712 = vmatprep.subr.mxu0 0.0
    %2713 = vmatpush2.msra.mxu0 0.0
    %2714 = vmatprep.subr.mxu0 0.0
    %2715 = vmatpush2.msra.mxu0 0.0
    %2716 = vmatprep.subr.mxu0 0.0
    %2717 = vmatpush2.msra.mxu0 0.0
    %2718 = vmatprep.subr.mxu0 0.0
    %2719 = vmatpush2.msra.mxu0 0.0
    %2720 = vmatprep.subr.mxu0 0.0
    %2721 = vmatpush2.msra.mxu0 0.0
    %2722 = vmatprep.subr.mxu0 0.0
    %2723 = vmatpush2.msra.mxu0 0.0
    %2724 = vmatprep.subr.mxu0 0.0
    %2725 = vmatpush2.msra.mxu0 0.0
    %2726 = vmatprep.subr.mxu0 0.0
    %2727 = vmatpush2.msra.mxu0 0.0
    %2728 = vmatprep.subr.mxu0 0.0
    %2729 = vmatpush2.msra.mxu0 0.0
    %2730 = vmatprep.subr.mxu0 0.0
    %2731 = vmatpush2.msra.mxu0 0.0
    %2732 = vmatprep.subr.mxu0 0.0
    %2733 = vmatpush2.msra.mxu0 0.0
    %2734 = vmatprep.subr.mxu0 0.0
    %2735 = vmatpush2.msra.mxu0 0.0
    %2736 = vmatprep.subr.mxu0 0.0
    %2737 = vmatpush2.msra.mxu0 0.0
    %2738 = vmatprep.mubr.f32.mxu0 0.0
    %2739 = vmatmul.mubr.f32.gmra.mxu0 %v2657
    %v2740 = vpop.f32.mrf.mxu0
    %v2741 = vadd.f32 %v572, %v2740
    %v2742 = vpop.f32.mrf.mxu0
    %2743 = vdwg.mxu0
    %2744 = vst [vmem:[#allocation15 + $0x30] sm:$0xff] %v2741
    %v2745 = vld [vmem:[#allocation2 + $0x38] sm:$0xff]
    %v2746 = vld [vmem:[#allocation9] sm:$0xff]
    %v2747 = vld [vmem:[#allocation9 + $0x8] sm:$0xff]
    %v2748 = vld [vmem:[#allocation9 + $0x10] sm:$0xff]
    %v2749 = vld [vmem:[#allocation9 + $0x18] sm:$0xff]
    %v2750 = vld [vmem:[#allocation9 + $0x20] sm:$0xff]
    %v2751 = vld [vmem:[#allocation9 + $0x28] sm:$0xff]
    %v2752 = vld [vmem:[#allocation9 + $0x30] sm:$0xff]
    %v2753 = vld [vmem:[#allocation9 + $0x38] sm:$0xff]
    %v2754 = vld [vmem:[#allocation9 + $0x40] sm:$0xff]
    %v2755 = vld [vmem:[#allocation9 + $0x48] sm:$0xff]
    %v2756 = vld [vmem:[#allocation9 + $0x50] sm:$0xff]
    %v2757 = vld [vmem:[#allocation9 + $0x58] sm:$0xff]
    %v2758 = vld [vmem:[#allocation9 + $0x60] sm:$0xff]
    %v2759 = vld [vmem:[#allocation9 + $0x68] sm:$0xff]
    %v2760 = vld [vmem:[#allocation9 + $0x70] sm:$0xff]
    %v2761 = vld [vmem:[#allocation9 + $0x78] sm:$0xff]
    %2762 = vmatprep.subr.mxu0 0.0
    %2763 = vmatpush1.msra.mxu0 %v2761
    %2764 = vmatprep.subr.mxu0 0.0
    %2765 = vmatpush1.msra.mxu0 %v2760
    %2766 = vmatprep.subr.mxu0 0.0
    %2767 = vmatpush1.msra.mxu0 %v2759
    %2768 = vmatprep.subr.mxu0 0.0
    %2769 = vmatpush1.msra.mxu0 %v2758
    %2770 = vmatprep.subr.mxu0 0.0
    %2771 = vmatpush1.msra.mxu0 %v2757
    %2772 = vmatprep.subr.mxu0 0.0
    %2773 = vmatpush1.msra.mxu0 %v2756
    %2774 = vmatprep.subr.mxu0 0.0
    %2775 = vmatpush1.msra.mxu0 %v2755
    %2776 = vmatprep.subr.mxu0 0.0
    %2777 = vmatpush1.msra.mxu0 %v2754
    %2778 = vmatprep.subr.mxu0 0.0
    %2779 = vmatpush1.msra.mxu0 %v2753
    %2780 = vmatprep.subr.mxu0 0.0
    %2781 = vmatpush1.msra.mxu0 %v2752
    %2782 = vmatprep.subr.mxu0 0.0
    %2783 = vmatpush1.msra.mxu0 %v2751
    %2784 = vmatprep.subr.mxu0 0.0
    %2785 = vmatpush1.msra.mxu0 %v2750
    %2786 = vmatprep.subr.mxu0 0.0
    %2787 = vmatpush1.msra.mxu0 %v2749
    %2788 = vmatprep.subr.mxu0 0.0
    %2789 = vmatpush1.msra.mxu0 %v2748
    %2790 = vmatprep.subr.mxu0 0.0
    %2791 = vmatpush1.msra.mxu0 %v2747
    %2792 = vmatprep.subr.mxu0 0.0
    %2793 = vmatpush1.msra.mxu0 %v2746
    %2794 = vmatprep.subr.mxu0 0.0
    %2795 = vmatpush2.msra.mxu0 0.0
    %2796 = vmatprep.subr.mxu0 0.0
    %2797 = vmatpush2.msra.mxu0 0.0
    %2798 = vmatprep.subr.mxu0 0.0
    %2799 = vmatpush2.msra.mxu0 0.0
    %2800 = vmatprep.subr.mxu0 0.0
    %2801 = vmatpush2.msra.mxu0 0.0
    %2802 = vmatprep.subr.mxu0 0.0
    %2803 = vmatpush2.msra.mxu0 0.0
    %2804 = vmatprep.subr.mxu0 0.0
    %2805 = vmatpush2.msra.mxu0 0.0
    %2806 = vmatprep.subr.mxu0 0.0
    %2807 = vmatpush2.msra.mxu0 0.0
    %2808 = vmatprep.subr.mxu0 0.0
    %2809 = vmatpush2.msra.mxu0 0.0
    %2810 = vmatprep.subr.mxu0 0.0
    %2811 = vmatpush2.msra.mxu0 0.0
    %2812 = vmatprep.subr.mxu0 0.0
    %2813 = vmatpush2.msra.mxu0 0.0
    %2814 = vmatprep.subr.mxu0 0.0
    %2815 = vmatpush2.msra.mxu0 0.0
    %2816 = vmatprep.subr.mxu0 0.0
    %2817 = vmatpush2.msra.mxu0 0.0
    %2818 = vmatprep.subr.mxu0 0.0
    %2819 = vmatpush2.msra.mxu0 0.0
    %2820 = vmatprep.subr.mxu0 0.0
    %2821 = vmatpush2.msra.mxu0 0.0
    %2822 = vmatprep.subr.mxu0 0.0
    %2823 = vmatpush2.msra.mxu0 0.0
    %2824 = vmatprep.subr.mxu0 0.0
    %2825 = vmatpush2.msra.mxu0 0.0
    %2826 = vmatprep.mubr.f32.mxu0 0.0
    %2827 = vmatmul.mubr.f32.gmra.mxu0 %v2483
    %v2828 = vpop.f32.mrf.mxu0
    %v2829 = vadd.f32 0.0, %v2828
    %v2830 = vpop.f32.mrf.mxu0
    %2831 = vdwg.mxu0
    %v2832 = vadd.f32 %v2745, %v2829
    %v2833 = vtanh.pop %v2832
    %v2834 = vld [vmem:[#allocation11] sm:$0xff]
    %v2835 = vld [vmem:[#allocation11 + $0x8] sm:$0xff]
    %v2836 = vld [vmem:[#allocation11 + $0x10] sm:$0xff]
    %v2837 = vld [vmem:[#allocation11 + $0x18] sm:$0xff]
    %v2838 = vld [vmem:[#allocation11 + $0x20] sm:$0xff]
    %v2839 = vld [vmem:[#allocation11 + $0x28] sm:$0xff]
    %v2840 = vld [vmem:[#allocation11 + $0x30] sm:$0xff]
    %v2841 = vld [vmem:[#allocation11 + $0x38] sm:$0xff]
    %v2842 = vld [vmem:[#allocation11 + $0x40] sm:$0xff]
    %v2843 = vld [vmem:[#allocation11 + $0x48] sm:$0xff]
    %v2844 = vld [vmem:[#allocation11 + $0x50] sm:$0xff]
    %v2845 = vld [vmem:[#allocation11 + $0x58] sm:$0xff]
    %v2846 = vld [vmem:[#allocation11 + $0x60] sm:$0xff]
    %v2847 = vld [vmem:[#allocation11 + $0x68] sm:$0xff]
    %v2848 = vld [vmem:[#allocation11 + $0x70] sm:$0xff]
    %v2849 = vld [vmem:[#allocation11 + $0x78] sm:$0xff]
    %2850 = vmatprep.subr.mxu0 0.0
    %2851 = vmatpush1.msra.mxu0 %v2849
    %2852 = vmatprep.subr.mxu0 0.0
    %2853 = vmatpush1.msra.mxu0 %v2848
    %2854 = vmatprep.subr.mxu0 0.0
    %2855 = vmatpush1.msra.mxu0 %v2847
    %2856 = vmatprep.subr.mxu0 0.0
    %2857 = vmatpush1.msra.mxu0 %v2846
    %2858 = vmatprep.subr.mxu0 0.0
    %2859 = vmatpush1.msra.mxu0 %v2845
    %2860 = vmatprep.subr.mxu0 0.0
    %2861 = vmatpush1.msra.mxu0 %v2844
    %2862 = vmatprep.subr.mxu0 0.0
    %2863 = vmatpush1.msra.mxu0 %v2843
    %2864 = vmatprep.subr.mxu0 0.0
    %2865 = vmatpush1.msra.mxu0 %v2842
    %2866 = vmatprep.subr.mxu0 0.0
    %2867 = vmatpush1.msra.mxu0 %v2841
    %2868 = vmatprep.subr.mxu0 0.0
    %2869 = vmatpush1.msra.mxu0 %v2840
    %2870 = vmatprep.subr.mxu0 0.0
    %2871 = vmatpush1.msra.mxu0 %v2839
    %2872 = vmatprep.subr.mxu0 0.0
    %2873 = vmatpush1.msra.mxu0 %v2838
    %2874 = vmatprep.subr.mxu0 0.0
    %2875 = vmatpush1.msra.mxu0 %v2837
    %2876 = vmatprep.subr.mxu0 0.0
    %2877 = vmatpush1.msra.mxu0 %v2836
    %2878 = vmatprep.subr.mxu0 0.0
    %2879 = vmatpush1.msra.mxu0 %v2835
    %2880 = vmatprep.subr.mxu0 0.0
    %2881 = vmatpush1.msra.mxu0 %v2834
    %2882 = vmatprep.subr.mxu0 0.0
    %2883 = vmatpush2.msra.mxu0 0.0
    %2884 = vmatprep.subr.mxu0 0.0
    %2885 = vmatpush2.msra.mxu0 0.0
    %2886 = vmatprep.subr.mxu0 0.0
    %2887 = vmatpush2.msra.mxu0 0.0
    %2888 = vmatprep.subr.mxu0 0.0
    %2889 = vmatpush2.msra.mxu0 0.0
    %2890 = vmatprep.subr.mxu0 0.0
    %2891 = vmatpush2.msra.mxu0 0.0
    %2892 = vmatprep.subr.mxu0 0.0
    %2893 = vmatpush2.msra.mxu0 0.0
    %2894 = vmatprep.subr.mxu0 0.0
    %2895 = vmatpush2.msra.mxu0 0.0
    %2896 = vmatprep.subr.mxu0 0.0
    %2897 = vmatpush2.msra.mxu0 0.0
    %2898 = vmatprep.subr.mxu0 0.0
    %2899 = vmatpush2.msra.mxu0 0.0
    %2900 = vmatprep.subr.mxu0 0.0
    %2901 = vmatpush2.msra.mxu0 0.0
    %2902 = vmatprep.subr.mxu0 0.0
    %2903 = vmatpush2.msra.mxu0 0.0
    %2904 = vmatprep.subr.mxu0 0.0
    %2905 = vmatpush2.msra.mxu0 0.0
    %2906 = vmatprep.subr.mxu0 0.0
    %2907 = vmatpush2.msra.mxu0 0.0
    %2908 = vmatprep.subr.mxu0 0.0
    %2909 = vmatpush2.msra.mxu0 0.0
    %2910 = vmatprep.subr.mxu0 0.0
    %2911 = vmatpush2.msra.mxu0 0.0
    %2912 = vmatprep.subr.mxu0 0.0
    %2913 = vmatpush2.msra.mxu0 0.0
    %2914 = vmatprep.mubr.f32.mxu0 0.0
    %2915 = vmatmul.mubr.f32.gmra.mxu0 %v2833
    %v2916 = vpop.f32.mrf.mxu0
    %v2917 = vadd.f32 %v392, %v2916
    %v2918 = vpop.f32.mrf.mxu0
    %2919 = vdwg.mxu0
    %v2920 = vld [vmem:[#allocation12] sm:$0xff]
    %v2921 = vld [vmem:[#allocation12 + $0x8] sm:$0xff]
    %v2922 = vld [vmem:[#allocation12 + $0x10] sm:$0xff]
    %v2923 = vld [vmem:[#allocation12 + $0x18] sm:$0xff]
    %v2924 = vld [vmem:[#allocation12 + $0x20] sm:$0xff]
    %v2925 = vld [vmem:[#allocation12 + $0x28] sm:$0xff]
    %v2926 = vld [vmem:[#allocation12 + $0x30] sm:$0xff]
    %v2927 = vld [vmem:[#allocation12 + $0x38] sm:$0xff]
    %v2928 = vld [vmem:[#allocation12 + $0x40] sm:$0xff]
    %v2929 = vld [vmem:[#allocation12 + $0x48] sm:$0xff]
    %v2930 = vld [vmem:[#allocation12 + $0x50] sm:$0xff]
    %v2931 = vld [vmem:[#allocation12 + $0x58] sm:$0xff]
    %v2932 = vld [vmem:[#allocation12 + $0x60] sm:$0xff]
    %v2933 = vld [vmem:[#allocation12 + $0x68] sm:$0xff]
    %v2934 = vld [vmem:[#allocation12 + $0x70] sm:$0xff]
    %v2935 = vld [vmem:[#allocation12 + $0x78] sm:$0xff]
    %2936 = vmatprep.subr.mxu0 0.0
    %2937 = vmatpush1.msra.mxu0 %v2935
    %2938 = vmatprep.subr.mxu0 0.0
    %2939 = vmatpush1.msra.mxu0 %v2934
    %2940 = vmatprep.subr.mxu0 0.0
    %2941 = vmatpush1.msra.mxu0 %v2933
    %2942 = vmatprep.subr.mxu0 0.0
    %2943 = vmatpush1.msra.mxu0 %v2932
    %2944 = vmatprep.subr.mxu0 0.0
    %2945 = vmatpush1.msra.mxu0 %v2931
    %2946 = vmatprep.subr.mxu0 0.0
    %2947 = vmatpush1.msra.mxu0 %v2930
    %2948 = vmatprep.subr.mxu0 0.0
    %2949 = vmatpush1.msra.mxu0 %v2929
    %2950 = vmatprep.subr.mxu0 0.0
    %2951 = vmatpush1.msra.mxu0 %v2928
    %2952 = vmatprep.subr.mxu0 0.0
    %2953 = vmatpush1.msra.mxu0 %v2927
    %2954 = vmatprep.subr.mxu0 0.0
    %2955 = vmatpush1.msra.mxu0 %v2926
    %2956 = vmatprep.subr.mxu0 0.0
    %2957 = vmatpush1.msra.mxu0 %v2925
    %2958 = vmatprep.subr.mxu0 0.0
    %2959 = vmatpush1.msra.mxu0 %v2924
    %2960 = vmatprep.subr.mxu0 0.0
    %2961 = vmatpush1.msra.mxu0 %v2923
    %2962 = vmatprep.subr.mxu0 0.0
    %2963 = vmatpush1.msra.mxu0 %v2922
    %2964 = vmatprep.subr.mxu0 0.0
    %2965 = vmatpush1.msra.mxu0 %v2921
    %2966 = vmatprep.subr.mxu0 0.0
    %2967 = vmatpush1.msra.mxu0 %v2920
    %2968 = vmatprep.subr.mxu0 0.0
    %2969 = vmatpush2.msra.mxu0 0.0
    %2970 = vmatprep.subr.mxu0 0.0
    %2971 = vmatpush2.msra.mxu0 0.0
    %2972 = vmatprep.subr.mxu0 0.0
    %2973 = vmatpush2.msra.mxu0 0.0
    %2974 = vmatprep.subr.mxu0 0.0
    %2975 = vmatpush2.msra.mxu0 0.0
    %2976 = vmatprep.subr.mxu0 0.0
    %2977 = vmatpush2.msra.mxu0 0.0
    %2978 = vmatprep.subr.mxu0 0.0
    %2979 = vmatpush2.msra.mxu0 0.0
    %2980 = vmatprep.subr.mxu0 0.0
    %2981 = vmatpush2.msra.mxu0 0.0
    %2982 = vmatprep.subr.mxu0 0.0
    %2983 = vmatpush2.msra.mxu0 0.0
    %2984 = vmatprep.subr.mxu0 0.0
    %2985 = vmatpush2.msra.mxu0 0.0
    %2986 = vmatprep.subr.mxu0 0.0
    %2987 = vmatpush2.msra.mxu0 0.0
    %2988 = vmatprep.subr.mxu0 0.0
    %2989 = vmatpush2.msra.mxu0 0.0
    %2990 = vmatprep.subr.mxu0 0.0
    %2991 = vmatpush2.msra.mxu0 0.0
    %2992 = vmatprep.subr.mxu0 0.0
    %2993 = vmatpush2.msra.mxu0 0.0
    %2994 = vmatprep.subr.mxu0 0.0
    %2995 = vmatpush2.msra.mxu0 0.0
    %2996 = vmatprep.subr.mxu0 0.0
    %2997 = vmatpush2.msra.mxu0 0.0
    %2998 = vmatprep.subr.mxu0 0.0
    %2999 = vmatpush2.msra.mxu0 0.0
    %3000 = vmatprep.mubr.f32.mxu0 0.0
    %3001 = vmatmul.mubr.f32.gmra.mxu0 %v2657
    %v3002 = vpop.f32.mrf.mxu0
    %v3003 = vadd.f32 0.0, %v3002
    %v3004 = vpop.f32.mrf.mxu0
    %3005 = vdwg.mxu0
    %v3006 = vadd.f32 %v2917, %v3003
    %v3007 = vtanh.pop %v3006
    %v3008 = vld [vmem:[#allocation14] sm:$0xff]
    %v3009 = vld [vmem:[#allocation14 + $0x8] sm:$0xff]
    %v3010 = vld [vmem:[#allocation14 + $0x10] sm:$0xff]
    %v3011 = vld [vmem:[#allocation14 + $0x18] sm:$0xff]
    %v3012 = vld [vmem:[#allocation14 + $0x20] sm:$0xff]
    %v3013 = vld [vmem:[#allocation14 + $0x28] sm:$0xff]
    %v3014 = vld [vmem:[#allocation14 + $0x30] sm:$0xff]
    %v3015 = vld [vmem:[#allocation14 + $0x38] sm:$0xff]
    %v3016 = vld [vmem:[#allocation14 + $0x40] sm:$0xff]
    %v3017 = vld [vmem:[#allocation14 + $0x48] sm:$0xff]
    %v3018 = vld [vmem:[#allocation14 + $0x50] sm:$0xff]
    %v3019 = vld [vmem:[#allocation14 + $0x58] sm:$0xff]
    %v3020 = vld [vmem:[#allocation14 + $0x60] sm:$0xff]
    %v3021 = vld [vmem:[#allocation14 + $0x68] sm:$0xff]
    %v3022 = vld [vmem:[#allocation14 + $0x70] sm:$0xff]
    %v3023 = vld [vmem:[#allocation14 + $0x78] sm:$0xff]
    %3024 = vmatprep.subr.mxu0 0.0
    %3025 = vmatpush1.msra.mxu0 %v3023
    %3026 = vmatprep.subr.mxu0 0.0
    %3027 = vmatpush1.msra.mxu0 %v3022
    %3028 = vmatprep.subr.mxu0 0.0
    %3029 = vmatpush1.msra.mxu0 %v3021
    %3030 = vmatprep.subr.mxu0 0.0
    %3031 = vmatpush1.msra.mxu0 %v3020
    %3032 = vmatprep.subr.mxu0 0.0
    %3033 = vmatpush1.msra.mxu0 %v3019
    %3034 = vmatprep.subr.mxu0 0.0
    %3035 = vmatpush1.msra.mxu0 %v3018
    %3036 = vmatprep.subr.mxu0 0.0
    %3037 = vmatpush1.msra.mxu0 %v3017
    %3038 = vmatprep.subr.mxu0 0.0
    %3039 = vmatpush1.msra.mxu0 %v3016
    %3040 = vmatprep.subr.mxu0 0.0
    %3041 = vmatpush1.msra.mxu0 %v3015
    %3042 = vmatprep.subr.mxu0 0.0
    %3043 = vmatpush1.msra.mxu0 %v3014
    %3044 = vmatprep.subr.mxu0 0.0
    %3045 = vmatpush1.msra.mxu0 %v3013
    %3046 = vmatprep.subr.mxu0 0.0
    %3047 = vmatpush1.msra.mxu0 %v3012
    %3048 = vmatprep.subr.mxu0 0.0
    %3049 = vmatpush1.msra.mxu0 %v3011
    %3050 = vmatprep.subr.mxu0 0.0
    %3051 = vmatpush1.msra.mxu0 %v3010
    %3052 = vmatprep.subr.mxu0 0.0
    %3053 = vmatpush1.msra.mxu0 %v3009
    %3054 = vmatprep.subr.mxu0 0.0
    %3055 = vmatpush1.msra.mxu0 %v3008
    %3056 = vmatprep.subr.mxu0 0.0
    %3057 = vmatpush2.msra.mxu0 0.0
    %3058 = vmatprep.subr.mxu0 0.0
    %3059 = vmatpush2.msra.mxu0 0.0
    %3060 = vmatprep.subr.mxu0 0.0
    %3061 = vmatpush2.msra.mxu0 0.0
    %3062 = vmatprep.subr.mxu0 0.0
    %3063 = vmatpush2.msra.mxu0 0.0
    %3064 = vmatprep.subr.mxu0 0.0
    %3065 = vmatpush2.msra.mxu0 0.0
    %3066 = vmatprep.subr.mxu0 0.0
    %3067 = vmatpush2.msra.mxu0 0.0
    %3068 = vmatprep.subr.mxu0 0.0
    %3069 = vmatpush2.msra.mxu0 0.0
    %3070 = vmatprep.subr.mxu0 0.0
    %3071 = vmatpush2.msra.mxu0 0.0
    %3072 = vmatprep.subr.mxu0 0.0
    %3073 = vmatpush2.msra.mxu0 0.0
    %3074 = vmatprep.subr.mxu0 0.0
    %3075 = vmatpush2.msra.mxu0 0.0
    %3076 = vmatprep.subr.mxu0 0.0
    %3077 = vmatpush2.msra.mxu0 0.0
    %3078 = vmatprep.subr.mxu0 0.0
    %3079 = vmatpush2.msra.mxu0 0.0
    %3080 = vmatprep.subr.mxu0 0.0
    %3081 = vmatpush2.msra.mxu0 0.0
    %3082 = vmatprep.subr.mxu0 0.0
    %3083 = vmatpush2.msra.mxu0 0.0
    %3084 = vmatprep.subr.mxu0 0.0
    %3085 = vmatpush2.msra.mxu0 0.0
    %3086 = vmatprep.subr.mxu0 0.0
    %3087 = vmatpush2.msra.mxu0 0.0
    %3088 = vmatprep.mubr.f32.mxu0 0.0
    %3089 = vmatmul.mubr.f32.gmra.mxu0 %v3007
    %v3090 = vpop.f32.mrf.mxu0
    %v3091 = vadd.f32 %v572, %v3090
    %v3092 = vpop.f32.mrf.mxu0
    %3093 = vdwg.mxu0
    %3094 = vst [vmem:[#allocation15 + $0x38] sm:$0xff] %v3091
    %3095 = vst [vmem:[#allocation16] sm:$0xff] %v2833
    %s3096 = scalar_lea.vmem [#allocation16], 8
    %3097 = vst [vmem:[%s3096] sm:$0xff] %v3007
    // Predicated region
    $region70: #{tpu_custom_call.1} parent=1 // pred_check
      _
    $region71: #{tpu_custom_call.1} parent=1 // pred_check_branch
      %3099 = sbr.rel (0) target = $region73
    $region72: #{tpu_custom_call.1} parent=1 // pred_region
      %s3101 = ssub.s32 1024, 1024
      %3102 = vsyncadd [#allocation5], %s3101
      %s3103 = sshll.u32 [#allocation15], 4
      %s3104 = int_to_ptr.vmem [resolvable:$true] %s3103
      %3109 = dma.vmem_to_hbm [thread:$0]  %s3104, 1024, %s10, [#allocation5], 128, 128, 8
    $region73: #{tpu_custom_call.1} parent=1 // pred_fallthru
      _
    // Predicated region
    $region74: #{tpu_custom_call.1} parent=1 // pred_check
      _
    $region75: #{tpu_custom_call.1} parent=1 // pred_check_branch
      %3111 = sbr.rel (0) target = $region77
    $region76: #{tpu_custom_call.1} parent=1 // pred_region
      %s3113 = ssub.s32 256, 256
      %3114 = vsyncadd [#allocation17], %s3113
      %s3115 = sshll.u32 [#allocation16], 4
      %s3116 = int_to_ptr.vmem [resolvable:$true] %s3115
      %3121 = dma.vmem_to_hbm [thread:$0]  %s3116, 256, %s11, [#allocation17], 128, 128, 8
    $region77: #{tpu_custom_call.1} parent=1 // pred_fallthru
      _
    // Predicated region
    $region78: #{tpu_custom_call.1} parent=1 // pred_check
      _
    $region79: #{tpu_custom_call.1} parent=1 // pred_check_branch
      %3123 = sbr.rel (0) target = $region81
    $region80: #{tpu_custom_call.1} parent=1 // pred_region
      %3124 = dma.done [#allocation5], 1024
    $region81: #{tpu_custom_call.1} parent=1 // pred_fallthru
      _
    // Predicated region
    $region82: #{tpu_custom_call.1} parent=1 // pred_check
      _
    $region83: #{tpu_custom_call.1} parent=1 // pred_check_branch
      %3126 = sbr.rel (0) target = $region85
    $region84: #{tpu_custom_call.1} parent=1 // pred_region
      %3127 = dma.done [#allocation17], 256
    $region85: #{tpu_custom_call.1} parent=1 // pred_fallthru
      _
    %3128 = vsyncpa [#allocation4], 1
    %3129 = vsyncpa [#allocation7], 1
    %3130 = vsyncpa [#allocation10], 1
    %3131 = vsyncpa [#allocation13], 1
    %3132 = vsyncpa [#allocation5], 1
    %3133 = vsyncpa [#allocation17], 1

</llo_original>
